<compile_context>
chip_gen: v6e
topology: v6e:2x2x1
jax: 0.10.0
libtpu: 0.0.40
codegen_flags: <defaults>
</compile_context>

<pallas_src>
import jax
import jax.numpy as jnp
from jax.experimental import pallas as pl
from jax.experimental.pallas import tpu as pltpu


def _softmax_f32(scores):
    m = jnp.max(scores, axis=-1, keepdims=True)
    e = jnp.exp(scores - m)
    # approx reciprocal: rows do not sum to exactly 1 (fine for inference).
    return e * pl.reciprocal(jnp.sum(e, axis=-1, keepdims=True), approx=True)


def make_decoder_kernel(*, S, L, V, R, H, G, Bt, l_chunk, use_teacher_forcing):
    N = Bt * S  # stacked rows per grid step

    def kernel(x0_ref, h0_ref, enc_ref, mask_ref, story_ref, tgt_ref,
               wi_ref, wh_ref, bi_ref, bh_ref, embt_ref,
               wr3_ref, wrb_ref, wg_ref, bg_ref,
               point_ref, gate_ref,
               h_sc, x_sc):
        r = pl.program_id(1)

        # step 0: init carries — decoder input = slot embeddings (same for every batch
        # element), hidden = this element's encoder final hidden broadcast over S slots.
        @pl.when(r == 0)
        def _init():
            x0 = x0_ref[...]                                          # (S, H)
            x_sc[...] = jnp.concatenate([x0] * Bt, axis=0)            # (N, H)
            h_sc[...] = jnp.concatenate(
                [jnp.broadcast_to(h0_ref[b], (S, H)) for b in range(Bt)], axis=0)

        x = x_sc[...]                          # (N, H) f32
        h = h_sc[...]                          # (N, H) f32
        x_bf = x.astype(jnp.bfloat16)
        h_bf = h.astype(jnp.bfloat16)

        # ---- GRU cell (PyTorch gate order r|z|n), six matmuls fused into two ----
        gi = jnp.dot(x_bf, wi_ref[...], preferred_element_type=jnp.float32) + bi_ref[...]
        gh = jnp.dot(h_bf, wh_ref[...], preferred_element_type=jnp.float32) + bh_ref[...]
        r_g = jax.nn.sigmoid(gi[:, 0:H] + gh[:, 0:H])
        z_g = jax.nn.sigmoid(gi[:, H:2 * H] + gh[:, H:2 * H])
        n_g = jnp.tanh(gi[:, 2 * H:3 * H] + r_g * gh[:, 2 * H:3 * H])
        hnew = (1.0 - z_g) * n_g + z_g * h
        h_sc[...] = hnew
        hnew_bf = hnew.astype(jnp.bfloat16)

        # ---- per-batch-element attention + pointer scatter (enc/mask/story differ) --
        l_iota = jax.lax.broadcasted_iota(jnp.int32, (l_chunk, V), 1)  # shared by chunks
        ctx_parts, pctx_parts = [], []
        for b in range(Bt):
            h_b = hnew_bf[b * S:(b + 1) * S, :]                        # (S, H) bf16
            enc_b = enc_ref[b]                                         # (L, H) bf16
            scores = jax.lax.dot_general(
                h_b, enc_b, (((1,), (1,)), ((), ())),
                preferred_element_type=jnp.float32) + mask_ref[b]      # (S, L) f32
            # NOTE: rows with encoded_lens == 0 would divide 0/0 (same as torch's
            # all -inf scores); not hit in TRADE.
            prob = _softmax_f32(scores)                                # (S, L) f32
            prob_bf = prob.astype(jnp.bfloat16)                        # ~1e-3 rel err
            ctx_parts.append(jnp.dot(prob_bf, enc_b,
                                     preferred_element_type=jnp.float32))  # (S, H)
            # scatter_add_(1, story, prob) as L-chunked bf16 one-hot matmuls
            ids_b = story_ref[b]                                       # (L, 1) int32
            acc = jnp.zeros((S, V), dtype=jnp.float32)
            for l0 in range(0, L, l_chunk):
                cw = min(l_chunk, L - l0)
                onehot = (ids_b[l0:l0 + cw, :] == l_iota[:cw, :]).astype(jnp.bfloat16)
                acc = acc + jnp.dot(prob_bf[:, l0:l0 + cw], onehot,
                                    preferred_element_type=jnp.float32)
            pctx_parts.append(acc)
        ctx = jnp.concatenate(ctx_parts, axis=0)                       # (N, H) f32
        p_ctx = jnp.concatenate(pctx_parts, axis=0)                    # (N, V) f32

        # ---- W_gate head, first decode step only ----
        @pl.when(r == 0)
        def _gate():
            g = jnp.dot(ctx, wg_ref[...],
                        preferred_element_type=jnp.float32) + bg_ref[...]   # (N, G)
            for b in range(Bt):
                gate_ref[b, :, :] = g[b * S:(b + 1) * S, :]

        # ---- attend_vocab(): p_vocab = softmax(h @ E^T), full-M MXU matmul ----
        vs = jnp.dot(hnew_bf, embt_ref[...], preferred_element_type=jnp.float32)
        p_vocab = _softmax_f32(vs)                                     # (N, V) f32

        # ---- pointer/generator switch = sigmoid(W_ratio([dec_state; ctx; dec_input]))
        wr = wr3_ref[...]                                              # (3, H) f32
        lin = (jnp.sum(hnew * wr[0:1, :], axis=1, keepdims=True)
               + jnp.sum(ctx * wr[1:2, :], axis=1, keepdims=True)
               + jnp.sum(x * wr[2:3, :], axis=1, keepdims=True)
               + wrb_ref[0, 0])
        switch = jax.nn.sigmoid(lin)                                   # (N, 1) f32

        final_p = (1.0 - switch) * p_ctx + switch * p_vocab            # (N, V) f32
        for b in range(Bt):
            point_ref[b, :, :] = final_p[b * S:(b + 1) * S, :]

        # ---- next decoder input (in-kernel, so the whole decode is one launch) ----
        @pl.when(r + 1 < R)
        def _next_input():
            # (N, V) iota rebuilt per step: a cross-step VMEM cache is N*V*4 bytes,
            # too large at real sizes once batch-tiled, so keep it local.
            vid = jax.lax.broadcasted_iota(jnp.int32, (N, V), 1)
            if use_teacher_forcing:
                tok = tgt_ref[...].reshape(N, 1)                       # (Bt,S,1)->(N,1)
            else:
                fm = jnp.max(final_p, axis=1, keepdims=True)
                tok = jnp.min(jnp.where(final_p == fm, vid, V),
                              axis=1, keepdims=True)                   # first-max index
            onehot_tok = (tok == vid).astype(jnp.bfloat16)             # (N, V)
            # gather = onehot @ emb  ==  contract one-hot V against emb^T's V axis,
            # so no second (V, H) embedding copy is needed in VMEM.
            x_sc[...] = jax.lax.dot_general(
                onehot_tok, embt_ref[...], (((1,), (1,)), ((), ())),
                preferred_element_type=jnp.float32)                    # (N, H)

    return kernel


def _device_kind():
    try:
        return jax.devices()[0].device_kind.lower()
    except Exception:
        return ""


def _pick_batch_tile(B, S, kind):
    # Fill the MXU M dimension: ~128 rows on v5e, ~256 on v6e/v7x.
    target_rows = 128 if "v5" in kind else 256
    bt = max(1, min(B, target_rows // max(S, 1)))
    while B % bt:
        bt -= 1
    if "v7" in kind:
        # keep the batch grid extent >= 2 so both TensorCores get balanced work
        while bt > 1 and B // bt < 2:
            bt -= 1
            while B % bt:
                bt -= 1
    return max(bt, 1)


def _pick_l_chunk(L, kind):
    # keep the (l_chunk, V) bf16 one-hot transient small (tighter on v7x, 64 MiB VMEM)
    return min(L, 64 if "v7" in kind else 128)


def _vmem_limit_bytes(kind):
    if "v7" in kind:
        return 56 * 1024 * 1024      # 64 MiB physical
    if any(g in kind for g in ("v4", "v5", "v6")):
        return 100 * 1024 * 1024     # 128 MiB physical
    return 32 * 1024 * 1024


def generator_forward(params, batch_size, encoded_hidden, encoded_outputs,
                      encoded_lens, story, max_res_len, target_batches,
                      use_teacher_forcing, slot_temp, slot_w2i):
    """Parallel-decode branch of TRADE Generator.forward (dropout = identity / eval)."""
    H = params["hidden_size"]
    V = params["vocab_size"]
    G = params["nb_gate"]
    S = len(slot_temp)
    B = batch_size
    L = encoded_outputs.shape[1]
    R = max_res_len

    kind = _device_kind()
    Bt = _pick_batch_tile(B, S, kind)
    l_chunk = _pick_l_chunk(L, kind)
    N = Bt * S

    # slot embeddings: domain emb + slot-name emb (shared across the batch)
    dom_idx = jnp.array([slot_w2i[s.split('-')[0]] for s in slot_temp], dtype=jnp.int32)
    slt_idx = jnp.array([slot_w2i[s.split('-')[1]] for s in slot_temp], dtype=jnp.int32)
    x0 = (params["slot_emb"][dom_idx] + params["slot_emb"][slt_idx]).astype(jnp.float32)
    # TODO(synk): nn.Dropout treated as identity (inference / eval mode).

    h0 = encoded_hidden[0].reshape(B, 1, H).astype(jnp.float32)        # (B, 1, H)
    enc = encoded_outputs.astype(jnp.bfloat16)                         # (B, L, H)
    pos = jnp.arange(L, dtype=jnp.int32)[None, :]
    # additive length mask in f32 (-1e30 instead of -inf to avoid inf-inf NaN)
    mask = jnp.where(pos < encoded_lens[:, None], 0.0, -1e30).astype(jnp.float32)
    mask = mask.reshape(B, 1, L)
    story_col = story.astype(jnp.int32).reshape(B, L, 1)               # ids on sublanes
    # (B, S, R) -> (B, R, S, 1): BlockSpec hands the kernel one decode step's targets
    tgt = jnp.transpose(target_batches.astype(jnp.int32), (0, 2, 1)).reshape(B, R, S, 1)

    emb_t = params["embedding"].astype(jnp.bfloat16).T                 # (H, V) only copy
    # TODO(synk): pad V/H to multiples of 128 and V-tile the vocab path at real sizes.
    w_i = params["w_i"].astype(jnp.bfloat16)
    w_h = params["w_h"].astype(jnp.bfloat16)
    wr3 = jnp.concatenate([params["wr_h"], params["wr_c"], params["wr_x"]],
                          axis=0).astype(jnp.float32)                  # (3, H)
    wrb = params["wr_b"].reshape(1, 1).astype(jnp.float32)             # scalar (SMEM)

    kernel = make_decoder_kernel(S=S, L=L, V=V, R=R, H=H, G=G, Bt=Bt,
                                 l_chunk=l_chunk,
                                 use_teacher_forcing=use_teacher_forcing)

    const2 = lambda bi, r: (0, 0)
    per_b3 = lambda bi, r: (bi, 0, 0)

    def run(single_buffer_weights):
        # constant-index weight blocks: single buffer (double-buffering buys nothing)
        wkw = ({"pipeline_mode": pl.Buffered(buffer_count=1)}
               if single_buffer_weights else {})
        const_spec = lambda shape: pl.BlockSpec(shape, const2, **wkw)
        grid_spec = pltpu.PrefetchScalarGridSpec(
            num_scalar_prefetch=0,
            grid=(B // Bt, R),
            in_specs=[
                const_spec((S, H)),                        # x0 slot embeddings
                pl.BlockSpec((Bt, 1, H), per_b3),          # h0 (per batch tile)
                pl.BlockSpec((Bt, L, H), per_b3),          # encoder outputs
                pl.BlockSpec((Bt, 1, L), per_b3),          # additive length mask
                pl.BlockSpec((Bt, L, 1), per_b3),          # story token ids
                pl.BlockSpec((Bt, None, S, 1),
                             lambda bi, r: (bi, r, 0, 0)),  # per-step TF targets
                const_spec((H, 3 * H)),                    # fused GRU W_ih^T (r|z|n)
                const_spec((H, 3 * H)),                    # fused GRU W_hh^T (r|z|n)
                const_spec((1, 3 * H)),                    # b_ih
                const_spec((1, 3 * H)),                    # b_hh
                const_spec((H, V)),                        # embedding^T (single copy)
                const_spec((3, H)),                        # W_ratio rows [h; ctx; x]
                pl.BlockSpec(memory_space=pltpu.MemorySpace.SMEM),  # W_ratio bias
                const_spec((H, G)),                        # W_gate
                const_spec((1, G)),                        # b_gate
            ],
            out_specs=(
                pl.BlockSpec((Bt, None, S, V), lambda bi, r: (bi, r, 0, 0)),  # final_p
                pl.BlockSpec((Bt, S, G), per_b3),                             # gate
            ),
            scratch_shapes=[
                pltpu.VMEM((N, H), jnp.float32),    # GRU hidden carry
                pltpu.VMEM((N, H), jnp.float32),    # decoder-input carry
            ],
        )
        return pl.pallas_call(
            kernel,
            out_shape=(jax.ShapeDtypeStruct((B, R, S, V), jnp.float32),
                       jax.ShapeDtypeStruct((B, S, G), jnp.float32)),
            grid_spec=grid_spec,
            compiler_params=pltpu.CompilerParams(
                dimension_semantics=("parallel", "arbitrary"),
                vmem_limit_bytes=_vmem_limit_bytes(kind)),
        )(x0, h0, enc, mask, story_col, tgt,
          w_i, w_h, params["b_i"], params["b_h"], emb_t,
          wr3, wrb, params["w_gate"], params["b_gate"])

    try:
        point_brsv, gate_bsg = run(single_buffer_weights=True)
    except Exception:
        # TODO(synk): pipeline_mode=pl.Buffered(1) unavailable on this jax build;
        # fall back to default double-buffered constant weight blocks.
        point_brsv, gate_bsg = run(single_buffer_weights=False)

    all_point_outputs = jnp.transpose(point_brsv, (2, 0, 1, 3))        # (S, B, R, V)
    all_gate_outputs = jnp.transpose(gate_bsg, (1, 0, 2))              # (S, B, G)

    # TODO(synk): lang.index2word string lookup has no device equivalent;
    # return predicted token indices instead of strings.
    pred_ids = jnp.argmax(point_brsv, axis=-1)                         # (B, R, S)
    words_point_out = [[pred_ids[:, r, s] for r in range(R)] for s in range(S)]
    return all_point_outputs, all_gate_outputs, words_point_out, []


if __name__ == "__main__":
    B, H, V, L, R = 2, 128, 256, 16, 4
    nb_gate = 3
    slots = ["hotel-area", "hotel-pricerange", "restaurant-food"]

    # replicate Generator.__init__'s slot_w2i construction
    slot_w2i = {}
    for s in slots:
        d, n = s.split('-')
        if d not in slot_w2i:
            slot_w2i[d] = len(slot_w2i)
        if n not in slot_w2i:
            slot_w2i[n] = len(slot_w2i)
    S = len(slots)

    key = jax.random.PRNGKey(0)
    keys = jax.random.split(key, 16)

    def init(k, shape, scale=0.1):
        return (scale * jax.random.normal(k, shape)).astype(jnp.float32)

    params = dict(
        hidden_size=H, vocab_size=V, nb_gate=nb_gate,
        embedding=init(keys[0], (V, H), scale=0.5),
        # fused GRU weights stored transposed: (H, 3H), gate columns ordered r|z|n
        w_i=init(keys[1], (H, 3 * H)), w_h=init(keys[2], (H, 3 * H)),
        b_i=init(keys[3], (1, 3 * H)), b_h=init(keys[4], (1, 3 * H)),
        # W_ratio (Linear(3H, 1)) split into the three H-sized chunks it multiplies
        wr_h=init(keys[5], (1, H)), wr_c=init(keys[6], (1, H)), wr_x=init(keys[7], (1, H)),
        wr_b=init(keys[8], (1, 1)),
        # W_gate (Linear(H, nb_gate)), stored as (H, G)
        w_gate=init(keys[9], (H, nb_gate)), b_gate=init(keys[10], (1, nb_gate)),
        slot_emb=init(keys[11], (len(slot_w2i), H)),
    )

    encoded_hidden = init(keys[12], (1, B, H), scale=1.0)
    encoded_outputs = init(keys[13], (B, L, H), scale=1.0)
    encoded_lens = jnp.array([L, L - 5], dtype=jnp.int32)
    story = jax.random.randint(keys[14], (B, L), 0, V, dtype=jnp.int32)
    target_batches = jax.random.randint(keys[15], (B, S, R), 0, V, dtype=jnp.int32)

    all_point, all_gate, words_point_out, _ = generator_forward(
        params, B, encoded_hidden, encoded_outputs, encoded_lens, story, R,
        target_batches, use_teacher_forcing=False,
        slot_temp=slots, slot_w2i=slot_w2i)

    jax.block_until_ready(all_point)
    jax.block_until_ready(all_gate)
    assert all_point.shape == (S, B, R, V)
    assert all_gate.shape == (S, B, nb_gate)
    assert bool(jnp.all(jnp.isfinite(all_point))) and bool(jnp.all(jnp.isfinite(all_gate)))
    print("KERNEL_OK")
</pallas_src>

<mosaic_0001>
module attributes {stable_mosaic.version = 11 : i64} {
  func.func @kernel(%arg0: i32, %arg1: i32, %arg2: memref<3x128xf32, #tpu.memory_space<vmem>>, %arg3: memref<2x1x128xf32, #tpu.memory_space<vmem>>, %arg4: memref<2x16x128xbf16, #tpu.memory_space<vmem>>, %arg5: memref<2x1x16xf32, #tpu.memory_space<vmem>>, %arg6: memref<2x16x1xi32, #tpu.memory_space<vmem>>, %arg7: memref<2x1x3x1xi32, #tpu.memory_space<vmem>>, %arg8: memref<128x384xbf16, #tpu.memory_space<vmem>>, %arg9: memref<128x384xbf16, #tpu.memory_space<vmem>>, %arg10: memref<1x384xf32, #tpu.memory_space<vmem>>, %arg11: memref<1x384xf32, #tpu.memory_space<vmem>>, %arg12: memref<128x256xbf16, #tpu.memory_space<vmem>>, %arg13: memref<3x128xf32, #tpu.memory_space<vmem>>, %arg14: memref<1x1xf32, #tpu.memory_space<smem>>, %arg15: memref<128x3xf32, #tpu.memory_space<vmem>>, %arg16: memref<1x3xf32, #tpu.memory_space<vmem>>, %arg17: memref<2x1x3x256xf32, #tpu.memory_space<vmem>>, %arg18: memref<2x3x3xf32, #tpu.memory_space<vmem>>, %arg19: memref<6x128xf32, #tpu.memory_space<vmem>>, %arg20: memref<6x128xf32, #tpu.memory_space<vmem>>) attributes {dimension_semantics = [#tpu.dimension_semantics<parallel>, #tpu.dimension_semantics<arbitrary>], iteration_bounds = array<i64: 1, 4>, scalar_prefetch = 0 : i64, scratch_operands = 2 : i64, tpu.core_type = #tpu.core_type<tc>, window_params = [{pipeline_mode = #tpu.pipeline_mode<synchronous>, transform_indices = @transform_0, window_bounds = array<i64: 3, 128>}, {transform_indices = @transform_1, window_bounds = array<i64: 2, 1, 128>}, {transform_indices = @transform_2, window_bounds = array<i64: 2, 16, 128>}, {transform_indices = @transform_3, window_bounds = array<i64: 2, 1, 16>}, {transform_indices = @transform_4, window_bounds = array<i64: 2, 16, 1>}, {transform_indices = @transform_5, window_bounds = array<i64: 2, 1, 3, 1>}, {pipeline_mode = #tpu.pipeline_mode<synchronous>, transform_indices = @transform_6, window_bounds = array<i64: 128, 384>}, {pipeline_mode = #tpu.pipeline_mode<synchronous>, transform_indices = @transform_7, window_bounds = array<i64: 128, 384>}, {pipeline_mode = #tpu.pipeline_mode<synchronous>, transform_indices = @transform_8, window_bounds = array<i64: 1, 384>}, {pipeline_mode = #tpu.pipeline_mode<synchronous>, transform_indices = @transform_9, window_bounds = array<i64: 1, 384>}, {pipeline_mode = #tpu.pipeline_mode<synchronous>, transform_indices = @transform_10, window_bounds = array<i64: 128, 256>}, {pipeline_mode = #tpu.pipeline_mode<synchronous>, transform_indices = @transform_11, window_bounds = array<i64: 3, 128>}, {transform_indices = @transform_12, window_bounds = array<i64: 1, 1>}, {pipeline_mode = #tpu.pipeline_mode<synchronous>, transform_indices = @transform_13, window_bounds = array<i64: 128, 3>}, {pipeline_mode = #tpu.pipeline_mode<synchronous>, transform_indices = @transform_14, window_bounds = array<i64: 1, 3>}, {transform_indices = @transform_15, window_bounds = array<i64: 2, 1, 3, 256>}, {transform_indices = @transform_16, window_bounds = array<i64: 2, 3, 3>}]} {
    %c0_i32 = arith.constant 0 : i32
    %0 = arith.cmpi eq, %arg1, %c0_i32 : i32
    %1 = arith.extui %0 : i1 to i32
    %c0_i32_0 = arith.constant 0 : i32
    %2 = arith.cmpi ne, %1, %c0_i32_0 : i32
    scf.if %2 {
      %c0_72 = arith.constant 0 : index
      %c0_73 = arith.constant 0 : index
      %168 = vector.load %arg2[%c0_72, %c0_73] : memref<3x128xf32, #tpu.memory_space<vmem>>, vector<3x128xf32>
      %169 = tpu.concatenate %168, %168 in 0 : vector<3x128xf32>, vector<3x128xf32> -> vector<6x128xf32>
      %c0_74 = arith.constant 0 : index
      %c0_75 = arith.constant 0 : index
      %170 = vector.load %arg20[%c0_74, %c0_75] : memref<6x128xf32, #tpu.memory_space<vmem>>, vector<6x128xf32>
      tpu.vector_store %arg20[%c0_74, %c0_75], %169 {strides = array<i32>} : memref<6x128xf32, #tpu.memory_space<vmem>>, vector<6x128xf32>,
      %c0_76 = arith.constant 0 : index
      %c0_77 = arith.constant 0 : index
      %c0_78 = arith.constant 0 : index
      %171 = vector.load %arg3[%c0_76, %c0_77, %c0_78] : memref<2x1x128xf32, #tpu.memory_space<vmem>>, vector<1x1x128xf32>
      %172 = vector.shape_cast %171 : vector<1x1x128xf32> to vector<1x128xf32>
      %173 = vector.shape_cast %172 : vector<1x128xf32> to vector<1x128xf32>
      %174 = vector.broadcast %173 : vector<1x128xf32> to vector<3x128xf32>
      %c1_79 = arith.constant 1 : index
      %c0_80 = arith.constant 0 : index
      %c0_81 = arith.constant 0 : index
      %175 = vector.load %arg3[%c1_79, %c0_80, %c0_81] : memref<2x1x128xf32, #tpu.memory_space<vmem>>, vector<1x1x128xf32>
      %176 = vector.shape_cast %175 : vector<1x1x128xf32> to vector<1x128xf32>
      %177 = vector.shape_cast %176 : vector<1x128xf32> to vector<1x128xf32>
      %178 = vector.broadcast %177 : vector<1x128xf32> to vector<3x128xf32>
      %179 = tpu.concatenate %174, %178 in 0 : vector<3x128xf32>, vector<3x128xf32> -> vector<6x128xf32>
      %c0_82 = arith.constant 0 : index
      %c0_83 = arith.constant 0 : index
      %180 = vector.load %arg19[%c0_82, %c0_83] : memref<6x128xf32, #tpu.memory_space<vmem>>, vector<6x128xf32>
      tpu.vector_store %arg19[%c0_82, %c0_83], %179 {strides = array<i32>} : memref<6x128xf32, #tpu.memory_space<vmem>>, vector<6x128xf32>,
    } else {
    }
    %c0 = arith.constant 0 : index
    %c0_1 = arith.constant 0 : index
    %3 = vector.load %arg20[%c0, %c0_1] : memref<6x128xf32, #tpu.memory_space<vmem>>, vector<6x128xf32>
    %c0_2 = arith.constant 0 : index
    %c0_3 = arith.constant 0 : index
    %4 = vector.load %arg19[%c0_2, %c0_3] : memref<6x128xf32, #tpu.memory_space<vmem>>, vector<6x128xf32>
    %5 = arith.truncf %3 : vector<6x128xf32> to vector<6x128xbf16>
    %6 = arith.truncf %4 : vector<6x128xf32> to vector<6x128xbf16>
    %c0_4 = arith.constant 0 : index
    %c0_5 = arith.constant 0 : index
    %7 = vector.load %arg8[%c0_4, %c0_5] : memref<128x384xbf16, #tpu.memory_space<vmem>>, vector<128x384xbf16>
    %cst = arith.constant dense<0.000000e+00> : vector<6x384xf32>
    %8 = tpu.matmul %5, %7, %cst {dimension_numbers = #tpu.dot_dimension_numbers<[1], [0], [0], [1], [0, 0, 1, 1], [], []>} : vector<6x128xbf16>, vector<128x384xbf16>, vector<6x384xf32> -> vector<6x384xf32>
    %c0_6 = arith.constant 0 : index
    %c0_7 = arith.constant 0 : index
    %9 = vector.load %arg10[%c0_6, %c0_7] : memref<1x384xf32, #tpu.memory_space<vmem>>, vector<1x384xf32>
    %10 = vector.broadcast %9 : vector<1x384xf32> to vector<6x384xf32>
    %11 = arith.addf %8, %10 : vector<6x384xf32>
    %c0_8 = arith.constant 0 : index
    %c0_9 = arith.constant 0 : index
    %12 = vector.load %arg9[%c0_8, %c0_9] : memref<128x384xbf16, #tpu.memory_space<vmem>>, vector<128x384xbf16>
    %cst_10 = arith.constant dense<0.000000e+00> : vector<6x384xf32>
    %13 = tpu.matmul %6, %12, %cst_10 {dimension_numbers = #tpu.dot_dimension_numbers<[1], [0], [0], [1], [0, 0, 1, 1], [], []>} : vector<6x128xbf16>, vector<128x384xbf16>, vector<6x384xf32> -> vector<6x384xf32>
    %c0_11 = arith.constant 0 : index
    %c0_12 = arith.constant 0 : index
    %14 = vector.load %arg11[%c0_11, %c0_12] : memref<1x384xf32, #tpu.memory_space<vmem>>, vector<1x384xf32>
    %15 = vector.broadcast %14 : vector<1x384xf32> to vector<6x384xf32>
    %16 = arith.addf %13, %15 : vector<6x384xf32>
    %17 = vector.extract_strided_slice %11 {offsets = [0, 0], sizes = [6, 128], strides = [1, 1]} : vector<6x384xf32> to vector<6x128xf32>
    %18 = vector.extract_strided_slice %16 {offsets = [0, 0], sizes = [6, 128], strides = [1, 1]} : vector<6x384xf32> to vector<6x128xf32>
    %19 = arith.addf %17, %18 : vector<6x128xf32>
    %20 = arith.negf %19 : vector<6x128xf32>
    %21 = math.exp %20 : vector<6x128xf32>
    %cst_13 = arith.constant 1.000000e+00 : f32
    %22 = vector.broadcast %cst_13 : f32 to vector<6x128xf32>
    %23 = arith.addf %22, %21 : vector<6x128xf32>
    %24 = arith.divf %22, %23 : vector<6x128xf32>
    %25 = vector.extract_strided_slice %11 {offsets = [0, 128], sizes = [6, 128], strides = [1, 1]} : vector<6x384xf32> to vector<6x128xf32>
    %26 = vector.extract_strided_slice %16 {offsets = [0, 128], sizes = [6, 128], strides = [1, 1]} : vector<6x384xf32> to vector<6x128xf32>
    %27 = arith.addf %25, %26 : vector<6x128xf32>
    %28 = arith.negf %27 : vector<6x128xf32>
    %29 = math.exp %28 : vector<6x128xf32>
    %cst_14 = arith.constant 1.000000e+00 : f32
    %30 = vector.broadcast %cst_14 : f32 to vector<6x128xf32>
    %31 = arith.addf %30, %29 : vector<6x128xf32>
    %32 = arith.divf %30, %31 : vector<6x128xf32>
    %33 = vector.extract_strided_slice %11 {offsets = [0, 256], sizes = [6, 128], strides = [1, 1]} : vector<6x384xf32> to vector<6x128xf32>
    %34 = vector.extract_strided_slice %16 {offsets = [0, 256], sizes = [6, 128], strides = [1, 1]} : vector<6x384xf32> to vector<6x128xf32>
    %35 = arith.mulf %24, %34 : vector<6x128xf32>
    %36 = arith.addf %33, %35 : vector<6x128xf32>
    %37 = math.tanh %36 : vector<6x128xf32>
    %cst_15 = arith.constant 1.000000e+00 : f32
    %38 = vector.broadcast %cst_15 : f32 to vector<6x128xf32>
    %39 = arith.subf %38, %32 : vector<6x128xf32>
    %40 = arith.mulf %39, %37 : vector<6x128xf32>
    %41 = arith.mulf %32, %4 : vector<6x128xf32>
    %42 = arith.addf %40, %41 : vector<6x128xf32>
    %c0_16 = arith.constant 0 : index
    %c0_17 = arith.constant 0 : index
    %43 = vector.load %arg19[%c0_16, %c0_17] : memref<6x128xf32, #tpu.memory_space<vmem>>, vector<6x128xf32>
    tpu.vector_store %arg19[%c0_16, %c0_17], %42 {strides = array<i32>} : memref<6x128xf32, #tpu.memory_space<vmem>>, vector<6x128xf32>,
    %44 = arith.truncf %42 : vector<6x128xf32> to vector<6x128xbf16>
    %45 = tpu.iota {dimensions = array<i32: 1>} : vector<16x256xi32>
    %46 = vector.extract_strided_slice %44 {offsets = [0, 0], sizes = [3, 128], strides = [1, 1]} : vector<6x128xbf16> to vector<3x128xbf16>
    %c0_18 = arith.constant 0 : index
    %c0_19 = arith.constant 0 : index
    %c0_20 = arith.constant 0 : index
    %47 = vector.load %arg4[%c0_18, %c0_19, %c0_20] : memref<2x16x128xbf16, #tpu.memory_space<vmem>>, vector<1x16x128xbf16>
    %48 = vector.shape_cast %47 : vector<1x16x128xbf16> to vector<16x128xbf16>
    %cst_21 = arith.constant dense<0.000000e+00> : vector<3x16xf32>
    %49 = tpu.matmul %46, %48, %cst_21 {dimension_numbers = #tpu.dot_dimension_numbers<[1], [1], [0], [0], [0, 0, 1, 0], [], []>} : vector<3x128xbf16>, vector<16x128xbf16>, vector<3x16xf32> -> vector<3x16xf32>
    %c0_22 = arith.constant 0 : index
    %c0_23 = arith.constant 0 : index
    %c0_24 = arith.constant 0 : index
    %50 = vector.load %arg5[%c0_22, %c0_23, %c0_24] : memref<2x1x16xf32, #tpu.memory_space<vmem>>, vector<1x1x16xf32>
    %51 = vector.shape_cast %50 : vector<1x1x16xf32> to vector<1x16xf32>
    %52 = vector.broadcast %51 : vector<1x16xf32> to vector<3x16xf32>
    %53 = arith.addf %49, %52 : vector<3x16xf32>
    %cst_25 = arith.constant dense<0xFF800000> : vector<3xf32>
    %54 = vector.multi_reduction <maximumf>, %53, %cst_25 [1] : vector<3x16xf32> to vector<3xf32>
    %55 = vector.shape_cast %54 : vector<3xf32> to vector<3x1xf32>
    %56 = vector.broadcast %55 : vector<3x1xf32> to vector<3x16xf32>
    %57 = arith.subf %53, %56 : vector<3x16xf32>
    %58 = math.exp %57 : vector<3x16xf32>
    %cst_26 = arith.constant dense<0.000000e+00> : vector<3xf32>
    %59 = vector.multi_reduction <add>, %58, %cst_26 [1] : vector<3x16xf32> to vector<3xf32>
    %60 = vector.shape_cast %59 : vector<3xf32> to vector<3x1xf32>
    %61 = tpu.reciprocal %60 {approx = true} : vector<3x1xf32> -> vector<3x1xf32>
    %62 = vector.broadcast %61 : vector<3x1xf32> to vector<3x16xf32>
    %63 = arith.mulf %58, %62 : vector<3x16xf32>
    %64 = arith.truncf %63 : vector<3x16xf32> to vector<3x16xbf16>
    %cst_27 = arith.constant dense<0.000000e+00> : vector<3x128xf32>
    %65 = tpu.matmul %64, %48, %cst_27 {dimension_numbers = #tpu.dot_dimension_numbers<[1], [0], [0], [1], [0, 0, 1, 1], [], []>} : vector<3x16xbf16>, vector<16x128xbf16>, vector<3x128xf32> -> vector<3x128xf32>
    %c0_28 = arith.constant 0 : index
    %c0_29 = arith.constant 0 : index
    %c0_30 = arith.constant 0 : index
    %66 = vector.load %arg6[%c0_28, %c0_29, %c0_30] : memref<2x16x1xi32, #tpu.memory_space<vmem>>, vector<1x16x1xi32>
    %67 = vector.shape_cast %66 : vector<1x16x1xi32> to vector<16x1xi32>
    %cst_31 = arith.constant 0.000000e+00 : f32
    %68 = vector.broadcast %cst_31 : f32 to vector<3x256xf32>
    %69 = vector.broadcast %67 : vector<16x1xi32> to vector<16x256xi32>
    %70 = arith.cmpi eq, %69, %45 : vector<16x256xi32>
    %71 = arith.extui %70 : vector<16x256xi1> to vector<16x256xi32>
    %72 = arith.sitofp %71 : vector<16x256xi32> to vector<16x256xf32>
    %73 = arith.truncf %72 : vector<16x256xf32> to vector<16x256xbf16>
    %cst_32 = arith.constant dense<0.000000e+00> : vector<3x256xf32>
    %74 = tpu.matmul %64, %73, %cst_32 {dimension_numbers = #tpu.dot_dimension_numbers<[1], [0], [0], [1], [0, 0, 1, 1], [], []>} : vector<3x16xbf16>, vector<16x256xbf16>, vector<3x256xf32> -> vector<3x256xf32>
    %75 = arith.addf %68, %74 : vector<3x256xf32>
    %76 = vector.extract_strided_slice %44 {offsets = [3, 0], sizes = [3, 128], strides = [1, 1]} : vector<6x128xbf16> to vector<3x128xbf16>
    %c1 = arith.constant 1 : index
    %c0_33 = arith.constant 0 : index
    %c0_34 = arith.constant 0 : index
    %77 = vector.load %arg4[%c1, %c0_33, %c0_34] : memref<2x16x128xbf16, #tpu.memory_space<vmem>>, vector<1x16x128xbf16>
    %78 = vector.shape_cast %77 : vector<1x16x128xbf16> to vector<16x128xbf16>
    %cst_35 = arith.constant dense<0.000000e+00> : vector<3x16xf32>
    %79 = tpu.matmul %76, %78, %cst_35 {dimension_numbers = #tpu.dot_dimension_numbers<[1], [1], [0], [0], [0, 0, 1, 0], [], []>} : vector<3x128xbf16>, vector<16x128xbf16>, vector<3x16xf32> -> vector<3x16xf32>
    %c1_36 = arith.constant 1 : index
    %c0_37 = arith.constant 0 : index
    %c0_38 = arith.constant 0 : index
    %80 = vector.load %arg5[%c1_36, %c0_37, %c0_38] : memref<2x1x16xf32, #tpu.memory_space<vmem>>, vector<1x1x16xf32>
    %81 = vector.shape_cast %80 : vector<1x1x16xf32> to vector<1x16xf32>
    %82 = vector.broadcast %81 : vector<1x16xf32> to vector<3x16xf32>
    %83 = arith.addf %79, %82 : vector<3x16xf32>
    %cst_39 = arith.constant dense<0xFF800000> : vector<3xf32>
    %84 = vector.multi_reduction <maximumf>, %83, %cst_39 [1] : vector<3x16xf32> to vector<3xf32>
    %85 = vector.shape_cast %84 : vector<3xf32> to vector<3x1xf32>
    %86 = vector.broadcast %85 : vector<3x1xf32> to vector<3x16xf32>
    %87 = arith.subf %83, %86 : vector<3x16xf32>
    %88 = math.exp %87 : vector<3x16xf32>
    %cst_40 = arith.constant dense<0.000000e+00> : vector<3xf32>
    %89 = vector.multi_reduction <add>, %88, %cst_40 [1] : vector<3x16xf32> to vector<3xf32>
    %90 = vector.shape_cast %89 : vector<3xf32> to vector<3x1xf32>
    %91 = tpu.reciprocal %90 {approx = true} : vector<3x1xf32> -> vector<3x1xf32>
    %92 = vector.broadcast %91 : vector<3x1xf32> to vector<3x16xf32>
    %93 = arith.mulf %88, %92 : vector<3x16xf32>
    %94 = arith.truncf %93 : vector<3x16xf32> to vector<3x16xbf16>
    %cst_41 = arith.constant dense<0.000000e+00> : vector<3x128xf32>
    %95 = tpu.matmul %94, %78, %cst_41 {dimension_numbers = #tpu.dot_dimension_numbers<[1], [0], [0], [1], [0, 0, 1, 1], [], []>} : vector<3x16xbf16>, vector<16x128xbf16>, vector<3x128xf32> -> vector<3x128xf32>
    %c1_42 = arith.constant 1 : index
    %c0_43 = arith.constant 0 : index
    %c0_44 = arith.constant 0 : index
    %96 = vector.load %arg6[%c1_42, %c0_43, %c0_44] : memref<2x16x1xi32, #tpu.memory_space<vmem>>, vector<1x16x1xi32>
    %97 = vector.shape_cast %96 : vector<1x16x1xi32> to vector<16x1xi32>
    %cst_45 = arith.constant 0.000000e+00 : f32
    %98 = vector.broadcast %cst_45 : f32 to vector<3x256xf32>
    %99 = vector.broadcast %97 : vector<16x1xi32> to vector<16x256xi32>
    %100 = arith.cmpi eq, %99, %45 : vector<16x256xi32>
    %101 = arith.extui %100 : vector<16x256xi1> to vector<16x256xi32>
    %102 = arith.sitofp %101 : vector<16x256xi32> to vector<16x256xf32>
    %103 = arith.truncf %102 : vector<16x256xf32> to vector<16x256xbf16>
    %cst_46 = arith.constant dense<0.000000e+00> : vector<3x256xf32>
    %104 = tpu.matmul %94, %103, %cst_46 {dimension_numbers = #tpu.dot_dimension_numbers<[1], [0], [0], [1], [0, 0, 1, 1], [], []>} : vector<3x16xbf16>, vector<16x256xbf16>, vector<3x256xf32> -> vector<3x256xf32>
    %105 = arith.addf %98, %104 : vector<3x256xf32>
    %106 = tpu.concatenate %65, %95 in 0 : vector<3x128xf32>, vector<3x128xf32> -> vector<6x128xf32>
    %107 = tpu.concatenate %75, %105 in 0 : vector<3x256xf32>, vector<3x256xf32> -> vector<6x256xf32>
    %c0_i32_47 = arith.constant 0 : i32
    %108 = arith.cmpi eq, %arg1, %c0_i32_47 : i32
    %109 = arith.extui %108 : i1 to i32
    %c0_i32_48 = arith.constant 0 : i32
    %110 = arith.cmpi ne, %109, %c0_i32_48 : i32
    scf.if %110 {
      %c0_72 = arith.constant 0 : index
      %c0_73 = arith.constant 0 : index
      %168 = vector.load %arg15[%c0_72, %c0_73] : memref<128x3xf32, #tpu.memory_space<vmem>>, vector<128x3xf32>
      %cst_74 = arith.constant dense<0.000000e+00> : vector<6x3xf32>
      %169 = tpu.matmul %106, %168, %cst_74 {dimension_numbers = #tpu.dot_dimension_numbers<[1], [0], [0], [1], [0, 0, 1, 1], [], []>} : vector<6x128xf32>, vector<128x3xf32>, vector<6x3xf32> -> vector<6x3xf32>
      %c0_75 = arith.constant 0 : index
      %c0_76 = arith.constant 0 : index
      %170 = vector.load %arg16[%c0_75, %c0_76] : memref<1x3xf32, #tpu.memory_space<vmem>>, vector<1x3xf32>
      %171 = vector.broadcast %170 : vector<1x3xf32> to vector<6x3xf32>
      %172 = arith.addf %169, %171 : vector<6x3xf32>
      %173 = vector.extract_strided_slice %172 {offsets = [0, 0], sizes = [3, 3], strides = [1, 1]} : vector<6x3xf32> to vector<3x3xf32>
      %c0_77 = arith.constant 0 : index
      %c0_78 = arith.constant 0 : index
      %c0_79 = arith.constant 0 : index
      %174 = vector.load %arg18[%c0_77, %c0_78, %c0_79] : memref<2x3x3xf32, #tpu.memory_space<vmem>>, vector<1x3x3xf32>
      %175 = vector.shape_cast %174 : vector<1x3x3xf32> to vector<3x3xf32>
      %176 = vector.shape_cast %173 : vector<3x3xf32> to vector<1x3x3xf32>
      tpu.vector_store %arg18[%c0_77, %c0_78, %c0_79], %176 {strides = array<i32>} : memref<2x3x3xf32, #tpu.memory_space<vmem>>, vector<1x3x3xf32>,
      %177 = vector.extract_strided_slice %172 {offsets = [3, 0], sizes = [3, 3], strides = [1, 1]} : vector<6x3xf32> to vector<3x3xf32>
      %c1_80 = arith.constant 1 : index
      %c0_81 = arith.constant 0 : index
      %c0_82 = arith.constant 0 : index
      %178 = vector.load %arg18[%c1_80, %c0_81, %c0_82] : memref<2x3x3xf32, #tpu.memory_space<vmem>>, vector<1x3x3xf32>
      %179 = vector.shape_cast %178 : vector<1x3x3xf32> to vector<3x3xf32>
      %180 = vector.shape_cast %177 : vector<3x3xf32> to vector<1x3x3xf32>
      tpu.vector_store %arg18[%c1_80, %c0_81, %c0_82], %180 {strides = array<i32>} : memref<2x3x3xf32, #tpu.memory_space<vmem>>, vector<1x3x3xf32>,
    } else {
    }
    %c0_49 = arith.constant 0 : index
    %c0_50 = arith.constant 0 : index
    %111 = vector.load %arg12[%c0_49, %c0_50] : memref<128x256xbf16, #tpu.memory_space<vmem>>, vector<128x256xbf16>
    %cst_51 = arith.constant dense<0.000000e+00> : vector<6x256xf32>
    %112 = tpu.matmul %44, %111, %cst_51 {dimension_numbers = #tpu.dot_dimension_numbers<[1], [0], [0], [1], [0, 0, 1, 1], [], []>} : vector<6x128xbf16>, vector<128x256xbf16>, vector<6x256xf32> -> vector<6x256xf32>
    %cst_52 = arith.constant dense<0xFF800000> : vector<6xf32>
    %113 = vector.multi_reduction <maximumf>, %112, %cst_52 [1] : vector<6x256xf32> to vector<6xf32>
    %114 = vector.shape_cast %113 : vector<6xf32> to vector<6x1xf32>
    %115 = vector.broadcast %114 : vector<6x1xf32> to vector<6x256xf32>
    %116 = arith.subf %112, %115 : vector<6x256xf32>
    %117 = math.exp %116 : vector<6x256xf32>
    %cst_53 = arith.constant dense<0.000000e+00> : vector<6xf32>
    %118 = vector.multi_reduction <add>, %117, %cst_53 [1] : vector<6x256xf32> to vector<6xf32>
    %119 = vector.shape_cast %118 : vector<6xf32> to vector<6x1xf32>
    %120 = tpu.reciprocal %119 {approx = true} : vector<6x1xf32> -> vector<6x1xf32>
    %121 = vector.broadcast %120 : vector<6x1xf32> to vector<6x256xf32>
    %122 = arith.mulf %117, %121 : vector<6x256xf32>
    %c0_54 = arith.constant 0 : index
    %c0_55 = arith.constant 0 : index
    %123 = vector.load %arg13[%c0_54, %c0_55] : memref<3x128xf32, #tpu.memory_space<vmem>>, vector<3x128xf32>
    %124 = vector.extract_strided_slice %123 {offsets = [0, 0], sizes = [1, 128], strides = [1, 1]} : vector<3x128xf32> to vector<1x128xf32>
    %125 = vector.broadcast %124 : vector<1x128xf32> to vector<6x128xf32>
    %126 = arith.mulf %42, %125 : vector<6x128xf32>
    %cst_56 = arith.constant dense<0.000000e+00> : vector<6xf32>
    %127 = vector.multi_reduction <add>, %126, %cst_56 [1] : vector<6x128xf32> to vector<6xf32>
    %128 = vector.shape_cast %127 : vector<6xf32> to vector<6x1xf32>
    %129 = vector.extract_strided_slice %123 {offsets = [1, 0], sizes = [1, 128], strides = [1, 1]} : vector<3x128xf32> to vector<1x128xf32>
    %130 = vector.broadcast %129 : vector<1x128xf32> to vector<6x128xf32>
    %131 = arith.mulf %106, %130 : vector<6x128xf32>
    %cst_57 = arith.constant dense<0.000000e+00> : vector<6xf32>
    %132 = vector.multi_reduction <add>, %131, %cst_57 [1] : vector<6x128xf32> to vector<6xf32>
    %133 = vector.shape_cast %132 : vector<6xf32> to vector<6x1xf32>
    %134 = arith.addf %128, %133 : vector<6x1xf32>
    %135 = vector.extract_strided_slice %123 {offsets = [2, 0], sizes = [1, 128], strides = [1, 1]} : vector<3x128xf32> to vector<1x128xf32>
    %136 = vector.broadcast %135 : vector<1x128xf32> to vector<6x128xf32>
    %137 = arith.mulf %3, %136 : vector<6x128xf32>
    %cst_58 = arith.constant dense<0.000000e+00> : vector<6xf32>
    %138 = vector.multi_reduction <add>, %137, %cst_58 [1] : vector<6x128xf32> to vector<6xf32>
    %139 = vector.shape_cast %138 : vector<6xf32> to vector<6x1xf32>
    %140 = arith.addf %134, %139 : vector<6x1xf32>
    %c0_59 = arith.constant 0 : index
    %c0_60 = arith.constant 0 : index
    %141 = memref.load %arg14[%c0_59, %c0_60] : memref<1x1xf32, #tpu.memory_space<smem>>
    %142 = vector.broadcast %141 : f32 to vector<6x1xf32>
    %143 = arith.addf %140, %142 : vector<6x1xf32>
    %144 = arith.negf %143 : vector<6x1xf32>
    %145 = math.exp %144 : vector<6x1xf32>
    %cst_61 = arith.constant 1.000000e+00 : f32
    %146 = vector.broadcast %cst_61 : f32 to vector<6x1xf32>
    %147 = arith.addf %146, %145 : vector<6x1xf32>
    %148 = arith.divf %146, %147 : vector<6x1xf32>
    %cst_62 = arith.constant 1.000000e+00 : f32
    %149 = vector.broadcast %cst_62 : f32 to vector<6x1xf32>
    %150 = arith.subf %149, %148 : vector<6x1xf32>
    %151 = vector.broadcast %150 : vector<6x1xf32> to vector<6x256xf32>
    %152 = arith.mulf %151, %107 : vector<6x256xf32>
    %153 = vector.broadcast %148 : vector<6x1xf32> to vector<6x256xf32>
    %154 = arith.mulf %153, %122 : vector<6x256xf32>
    %155 = arith.addf %152, %154 : vector<6x256xf32>
    %156 = vector.extract_strided_slice %155 {offsets = [0, 0], sizes = [3, 256], strides = [1, 1]} : vector<6x256xf32> to vector<3x256xf32>
    %c0_63 = arith.constant 0 : index
    %c0_64 = arith.constant 0 : index
    %c0_65 = arith.constant 0 : index
    %c0_66 = arith.constant 0 : index
    %157 = vector.load %arg17[%c0_63, %c0_64, %c0_65, %c0_66] : memref<2x1x3x256xf32, #tpu.memory_space<vmem>>, vector<1x1x3x256xf32>
    %158 = vector.shape_cast %157 : vector<1x1x3x256xf32> to vector<3x256xf32>
    %159 = vector.shape_cast %156 : vector<3x256xf32> to vector<1x1x3x256xf32>
    tpu.vector_store %arg17[%c0_63, %c0_64, %c0_65, %c0_66], %159 {strides = array<i32>} : memref<2x1x3x256xf32, #tpu.memory_space<vmem>>, vector<1x1x3x256xf32>,
    %160 = vector.extract_strided_slice %155 {offsets = [3, 0], sizes = [3, 256], strides = [1, 1]} : vector<6x256xf32> to vector<3x256xf32>
    %c1_67 = arith.constant 1 : index
    %c0_68 = arith.constant 0 : index
    %c0_69 = arith.constant 0 : index
    %c0_70 = arith.constant 0 : index
    %161 = vector.load %arg17[%c1_67, %c0_68, %c0_69, %c0_70] : memref<2x1x3x256xf32, #tpu.memory_space<vmem>>, vector<1x1x3x256xf32>
    %162 = vector.shape_cast %161 : vector<1x1x3x256xf32> to vector<3x256xf32>
    %163 = vector.shape_cast %160 : vector<3x256xf32> to vector<1x1x3x256xf32>
    tpu.vector_store %arg17[%c1_67, %c0_68, %c0_69, %c0_70], %163 {strides = array<i32>} : memref<2x1x3x256xf32, #tpu.memory_space<vmem>>, vector<1x1x3x256xf32>,
    %c1_i32 = arith.constant 1 : i32
    %164 = arith.addi %arg1, %c1_i32 : i32
    %c4_i32 = arith.constant 4 : i32
    %165 = arith.cmpi slt, %164, %c4_i32 : i32
    %166 = arith.extui %165 : i1 to i32
    %c0_i32_71 = arith.constant 0 : i32
    %167 = arith.cmpi ne, %166, %c0_i32_71 : i32
    scf.if %167 {
      %168 = tpu.iota {dimensions = array<i32: 1>} : vector<6x256xi32>
      %cst_72 = arith.constant dense<0xFF800000> : vector<6xf32>
      %169 = vector.multi_reduction <maximumf>, %155, %cst_72 [1] : vector<6x256xf32> to vector<6xf32>
      %170 = vector.shape_cast %169 : vector<6xf32> to vector<6x1xf32>
      %171 = vector.broadcast %170 : vector<6x1xf32> to vector<6x256xf32>
      %172 = arith.cmpf oeq, %155, %171 : vector<6x256xf32>
      %c256_i32 = arith.constant 256 : i32
      %173 = vector.broadcast %c256_i32 : i32 to vector<6x256xi32>
      %174 = arith.select %172, %168, %173 : vector<6x256xi1>, vector<6x256xi32>
      %cst_73 = arith.constant dense<2147483647> : vector<6xi32>
      %175 = vector.multi_reduction <minsi>, %174, %cst_73 [1] : vector<6x256xi32> to vector<6xi32>
      %176 = vector.shape_cast %175 : vector<6xi32> to vector<6x1xi32>
      %177 = vector.broadcast %176 : vector<6x1xi32> to vector<6x256xi32>
      %178 = arith.cmpi eq, %177, %168 : vector<6x256xi32>
      %179 = arith.extui %178 : vector<6x256xi1> to vector<6x256xi32>
      %180 = arith.sitofp %179 : vector<6x256xi32> to vector<6x256xf32>
      %181 = arith.truncf %180 : vector<6x256xf32> to vector<6x256xbf16>
      %c0_74 = arith.constant 0 : index
      %c0_75 = arith.constant 0 : index
      %182 = vector.load %arg12[%c0_74, %c0_75] : memref<128x256xbf16, #tpu.memory_space<vmem>>, vector<128x256xbf16>
      %cst_76 = arith.constant dense<0.000000e+00> : vector<6x128xf32>
      %183 = tpu.matmul %181, %182, %cst_76 {dimension_numbers = #tpu.dot_dimension_numbers<[1], [1], [0], [0], [0, 0, 1, 0], [], []>} : vector<6x256xbf16>, vector<128x256xbf16>, vector<6x128xf32> -> vector<6x128xf32>
      %c0_77 = arith.constant 0 : index
      %c0_78 = arith.constant 0 : index
      %184 = vector.load %arg20[%c0_77, %c0_78] : memref<6x128xf32, #tpu.memory_space<vmem>>, vector<6x128xf32>
      tpu.vector_store %arg20[%c0_77, %c0_78], %183 {strides = array<i32>} : memref<6x128xf32, #tpu.memory_space<vmem>>, vector<6x128xf32>,
    } else {
    }
    return
  }
  func.func @transform_0(%arg0: i32, %arg1: i32) -> (i32, i32) {
    %c0_i32 = arith.constant 0 : i32
    %c0_i32_0 = arith.constant 0 : i32
    %c0_i32_1 = arith.constant 0 : i32
    return %c0_i32, %c0_i32_0 : i32, i32
  }
  func.func @transform_1(%arg0: i32, %arg1: i32) -> (i32, i32, i32) {
    %c0_i32 = arith.constant 0 : i32
    %c0_i32_0 = arith.constant 0 : i32
    %c0_i32_1 = arith.constant 0 : i32
    return %arg0, %c0_i32, %c0_i32_0 : i32, i32, i32
  }
  func.func @transform_2(%arg0: i32, %arg1: i32) -> (i32, i32, i32) {
    %c0_i32 = arith.constant 0 : i32
    %c0_i32_0 = arith.constant 0 : i32
    %c0_i32_1 = arith.constant 0 : i32
    return %arg0, %c0_i32, %c0_i32_0 : i32, i32, i32
  }
  func.func @transform_3(%arg0: i32, %arg1: i32) -> (i32, i32, i32) {
    %c0_i32 = arith.constant 0 : i32
    %c0_i32_0 = arith.constant 0 : i32
    %c0_i32_1 = arith.constant 0 : i32
    return %arg0, %c0_i32, %c0_i32_0 : i32, i32, i32
  }
  func.func @transform_4(%arg0: i32, %arg1: i32) -> (i32, i32, i32) {
    %c0_i32 = arith.constant 0 : i32
    %c0_i32_0 = arith.constant 0 : i32
    %c0_i32_1 = arith.constant 0 : i32
    return %arg0, %c0_i32, %c0_i32_0 : i32, i32, i32
  }
  func.func @transform_5(%arg0: i32, %arg1: i32) -> (i32, i32, i32, i32) {
    %c0_i32 = arith.constant 0 : i32
    %c0_i32_0 = arith.constant 0 : i32
    %c0_i32_1 = arith.constant 0 : i32
    return %arg0, %arg1, %c0_i32, %c0_i32_0 : i32, i32, i32, i32
  }
  func.func @transform_6(%arg0: i32, %arg1: i32) -> (i32, i32) {
    %c0_i32 = arith.constant 0 : i32
    %c0_i32_0 = arith.constant 0 : i32
    %c0_i32_1 = arith.constant 0 : i32
    return %c0_i32, %c0_i32_0 : i32, i32
  }
  func.func @transform_7(%arg0: i32, %arg1: i32) -> (i32, i32) {
    %c0_i32 = arith.constant 0 : i32
    %c0_i32_0 = arith.constant 0 : i32
    %c0_i32_1 = arith.constant 0 : i32
    return %c0_i32, %c0_i32_0 : i32, i32
  }
  func.func @transform_8(%arg0: i32, %arg1: i32) -> (i32, i32) {
    %c0_i32 = arith.constant 0 : i32
    %c0_i32_0 = arith.constant 0 : i32
    %c0_i32_1 = arith.constant 0 : i32
    return %c0_i32, %c0_i32_0 : i32, i32
  }
  func.func @transform_9(%arg0: i32, %arg1: i32) -> (i32, i32) {
    %c0_i32 = arith.constant 0 : i32
    %c0_i32_0 = arith.constant 0 : i32
    %c0_i32_1 = arith.constant 0 : i32
    return %c0_i32, %c0_i32_0 : i32, i32
  }
  func.func @transform_10(%arg0: i32, %arg1: i32) -> (i32, i32) {
    %c0_i32 = arith.constant 0 : i32
    %c0_i32_0 = arith.constant 0 : i32
    %c0_i32_1 = arith.constant 0 : i32
    return %c0_i32, %c0_i32_0 : i32, i32
  }
  func.func @transform_11(%arg0: i32, %arg1: i32) -> (i32, i32) {
    %c0_i32 = arith.constant 0 : i32
    %c0_i32_0 = arith.constant 0 : i32
    %c0_i32_1 = arith.constant 0 : i32
    return %c0_i32, %c0_i32_0 : i32, i32
  }
  func.func @transform_12(%arg0: i32, %arg1: i32) -> (i32, i32) {
    %c0_i32 = arith.constant 0 : i32
    %c0_i32_0 = arith.constant 0 : i32
    %c0_i32_1 = arith.constant 0 : i32
    return %c0_i32, %c0_i32_0 : i32, i32
  }
  func.func @transform_13(%arg0: i32, %arg1: i32) -> (i32, i32) {
    %c0_i32 = arith.constant 0 : i32
    %c0_i32_0 = arith.constant 0 : i32
    %c0_i32_1 = arith.constant 0 : i32
    return %c0_i32, %c0_i32_0 : i32, i32
  }
  func.func @transform_14(%arg0: i32, %arg1: i32) -> (i32, i32) {
    %c0_i32 = arith.constant 0 : i32
    %c0_i32_0 = arith.constant 0 : i32
    %c0_i32_1 = arith.constant 0 : i32
    return %c0_i32, %c0_i32_0 : i32, i32
  }
  func.func @transform_15(%arg0: i32, %arg1: i32) -> (i32, i32, i32, i32) {
    %c0_i32 = arith.constant 0 : i32
    %c0_i32_0 = arith.constant 0 : i32
    %c0_i32_1 = arith.constant 0 : i32
    return %arg0, %arg1, %c0_i32, %c0_i32_0 : i32, i32, i32, i32
  }
  func.func @transform_16(%arg0: i32, %arg1: i32) -> (i32, i32, i32) {
    %c0_i32 = arith.constant 0 : i32
    %c0_i32_0 = arith.constant 0 : i32
    %c0_i32_1 = arith.constant 0 : i32
    return %arg0, %c0_i32, %c0_i32_0 : i32, i32, i32
  }
}

module attributes {stable_mosaic.version = 11 : i64} {
  func.func @kernel(%arg0: i32, %arg1: i32, %arg2: memref<3x128xf32, #tpu.memory_space<vmem>>, %arg3: memref<2x1x128xf32, #tpu.memory_space<vmem>>, %arg4: memref<2x16x128xbf16, #tpu.memory_space<vmem>>, %arg5: memref<2x1x16xf32, #tpu.memory_space<vmem>>, %arg6: memref<2x16x1xi32, #tpu.memory_space<vmem>>, %arg7: memref<2x1x3x1xi32, #tpu.memory_space<vmem>>, %arg8: memref<128x384xbf16, #tpu.memory_space<vmem>>, %arg9: memref<128x384xbf16, #tpu.memory_space<vmem>>, %arg10: memref<1x384xf32, #tpu.memory_space<vmem>>, %arg11: memref<1x384xf32, #tpu.memory_space<vmem>>, %arg12: memref<128x256xbf16, #tpu.memory_space<vmem>>, %arg13: memref<3x128xf32, #tpu.memory_space<vmem>>, %arg14: memref<1x1xf32, #tpu.memory_space<smem>>, %arg15: memref<128x3xf32, #tpu.memory_space<vmem>>, %arg16: memref<1x3xf32, #tpu.memory_space<vmem>>, %arg17: memref<2x1x3x256xf32, #tpu.memory_space<vmem>>, %arg18: memref<2x3x3xf32, #tpu.memory_space<vmem>>, %arg19: memref<6x128xf32, #tpu.memory_space<vmem>>, %arg20: memref<6x128xf32, #tpu.memory_space<vmem>>) attributes {dimension_semantics = [#tpu.dimension_semantics<parallel>, #tpu.dimension_semantics<arbitrary>], iteration_bounds = array<i64: 1, 4>, scalar_prefetch = 0 : i64, scratch_operands = 2 : i64, tpu.core_type = #tpu.core_type<tc>, window_params = [{pipeline_mode = #tpu.pipeline_mode<synchronous>, transform_indices = @transform_0, window_bounds = array<i64: 3, 128>}, {transform_indices = @transform_1, window_bounds = array<i64: 2, 1, 128>}, {transform_indices = @transform_2, window_bounds = array<i64: 2, 16, 128>}, {transform_indices = @transform_3, window_bounds = array<i64: 2, 1, 16>}, {transform_indices = @transform_4, window_bounds = array<i64: 2, 16, 1>}, {transform_indices = @transform_5, window_bounds = array<i64: 2, 1, 3, 1>}, {pipeline_mode = #tpu.pipeline_mode<synchronous>, transform_indices = @transform_6, window_bounds = array<i64: 128, 384>}, {pipeline_mode = #tpu.pipeline_mode<synchronous>, transform_indices = @transform_7, window_bounds = array<i64: 128, 384>}, {pipeline_mode = #tpu.pipeline_mode<synchronous>, transform_indices = @transform_8, window_bounds = array<i64: 1, 384>}, {pipeline_mode = #tpu.pipeline_mode<synchronous>, transform_indices = @transform_9, window_bounds = array<i64: 1, 384>}, {pipeline_mode = #tpu.pipeline_mode<synchronous>, transform_indices = @transform_10, window_bounds = array<i64: 128, 256>}, {pipeline_mode = #tpu.pipeline_mode<synchronous>, transform_indices = @transform_11, window_bounds = array<i64: 3, 128>}, {transform_indices = @transform_12, window_bounds = array<i64: 1, 1>}, {pipeline_mode = #tpu.pipeline_mode<synchronous>, transform_indices = @transform_13, window_bounds = array<i64: 128, 3>}, {pipeline_mode = #tpu.pipeline_mode<synchronous>, transform_indices = @transform_14, window_bounds = array<i64: 1, 3>}, {transform_indices = @transform_15, window_bounds = array<i64: 2, 1, 3, 256>}, {transform_indices = @transform_16, window_bounds = array<i64: 2, 3, 3>}]} {
    %c0_i32 = arith.constant 0 : i32
    %0 = arith.cmpi eq, %arg1, %c0_i32 : i32
    %1 = arith.extui %0 : i1 to i32
    %c0_i32_0 = arith.constant 0 : i32
    %2 = arith.cmpi ne, %1, %c0_i32_0 : i32
    scf.if %2 {
      %c0_72 = arith.constant 0 : index
      %c0_73 = arith.constant 0 : index
      %168 = vector.load %arg2[%c0_72, %c0_73] : memref<3x128xf32, #tpu.memory_space<vmem>>, vector<3x128xf32>
      %169 = tpu.concatenate %168, %168 in 0 : vector<3x128xf32>, vector<3x128xf32> -> vector<6x128xf32>
      %c0_74 = arith.constant 0 : index
      %c0_75 = arith.constant 0 : index
      %170 = vector.load %arg20[%c0_74, %c0_75] : memref<6x128xf32, #tpu.memory_space<vmem>>, vector<6x128xf32>
      tpu.vector_store %arg20[%c0_74, %c0_75], %169 {strides = array<i32>} : memref<6x128xf32, #tpu.memory_space<vmem>>, vector<6x128xf32>,
      %c0_76 = arith.constant 0 : index
      %c0_77 = arith.constant 0 : index
      %c0_78 = arith.constant 0 : index
      %171 = vector.load %arg3[%c0_76, %c0_77, %c0_78] : memref<2x1x128xf32, #tpu.memory_space<vmem>>, vector<1x1x128xf32>
      %172 = vector.shape_cast %171 : vector<1x1x128xf32> to vector<1x128xf32>
      %173 = vector.shape_cast %172 : vector<1x128xf32> to vector<1x128xf32>
      %174 = vector.broadcast %173 : vector<1x128xf32> to vector<3x128xf32>
      %c1_79 = arith.constant 1 : index
      %c0_80 = arith.constant 0 : index
      %c0_81 = arith.constant 0 : index
      %175 = vector.load %arg3[%c1_79, %c0_80, %c0_81] : memref<2x1x128xf32, #tpu.memory_space<vmem>>, vector<1x1x128xf32>
      %176 = vector.shape_cast %175 : vector<1x1x128xf32> to vector<1x128xf32>
      %177 = vector.shape_cast %176 : vector<1x128xf32> to vector<1x128xf32>
      %178 = vector.broadcast %177 : vector<1x128xf32> to vector<3x128xf32>
      %179 = tpu.concatenate %174, %178 in 0 : vector<3x128xf32>, vector<3x128xf32> -> vector<6x128xf32>
      %c0_82 = arith.constant 0 : index
      %c0_83 = arith.constant 0 : index
      %180 = vector.load %arg19[%c0_82, %c0_83] : memref<6x128xf32, #tpu.memory_space<vmem>>, vector<6x128xf32>
      tpu.vector_store %arg19[%c0_82, %c0_83], %179 {strides = array<i32>} : memref<6x128xf32, #tpu.memory_space<vmem>>, vector<6x128xf32>,
    } else {
    }
    %c0 = arith.constant 0 : index
    %c0_1 = arith.constant 0 : index
    %3 = vector.load %arg20[%c0, %c0_1] : memref<6x128xf32, #tpu.memory_space<vmem>>, vector<6x128xf32>
    %c0_2 = arith.constant 0 : index
    %c0_3 = arith.constant 0 : index
    %4 = vector.load %arg19[%c0_2, %c0_3] : memref<6x128xf32, #tpu.memory_space<vmem>>, vector<6x128xf32>
    %5 = arith.truncf %3 : vector<6x128xf32> to vector<6x128xbf16>
    %6 = arith.truncf %4 : vector<6x128xf32> to vector<6x128xbf16>
    %c0_4 = arith.constant 0 : index
    %c0_5 = arith.constant 0 : index
    %7 = vector.load %arg8[%c0_4, %c0_5] : memref<128x384xbf16, #tpu.memory_space<vmem>>, vector<128x384xbf16>
    %cst = arith.constant dense<0.000000e+00> : vector<6x384xf32>
    %8 = tpu.matmul %5, %7, %cst {dimension_numbers = #tpu.dot_dimension_numbers<[1], [0], [0], [1], [0, 0, 1, 1], [], []>} : vector<6x128xbf16>, vector<128x384xbf16>, vector<6x384xf32> -> vector<6x384xf32>
    %c0_6 = arith.constant 0 : index
    %c0_7 = arith.constant 0 : index
    %9 = vector.load %arg10[%c0_6, %c0_7] : memref<1x384xf32, #tpu.memory_space<vmem>>, vector<1x384xf32>
    %10 = vector.broadcast %9 : vector<1x384xf32> to vector<6x384xf32>
    %11 = arith.addf %8, %10 : vector<6x384xf32>
    %c0_8 = arith.constant 0 : index
    %c0_9 = arith.constant 0 : index
    %12 = vector.load %arg9[%c0_8, %c0_9] : memref<128x384xbf16, #tpu.memory_space<vmem>>, vector<128x384xbf16>
    %cst_10 = arith.constant dense<0.000000e+00> : vector<6x384xf32>
    %13 = tpu.matmul %6, %12, %cst_10 {dimension_numbers = #tpu.dot_dimension_numbers<[1], [0], [0], [1], [0, 0, 1, 1], [], []>} : vector<6x128xbf16>, vector<128x384xbf16>, vector<6x384xf32> -> vector<6x384xf32>
    %c0_11 = arith.constant 0 : index
    %c0_12 = arith.constant 0 : index
    %14 = vector.load %arg11[%c0_11, %c0_12] : memref<1x384xf32, #tpu.memory_space<vmem>>, vector<1x384xf32>
    %15 = vector.broadcast %14 : vector<1x384xf32> to vector<6x384xf32>
    %16 = arith.addf %13, %15 : vector<6x384xf32>
    %17 = vector.extract_strided_slice %11 {offsets = [0, 0], sizes = [6, 128], strides = [1, 1]} : vector<6x384xf32> to vector<6x128xf32>
    %18 = vector.extract_strided_slice %16 {offsets = [0, 0], sizes = [6, 128], strides = [1, 1]} : vector<6x384xf32> to vector<6x128xf32>
    %19 = arith.addf %17, %18 : vector<6x128xf32>
    %20 = arith.negf %19 : vector<6x128xf32>
    %21 = math.exp %20 : vector<6x128xf32>
    %cst_13 = arith.constant 1.000000e+00 : f32
    %22 = vector.broadcast %cst_13 : f32 to vector<6x128xf32>
    %23 = arith.addf %22, %21 : vector<6x128xf32>
    %24 = arith.divf %22, %23 : vector<6x128xf32>
    %25 = vector.extract_strided_slice %11 {offsets = [0, 128], sizes = [6, 128], strides = [1, 1]} : vector<6x384xf32> to vector<6x128xf32>
    %26 = vector.extract_strided_slice %16 {offsets = [0, 128], sizes = [6, 128], strides = [1, 1]} : vector<6x384xf32> to vector<6x128xf32>
    %27 = arith.addf %25, %26 : vector<6x128xf32>
    %28 = arith.negf %27 : vector<6x128xf32>
    %29 = math.exp %28 : vector<6x128xf32>
    %cst_14 = arith.constant 1.000000e+00 : f32
    %30 = vector.broadcast %cst_14 : f32 to vector<6x128xf32>
    %31 = arith.addf %30, %29 : vector<6x128xf32>
    %32 = arith.divf %30, %31 : vector<6x128xf32>
    %33 = vector.extract_strided_slice %11 {offsets = [0, 256], sizes = [6, 128], strides = [1, 1]} : vector<6x384xf32> to vector<6x128xf32>
    %34 = vector.extract_strided_slice %16 {offsets = [0, 256], sizes = [6, 128], strides = [1, 1]} : vector<6x384xf32> to vector<6x128xf32>
    %35 = arith.mulf %24, %34 : vector<6x128xf32>
    %36 = arith.addf %33, %35 : vector<6x128xf32>
    %37 = math.tanh %36 : vector<6x128xf32>
    %cst_15 = arith.constant 1.000000e+00 : f32
    %38 = vector.broadcast %cst_15 : f32 to vector<6x128xf32>
    %39 = arith.subf %38, %32 : vector<6x128xf32>
    %40 = arith.mulf %39, %37 : vector<6x128xf32>
    %41 = arith.mulf %32, %4 : vector<6x128xf32>
    %42 = arith.addf %40, %41 : vector<6x128xf32>
    %c0_16 = arith.constant 0 : index
    %c0_17 = arith.constant 0 : index
    %43 = vector.load %arg19[%c0_16, %c0_17] : memref<6x128xf32, #tpu.memory_space<vmem>>, vector<6x128xf32>
    tpu.vector_store %arg19[%c0_16, %c0_17], %42 {strides = array<i32>} : memref<6x128xf32, #tpu.memory_space<vmem>>, vector<6x128xf32>,
    %44 = arith.truncf %42 : vector<6x128xf32> to vector<6x128xbf16>
    %45 = tpu.iota {dimensions = array<i32: 1>} : vector<16x256xi32>
    %46 = vector.extract_strided_slice %44 {offsets = [0, 0], sizes = [3, 128], strides = [1, 1]} : vector<6x128xbf16> to vector<3x128xbf16>
    %c0_18 = arith.constant 0 : index
    %c0_19 = arith.constant 0 : index
    %c0_20 = arith.constant 0 : index
    %47 = vector.load %arg4[%c0_18, %c0_19, %c0_20] : memref<2x16x128xbf16, #tpu.memory_space<vmem>>, vector<1x16x128xbf16>
    %48 = vector.shape_cast %47 : vector<1x16x128xbf16> to vector<16x128xbf16>
    %cst_21 = arith.constant dense<0.000000e+00> : vector<3x16xf32>
    %49 = tpu.matmul %46, %48, %cst_21 {dimension_numbers = #tpu.dot_dimension_numbers<[1], [1], [0], [0], [0, 0, 1, 0], [], []>} : vector<3x128xbf16>, vector<16x128xbf16>, vector<3x16xf32> -> vector<3x16xf32>
    %c0_22 = arith.constant 0 : index
    %c0_23 = arith.constant 0 : index
    %c0_24 = arith.constant 0 : index
    %50 = vector.load %arg5[%c0_22, %c0_23, %c0_24] : memref<2x1x16xf32, #tpu.memory_space<vmem>>, vector<1x1x16xf32>
    %51 = vector.shape_cast %50 : vector<1x1x16xf32> to vector<1x16xf32>
    %52 = vector.broadcast %51 : vector<1x16xf32> to vector<3x16xf32>
    %53 = arith.addf %49, %52 : vector<3x16xf32>
    %cst_25 = arith.constant dense<0xFF800000> : vector<3xf32>
    %54 = vector.multi_reduction <maximumf>, %53, %cst_25 [1] : vector<3x16xf32> to vector<3xf32>
    %55 = vector.shape_cast %54 : vector<3xf32> to vector<3x1xf32>
    %56 = vector.broadcast %55 : vector<3x1xf32> to vector<3x16xf32>
    %57 = arith.subf %53, %56 : vector<3x16xf32>
    %58 = math.exp %57 : vector<3x16xf32>
    %cst_26 = arith.constant dense<0.000000e+00> : vector<3xf32>
    %59 = vector.multi_reduction <add>, %58, %cst_26 [1] : vector<3x16xf32> to vector<3xf32>
    %60 = vector.shape_cast %59 : vector<3xf32> to vector<3x1xf32>
    %61 = tpu.reciprocal %60 {approx = true} : vector<3x1xf32> -> vector<3x1xf32>
    %62 = vector.broadcast %61 : vector<3x1xf32> to vector<3x16xf32>
    %63 = arith.mulf %58, %62 : vector<3x16xf32>
    %64 = arith.truncf %63 : vector<3x16xf32> to vector<3x16xbf16>
    %cst_27 = arith.constant dense<0.000000e+00> : vector<3x128xf32>
    %65 = tpu.matmul %64, %48, %cst_27 {dimension_numbers = #tpu.dot_dimension_numbers<[1], [0], [0], [1], [0, 0, 1, 1], [], []>} : vector<3x16xbf16>, vector<16x128xbf16>, vector<3x128xf32> -> vector<3x128xf32>
    %c0_28 = arith.constant 0 : index
    %c0_29 = arith.constant 0 : index
    %c0_30 = arith.constant 0 : index
    %66 = vector.load %arg6[%c0_28, %c0_29, %c0_30] : memref<2x16x1xi32, #tpu.memory_space<vmem>>, vector<1x16x1xi32>
    %67 = vector.shape_cast %66 : vector<1x16x1xi32> to vector<16x1xi32>
    %cst_31 = arith.constant 0.000000e+00 : f32
    %68 = vector.broadcast %cst_31 : f32 to vector<3x256xf32>
    %69 = vector.broadcast %67 : vector<16x1xi32> to vector<16x256xi32>
    %70 = arith.cmpi eq, %69, %45 : vector<16x256xi32>
    %71 = arith.extui %70 : vector<16x256xi1> to vector<16x256xi32>
    %72 = arith.sitofp %71 : vector<16x256xi32> to vector<16x256xf32>
    %73 = arith.truncf %72 : vector<16x256xf32> to vector<16x256xbf16>
    %cst_32 = arith.constant dense<0.000000e+00> : vector<3x256xf32>
    %74 = tpu.matmul %64, %73, %cst_32 {dimension_numbers = #tpu.dot_dimension_numbers<[1], [0], [0], [1], [0, 0, 1, 1], [], []>} : vector<3x16xbf16>, vector<16x256xbf16>, vector<3x256xf32> -> vector<3x256xf32>
    %75 = arith.addf %68, %74 : vector<3x256xf32>
    %76 = vector.extract_strided_slice %44 {offsets = [3, 0], sizes = [3, 128], strides = [1, 1]} : vector<6x128xbf16> to vector<3x128xbf16>
    %c1 = arith.constant 1 : index
    %c0_33 = arith.constant 0 : index
    %c0_34 = arith.constant 0 : index
    %77 = vector.load %arg4[%c1, %c0_33, %c0_34] : memref<2x16x128xbf16, #tpu.memory_space<vmem>>, vector<1x16x128xbf16>
    %78 = vector.shape_cast %77 : vector<1x16x128xbf16> to vector<16x128xbf16>
    %cst_35 = arith.constant dense<0.000000e+00> : vector<3x16xf32>
    %79 = tpu.matmul %76, %78, %cst_35 {dimension_numbers = #tpu.dot_dimension_numbers<[1], [1], [0], [0], [0, 0, 1, 0], [], []>} : vector<3x128xbf16>, vector<16x128xbf16>, vector<3x16xf32> -> vector<3x16xf32>
    %c1_36 = arith.constant 1 : index
    %c0_37 = arith.constant 0 : index
    %c0_38 = arith.constant 0 : index
    %80 = vector.load %arg5[%c1_36, %c0_37, %c0_38] : memref<2x1x16xf32, #tpu.memory_space<vmem>>, vector<1x1x16xf32>
    %81 = vector.shape_cast %80 : vector<1x1x16xf32> to vector<1x16xf32>
    %82 = vector.broadcast %81 : vector<1x16xf32> to vector<3x16xf32>
    %83 = arith.addf %79, %82 : vector<3x16xf32>
    %cst_39 = arith.constant dense<0xFF800000> : vector<3xf32>
    %84 = vector.multi_reduction <maximumf>, %83, %cst_39 [1] : vector<3x16xf32> to vector<3xf32>
    %85 = vector.shape_cast %84 : vector<3xf32> to vector<3x1xf32>
    %86 = vector.broadcast %85 : vector<3x1xf32> to vector<3x16xf32>
    %87 = arith.subf %83, %86 : vector<3x16xf32>
    %88 = math.exp %87 : vector<3x16xf32>
    %cst_40 = arith.constant dense<0.000000e+00> : vector<3xf32>
    %89 = vector.multi_reduction <add>, %88, %cst_40 [1] : vector<3x16xf32> to vector<3xf32>
    %90 = vector.shape_cast %89 : vector<3xf32> to vector<3x1xf32>
    %91 = tpu.reciprocal %90 {approx = true} : vector<3x1xf32> -> vector<3x1xf32>
    %92 = vector.broadcast %91 : vector<3x1xf32> to vector<3x16xf32>
    %93 = arith.mulf %88, %92 : vector<3x16xf32>
    %94 = arith.truncf %93 : vector<3x16xf32> to vector<3x16xbf16>
    %cst_41 = arith.constant dense<0.000000e+00> : vector<3x128xf32>
    %95 = tpu.matmul %94, %78, %cst_41 {dimension_numbers = #tpu.dot_dimension_numbers<[1], [0], [0], [1], [0, 0, 1, 1], [], []>} : vector<3x16xbf16>, vector<16x128xbf16>, vector<3x128xf32> -> vector<3x128xf32>
    %c1_42 = arith.constant 1 : index
    %c0_43 = arith.constant 0 : index
    %c0_44 = arith.constant 0 : index
    %96 = vector.load %arg6[%c1_42, %c0_43, %c0_44] : memref<2x16x1xi32, #tpu.memory_space<vmem>>, vector<1x16x1xi32>
    %97 = vector.shape_cast %96 : vector<1x16x1xi32> to vector<16x1xi32>
    %cst_45 = arith.constant 0.000000e+00 : f32
    %98 = vector.broadcast %cst_45 : f32 to vector<3x256xf32>
    %99 = vector.broadcast %97 : vector<16x1xi32> to vector<16x256xi32>
    %100 = arith.cmpi eq, %99, %45 : vector<16x256xi32>
    %101 = arith.extui %100 : vector<16x256xi1> to vector<16x256xi32>
    %102 = arith.sitofp %101 : vector<16x256xi32> to vector<16x256xf32>
    %103 = arith.truncf %102 : vector<16x256xf32> to vector<16x256xbf16>
    %cst_46 = arith.constant dense<0.000000e+00> : vector<3x256xf32>
    %104 = tpu.matmul %94, %103, %cst_46 {dimension_numbers = #tpu.dot_dimension_numbers<[1], [0], [0], [1], [0, 0, 1, 1], [], []>} : vector<3x16xbf16>, vector<16x256xbf16>, vector<3x256xf32> -> vector<3x256xf32>
    %105 = arith.addf %98, %104 : vector<3x256xf32>
    %106 = tpu.concatenate %65, %95 in 0 : vector<3x128xf32>, vector<3x128xf32> -> vector<6x128xf32>
    %107 = tpu.concatenate %75, %105 in 0 : vector<3x256xf32>, vector<3x256xf32> -> vector<6x256xf32>
    %c0_i32_47 = arith.constant 0 : i32
    %108 = arith.cmpi eq, %arg1, %c0_i32_47 : i32
    %109 = arith.extui %108 : i1 to i32
    %c0_i32_48 = arith.constant 0 : i32
    %110 = arith.cmpi ne, %109, %c0_i32_48 : i32
    scf.if %110 {
      %c0_72 = arith.constant 0 : index
      %c0_73 = arith.constant 0 : index
      %168 = vector.load %arg15[%c0_72, %c0_73] : memref<128x3xf32, #tpu.memory_space<vmem>>, vector<128x3xf32>
      %cst_74 = arith.constant dense<0.000000e+00> : vector<6x3xf32>
      %169 = tpu.matmul %106, %168, %cst_74 {dimension_numbers = #tpu.dot_dimension_numbers<[1], [0], [0], [1], [0, 0, 1, 1], [], []>} : vector<6x128xf32>, vector<128x3xf32>, vector<6x3xf32> -> vector<6x3xf32>
      %c0_75 = arith.constant 0 : index
      %c0_76 = arith.constant 0 : index
      %170 = vector.load %arg16[%c0_75, %c0_76] : memref<1x3xf32, #tpu.memory_space<vmem>>, vector<1x3xf32>
      %171 = vector.broadcast %170 : vector<1x3xf32> to vector<6x3xf32>
      %172 = arith.addf %169, %171 : vector<6x3xf32>
      %173 = vector.extract_strided_slice %172 {offsets = [0, 0], sizes = [3, 3], strides = [1, 1]} : vector<6x3xf32> to vector<3x3xf32>
      %c0_77 = arith.constant 0 : index
      %c0_78 = arith.constant 0 : index
      %c0_79 = arith.constant 0 : index
      %174 = vector.load %arg18[%c0_77, %c0_78, %c0_79] : memref<2x3x3xf32, #tpu.memory_space<vmem>>, vector<1x3x3xf32>
      %175 = vector.shape_cast %174 : vector<1x3x3xf32> to vector<3x3xf32>
      %176 = vector.shape_cast %173 : vector<3x3xf32> to vector<1x3x3xf32>
      tpu.vector_store %arg18[%c0_77, %c0_78, %c0_79], %176 {strides = array<i32>} : memref<2x3x3xf32, #tpu.memory_space<vmem>>, vector<1x3x3xf32>,
      %177 = vector.extract_strided_slice %172 {offsets = [3, 0], sizes = [3, 3], strides = [1, 1]} : vector<6x3xf32> to vector<3x3xf32>
      %c1_80 = arith.constant 1 : index
      %c0_81 = arith.constant 0 : index
      %c0_82 = arith.constant 0 : index
      %178 = vector.load %arg18[%c1_80, %c0_81, %c0_82] : memref<2x3x3xf32, #tpu.memory_space<vmem>>, vector<1x3x3xf32>
      %179 = vector.shape_cast %178 : vector<1x3x3xf32> to vector<3x3xf32>
      %180 = vector.shape_cast %177 : vector<3x3xf32> to vector<1x3x3xf32>
      tpu.vector_store %arg18[%c1_80, %c0_81, %c0_82], %180 {strides = array<i32>} : memref<2x3x3xf32, #tpu.memory_space<vmem>>, vector<1x3x3xf32>,
    } else {
    }
    %c0_49 = arith.constant 0 : index
    %c0_50 = arith.constant 0 : index
    %111 = vector.load %arg12[%c0_49, %c0_50] : memref<128x256xbf16, #tpu.memory_space<vmem>>, vector<128x256xbf16>
    %cst_51 = arith.constant dense<0.000000e+00> : vector<6x256xf32>
    %112 = tpu.matmul %44, %111, %cst_51 {dimension_numbers = #tpu.dot_dimension_numbers<[1], [0], [0], [1], [0, 0, 1, 1], [], []>} : vector<6x128xbf16>, vector<128x256xbf16>, vector<6x256xf32> -> vector<6x256xf32>
    %cst_52 = arith.constant dense<0xFF800000> : vector<6xf32>
    %113 = vector.multi_reduction <maximumf>, %112, %cst_52 [1] : vector<6x256xf32> to vector<6xf32>
    %114 = vector.shape_cast %113 : vector<6xf32> to vector<6x1xf32>
    %115 = vector.broadcast %114 : vector<6x1xf32> to vector<6x256xf32>
    %116 = arith.subf %112, %115 : vector<6x256xf32>
    %117 = math.exp %116 : vector<6x256xf32>
    %cst_53 = arith.constant dense<0.000000e+00> : vector<6xf32>
    %118 = vector.multi_reduction <add>, %117, %cst_53 [1] : vector<6x256xf32> to vector<6xf32>
    %119 = vector.shape_cast %118 : vector<6xf32> to vector<6x1xf32>
    %120 = tpu.reciprocal %119 {approx = true} : vector<6x1xf32> -> vector<6x1xf32>
    %121 = vector.broadcast %120 : vector<6x1xf32> to vector<6x256xf32>
    %122 = arith.mulf %117, %121 : vector<6x256xf32>
    %c0_54 = arith.constant 0 : index
    %c0_55 = arith.constant 0 : index
    %123 = vector.load %arg13[%c0_54, %c0_55] : memref<3x128xf32, #tpu.memory_space<vmem>>, vector<3x128xf32>
    %124 = vector.extract_strided_slice %123 {offsets = [0, 0], sizes = [1, 128], strides = [1, 1]} : vector<3x128xf32> to vector<1x128xf32>
    %125 = vector.broadcast %124 : vector<1x128xf32> to vector<6x128xf32>
    %126 = arith.mulf %42, %125 : vector<6x128xf32>
    %cst_56 = arith.constant dense<0.000000e+00> : vector<6xf32>
    %127 = vector.multi_reduction <add>, %126, %cst_56 [1] : vector<6x128xf32> to vector<6xf32>
    %128 = vector.shape_cast %127 : vector<6xf32> to vector<6x1xf32>
    %129 = vector.extract_strided_slice %123 {offsets = [1, 0], sizes = [1, 128], strides = [1, 1]} : vector<3x128xf32> to vector<1x128xf32>
    %130 = vector.broadcast %129 : vector<1x128xf32> to vector<6x128xf32>
    %131 = arith.mulf %106, %130 : vector<6x128xf32>
    %cst_57 = arith.constant dense<0.000000e+00> : vector<6xf32>
    %132 = vector.multi_reduction <add>, %131, %cst_57 [1] : vector<6x128xf32> to vector<6xf32>
    %133 = vector.shape_cast %132 : vector<6xf32> to vector<6x1xf32>
    %134 = arith.addf %128, %133 : vector<6x1xf32>
    %135 = vector.extract_strided_slice %123 {offsets = [2, 0], sizes = [1, 128], strides = [1, 1]} : vector<3x128xf32> to vector<1x128xf32>
    %136 = vector.broadcast %135 : vector<1x128xf32> to vector<6x128xf32>
    %137 = arith.mulf %3, %136 : vector<6x128xf32>
    %cst_58 = arith.constant dense<0.000000e+00> : vector<6xf32>
    %138 = vector.multi_reduction <add>, %137, %cst_58 [1] : vector<6x128xf32> to vector<6xf32>
    %139 = vector.shape_cast %138 : vector<6xf32> to vector<6x1xf32>
    %140 = arith.addf %134, %139 : vector<6x1xf32>
    %c0_59 = arith.constant 0 : index
    %c0_60 = arith.constant 0 : index
    %141 = memref.load %arg14[%c0_59, %c0_60] : memref<1x1xf32, #tpu.memory_space<smem>>
    %142 = vector.broadcast %141 : f32 to vector<6x1xf32>
    %143 = arith.addf %140, %142 : vector<6x1xf32>
    %144 = arith.negf %143 : vector<6x1xf32>
    %145 = math.exp %144 : vector<6x1xf32>
    %cst_61 = arith.constant 1.000000e+00 : f32
    %146 = vector.broadcast %cst_61 : f32 to vector<6x1xf32>
    %147 = arith.addf %146, %145 : vector<6x1xf32>
    %148 = arith.divf %146, %147 : vector<6x1xf32>
    %cst_62 = arith.constant 1.000000e+00 : f32
    %149 = vector.broadcast %cst_62 : f32 to vector<6x1xf32>
    %150 = arith.subf %149, %148 : vector<6x1xf32>
    %151 = vector.broadcast %150 : vector<6x1xf32> to vector<6x256xf32>
    %152 = arith.mulf %151, %107 : vector<6x256xf32>
    %153 = vector.broadcast %148 : vector<6x1xf32> to vector<6x256xf32>
    %154 = arith.mulf %153, %122 : vector<6x256xf32>
    %155 = arith.addf %152, %154 : vector<6x256xf32>
    %156 = vector.extract_strided_slice %155 {offsets = [0, 0], sizes = [3, 256], strides = [1, 1]} : vector<6x256xf32> to vector<3x256xf32>
    %c0_63 = arith.constant 0 : index
    %c0_64 = arith.constant 0 : index
    %c0_65 = arith.constant 0 : index
    %c0_66 = arith.constant 0 : index
    %157 = vector.load %arg17[%c0_63, %c0_64, %c0_65, %c0_66] : memref<2x1x3x256xf32, #tpu.memory_space<vmem>>, vector<1x1x3x256xf32>
    %158 = vector.shape_cast %157 : vector<1x1x3x256xf32> to vector<3x256xf32>
    %159 = vector.shape_cast %156 : vector<3x256xf32> to vector<1x1x3x256xf32>
    tpu.vector_store %arg17[%c0_63, %c0_64, %c0_65, %c0_66], %159 {strides = array<i32>} : memref<2x1x3x256xf32, #tpu.memory_space<vmem>>, vector<1x1x3x256xf32>,
    %160 = vector.extract_strided_slice %155 {offsets = [3, 0], sizes = [3, 256], strides = [1, 1]} : vector<6x256xf32> to vector<3x256xf32>
    %c1_67 = arith.constant 1 : index
    %c0_68 = arith.constant 0 : index
    %c0_69 = arith.constant 0 : index
    %c0_70 = arith.constant 0 : index
    %161 = vector.load %arg17[%c1_67, %c0_68, %c0_69, %c0_70] : memref<2x1x3x256xf32, #tpu.memory_space<vmem>>, vector<1x1x3x256xf32>
    %162 = vector.shape_cast %161 : vector<1x1x3x256xf32> to vector<3x256xf32>
    %163 = vector.shape_cast %160 : vector<3x256xf32> to vector<1x1x3x256xf32>
    tpu.vector_store %arg17[%c1_67, %c0_68, %c0_69, %c0_70], %163 {strides = array<i32>} : memref<2x1x3x256xf32, #tpu.memory_space<vmem>>, vector<1x1x3x256xf32>,
    %c1_i32 = arith.constant 1 : i32
    %164 = arith.addi %arg1, %c1_i32 : i32
    %c4_i32 = arith.constant 4 : i32
    %165 = arith.cmpi slt, %164, %c4_i32 : i32
    %166 = arith.extui %165 : i1 to i32
    %c0_i32_71 = arith.constant 0 : i32
    %167 = arith.cmpi ne, %166, %c0_i32_71 : i32
    scf.if %167 {
      %168 = tpu.iota {dimensions = array<i32: 1>} : vector<6x256xi32>
      %cst_72 = arith.constant dense<0xFF800000> : vector<6xf32>
      %169 = vector.multi_reduction <maximumf>, %155, %cst_72 [1] : vector<6x256xf32> to vector<6xf32>
      %170 = vector.shape_cast %169 : vector<6xf32> to vector<6x1xf32>
      %171 = vector.broadcast %170 : vector<6x1xf32> to vector<6x256xf32>
      %172 = arith.cmpf oeq, %155, %171 : vector<6x256xf32>
      %c256_i32 = arith.constant 256 : i32
      %173 = vector.broadcast %c256_i32 : i32 to vector<6x256xi32>
      %174 = arith.select %172, %168, %173 : vector<6x256xi1>, vector<6x256xi32>
      %cst_73 = arith.constant dense<2147483647> : vector<6xi32>
      %175 = vector.multi_reduction <minsi>, %174, %cst_73 [1] : vector<6x256xi32> to vector<6xi32>
      %176 = vector.shape_cast %175 : vector<6xi32> to vector<6x1xi32>
      %177 = vector.broadcast %176 : vector<6x1xi32> to vector<6x256xi32>
      %178 = arith.cmpi eq, %177, %168 : vector<6x256xi32>
      %179 = arith.extui %178 : vector<6x256xi1> to vector<6x256xi32>
      %180 = arith.sitofp %179 : vector<6x256xi32> to vector<6x256xf32>
      %181 = arith.truncf %180 : vector<6x256xf32> to vector<6x256xbf16>
      %c0_74 = arith.constant 0 : index
      %c0_75 = arith.constant 0 : index
      %182 = vector.load %arg12[%c0_74, %c0_75] : memref<128x256xbf16, #tpu.memory_space<vmem>>, vector<128x256xbf16>
      %cst_76 = arith.constant dense<0.000000e+00> : vector<6x128xf32>
      %183 = tpu.matmul %181, %182, %cst_76 {dimension_numbers = #tpu.dot_dimension_numbers<[1], [1], [0], [0], [0, 0, 1, 0], [], []>} : vector<6x256xbf16>, vector<128x256xbf16>, vector<6x128xf32> -> vector<6x128xf32>
      %c0_77 = arith.constant 0 : index
      %c0_78 = arith.constant 0 : index
      %184 = vector.load %arg20[%c0_77, %c0_78] : memref<6x128xf32, #tpu.memory_space<vmem>>, vector<6x128xf32>
      tpu.vector_store %arg20[%c0_77, %c0_78], %183 {strides = array<i32>} : memref<6x128xf32, #tpu.memory_space<vmem>>, vector<6x128xf32>,
    } else {
    }
    return
  }
  func.func @transform_0(%arg0: i32, %arg1: i32) -> (i32, i32) {
    %c0_i32 = arith.constant 0 : i32
    %c0_i32_0 = arith.constant 0 : i32
    %c0_i32_1 = arith.constant 0 : i32
    return %c0_i32, %c0_i32_0 : i32, i32
  }
  func.func @transform_1(%arg0: i32, %arg1: i32) -> (i32, i32, i32) {
    %c0_i32 = arith.constant 0 : i32
    %c0_i32_0 = arith.constant 0 : i32
    %c0_i32_1 = arith.constant 0 : i32
    return %arg0, %c0_i32, %c0_i32_0 : i32, i32, i32
  }
  func.func @transform_2(%arg0: i32, %arg1: i32) -> (i32, i32, i32) {
    %c0_i32 = arith.constant 0 : i32
    %c0_i32_0 = arith.constant 0 : i32
    %c0_i32_1 = arith.constant 0 : i32
    return %arg0, %c0_i32, %c0_i32_0 : i32, i32, i32
  }
  func.func @transform_3(%arg0: i32, %arg1: i32) -> (i32, i32, i32) {
    %c0_i32 = arith.constant 0 : i32
    %c0_i32_0 = arith.constant 0 : i32
    %c0_i32_1 = arith.constant 0 : i32
    return %arg0, %c0_i32, %c0_i32_0 : i32, i32, i32
  }
  func.func @transform_4(%arg0: i32, %arg1: i32) -> (i32, i32, i32) {
    %c0_i32 = arith.constant 0 : i32
    %c0_i32_0 = arith.constant 0 : i32
    %c0_i32_1 = arith.constant 0 : i32
    return %arg0, %c0_i32, %c0_i32_0 : i32, i32, i32
  }
  func.func @transform_5(%arg0: i32, %arg1: i32) -> (i32, i32, i32, i32) {
    %c0_i32 = arith.constant 0 : i32
    %c0_i32_0 = arith.constant 0 : i32
    %c0_i32_1 = arith.constant 0 : i32
    return %arg0, %arg1, %c0_i32, %c0_i32_0 : i32, i32, i32, i32
  }
  func.func @transform_6(%arg0: i32, %arg1: i32) -> (i32, i32) {
    %c0_i32 = arith.constant 0 : i32
    %c0_i32_0 = arith.constant 0 : i32
    %c0_i32_1 = arith.constant 0 : i32
    return %c0_i32, %c0_i32_0 : i32, i32
  }
  func.func @transform_7(%arg0: i32, %arg1: i32) -> (i32, i32) {
    %c0_i32 = arith.constant 0 : i32
    %c0_i32_0 = arith.constant 0 : i32
    %c0_i32_1 = arith.constant 0 : i32
    return %c0_i32, %c0_i32_0 : i32, i32
  }
  func.func @transform_8(%arg0: i32, %arg1: i32) -> (i32, i32) {
    %c0_i32 = arith.constant 0 : i32
    %c0_i32_0 = arith.constant 0 : i32
    %c0_i32_1 = arith.constant 0 : i32
    return %c0_i32, %c0_i32_0 : i32, i32
  }
  func.func @transform_9(%arg0: i32, %arg1: i32) -> (i32, i32) {
    %c0_i32 = arith.constant 0 : i32
    %c0_i32_0 = arith.constant 0 : i32
    %c0_i32_1 = arith.constant 0 : i32
    return %c0_i32, %c0_i32_0 : i32, i32
  }
  func.func @transform_10(%arg0: i32, %arg1: i32) -> (i32, i32) {
    %c0_i32 = arith.constant 0 : i32
    %c0_i32_0 = arith.constant 0 : i32
    %c0_i32_1 = arith.constant 0 : i32
    return %c0_i32, %c0_i32_0 : i32, i32
  }
  func.func @transform_11(%arg0: i32, %arg1: i32) -> (i32, i32) {
    %c0_i32 = arith.constant 0 : i32
    %c0_i32_0 = arith.constant 0 : i32
    %c0_i32_1 = arith.constant 0 : i32
    return %c0_i32, %c0_i32_0 : i32, i32
  }
  func.func @transform_12(%arg0: i32, %arg1: i32) -> (i32, i32) {
    %c0_i32 = arith.constant 0 : i32
    %c0_i32_0 = arith.constant 0 : i32
    %c0_i32_1 = arith.constant 0 : i32
    return %c0_i32, %c0_i32_0 : i32, i32
  }
  func.func @transform_13(%arg0: i32, %arg1: i32) -> (i32, i32) {
    %c0_i32 = arith.constant 0 : i32
    %c0_i32_0 = arith.constant 0 : i32
    %c0_i32_1 = arith.constant 0 : i32
    return %c0_i32, %c0_i32_0 : i32, i32
  }
  func.func @transform_14(%arg0: i32, %arg1: i32) -> (i32, i32) {
    %c0_i32 = arith.constant 0 : i32
    %c0_i32_0 = arith.constant 0 : i32
    %c0_i32_1 = arith.constant 0 : i32
    return %c0_i32, %c0_i32_0 : i32, i32
  }
  func.func @transform_15(%arg0: i32, %arg1: i32) -> (i32, i32, i32, i32) {
    %c0_i32 = arith.constant 0 : i32
    %c0_i32_0 = arith.constant 0 : i32
    %c0_i32_1 = arith.constant 0 : i32
    return %arg0, %arg1, %c0_i32, %c0_i32_0 : i32, i32, i32, i32
  }
  func.func @transform_16(%arg0: i32, %arg1: i32) -> (i32, i32, i32) {
    %c0_i32 = arith.constant 0 : i32
    %c0_i32_0 = arith.constant 0 : i32
    %c0_i32_1 = arith.constant 0 : i32
    return %arg0, %c0_i32, %c0_i32_0 : i32, i32, i32
  }
}

</mosaic_0001>

<llo_original>
// kernel: tpu_custom_call.1
$region0: #{tpu_custom_call.1}
  #allocation0 [shape = 'u32[]', space=smem, size = 0x4, offset = 0x4, fixed_abs, tag = 'smem constant byte address 0x4 - core index']
  #allocation1 [shape = 'u32[144,128]{1,0:T(1,128)}', space=vmem, size = 0x12000, scoped, tag = 'internal scratch']
  #allocation2 [shape = 'f32[6,128]{1,0:T(8,128)}', space=vmem, size = 0x1000, scoped, tag = 'scratch operand']
  #allocation3 [shape = 'f32[6,128]{1,0:T(8,128)}', space=vmem, size = 0x1000, scoped, tag = 'scratch operand']
  #allocation4 [shape = 'f32[1,1]{1,0:T(1,128)S(6)}', space=smem, size = 0x200, scoped, tag = 'scoped memory for tpu_custom_call.1']
  %s0 = inlined_call_operand.vmem [shape: f32[3,128], index: 0, kind: input, shape index: {}]
  %s1 = inlined_call_operand.hbm [shape: f32[2,1,128], index: 1, kind: input, shape index: {}]
  %s2 = inlined_call_operand.vmem [shape: bf16[2,16,128], index: 2, kind: input, shape index: {}]
  %s3 = inlined_call_operand.hbm [shape: f32[2,1,16], index: 3, kind: input, shape index: {}]
  %s4 = inlined_call_operand.vmem [shape: s32[2,16,1], index: 4, kind: input, shape index: {}]
  %s5 = inlined_call_operand.vmem [shape: s32[2,4,3,1], index: 5, kind: input, shape index: {}]
  %s6 = inlined_call_operand.vmem [shape: bf16[128,384], index: 6, kind: input, shape index: {}]
  %s7 = inlined_call_operand.hbm [shape: bf16[128,384], index: 7, kind: input, shape index: {}]
  %s8 = inlined_call_operand.hbm [shape: f32[1,384], index: 8, kind: input, shape index: {}]
  %s9 = inlined_call_operand.hbm [shape: f32[1,384], index: 9, kind: input, shape index: {}]
  %s10 = inlined_call_operand.hbm [shape: bf16[128,256], index: 10, kind: input, shape index: {}]
  %s11 = inlined_call_operand.vmem [shape: f32[3,128], index: 11, kind: input, shape index: {}]
  %s12 = inlined_call_operand.<no memory space> [shape: f32[1,1], index: 12, kind: input, shape index: {}]
  %s13 = inlined_call_operand.vmem [shape: f32[128,3], index: 13, kind: input, shape index: {}]
  %s14 = inlined_call_operand.vmem [shape: f32[1,3], index: 14, kind: input, shape index: {}]
  %s15 = inlined_call_operand.vmem [shape: f32[2,4,3,256], index: 15, kind: output, shape index: {0}]
  %s16 = inlined_call_operand.vmem [shape: f32[2,3,3], index: 16, kind: output, shape index: {1}]
  %17 = xla_tuple %s15, %s16
  %s18 = sld [smem:[#allocation0]]
  $region212: #{tpu_custom_call.1} parent=0
    _
  %s20 = ssub.s32 1, %s18
  %s21 = scalar_select 0, %s20, %s18
  %22 = sst [smem:[#allocation4]] %s12
  $region1: #{tpu_custom_call.1} parent=0
    #allocation5 [shape = 'u8[1024]{0}', space=vmem, size = 0x400, scoped, tag = 'input window, operand 1, single buffered']
    #allocation6 [shape = 's32[2]{0}', space=sflag, size = 0x8, scoped, tag = 'scoped memory for tpu_custom_call.1']
    #allocation7 [shape = 'u8[1024]{0}', space=vmem, size = 0x400, scoped, tag = 'input window, operand 3, single buffered']
    #allocation8 [shape = 's32[1]{0}', space=sflag, size = 0x4, scoped, tag = 'scoped memory for tpu_custom_call.1']
    #allocation9 [shape = 'u8[8192]{0}', space=vmem, size = 0x2000, scoped, tag = 'input window, operand 5']
    #allocation10 [shape = 'u8[98304]{0}', space=vmem, size = 0x18000, scoped, tag = 'input window, operand 7, single buffered']
    #allocation11 [shape = 'u8[1536]{0}', space=vmem, size = 0x800, scoped, tag = 'input window, operand 8, single buffered']
    #allocation12 [shape = 's32[1]{0}', space=sflag, size = 0x4, scoped, tag = 'scoped memory for tpu_custom_call.1']
    #allocation13 [shape = 'u8[1536]{0}', space=vmem, size = 0x800, scoped, tag = 'input window, operand 9, single buffered']
    #allocation14 [shape = 'u8[65536]{0}', space=vmem, size = 0x10000, scoped, tag = 'input window, operand 10, single buffered']
    #allocation15 [shape = 's32[1]{0}', space=sflag, size = 0x4, scoped, tag = 'scoped memory for tpu_custom_call.1']
    #allocation16 [shape = 'u8[16384]{0}', space=vmem, size = 0x4000, scoped, tag = 'output window, operand 0']
    %23 = vsyncpa [#allocation6], 0
    %24 = vsyncpa [#allocation8], 0
    %25 = vsyncpa [#allocation12], 0
    %26 = vsyncpa [#allocation15], 0
    loop: start=0, step=1, limit=6
    $region2: #{tpu_custom_call.1} parent=1 // loop_pre_header
      _
    $region3: #{tpu_custom_call.1} parent=1 // loop_header
      %s28 = sphi 0, %s32
      %p29 = scmp.ge.s32.totalorder %s28, 6
      %s35 = sphi 0, %s47
      %s36 = sphi 0, %s43
      %s37 = sphi 0, %s35
      %s38 = sphi 0, %s36
      %s39 = sphi 0, %s37
      %s40 = sphi 0, %s38
      %s48 = sphi 0, %s48
      %s50 = sphi 0, %s48
      %s51 = sphi 0, %s50
      %s65 = sphi 0, %s51
      %s71 = sphi 0, %s73
      %s74 = sphi 0, %s71
      %s75 = sphi 0, %s74
      %s91 = sphi 0, %s75
      %s97 = sphi 0, %s99
      %s100 = sphi 0, %s97
      %s101 = sphi 0, %s100
      %s117 = sphi 0, %s101
      %s123 = sphi 0, %s125
      %s126 = sphi 0, %s123
      %s127 = sphi 0, %s126
      %s143 = sphi 0, %s127
      %s149 = sphi 0, %s151
      %s152 = sphi 0, %s149
      %s153 = sphi 0, %s152
      %s169 = sphi 0, %s153
      %s177 = sphi 0, %s179
      %s180 = sphi 0, %s177
      %s181 = sphi 0, %s180
      %s197 = sphi 0, %s181
      %s201 = sphi 0, %s201
      %s203 = sphi 0, %s201
      %s204 = sphi 0, %s203
      %s218 = sphi 0, %s204
      %s222 = sphi 0, %s222
      %s224 = sphi 0, %s222
      %s225 = sphi 0, %s224
      %s239 = sphi 0, %s225
      %s243 = sphi 0, %s243
      %s245 = sphi 0, %s243
      %s246 = sphi 0, %s245
      %s260 = sphi 0, %s246
      %s264 = sphi 0, %s264
      %s266 = sphi 0, %s264
      %s267 = sphi 0, %s266
      %s281 = sphi 0, %s267
      %s285 = sphi 0, %s285
      %s287 = sphi 0, %s285
      %s288 = sphi 0, %s287
      %s302 = sphi 0, %s288
      %s306 = sphi 0, %s306
      %s308 = sphi 0, %s306
      %s309 = sphi 0, %s308
      %s323 = sphi 0, %s309
      %s327 = sphi 0, %s327
      %s329 = sphi 0, %s327
      %s330 = sphi 0, %s329
      %s344 = sphi 0, %s330
      %s348 = sphi 0, %s348
      %s350 = sphi 0, %s348
      %s351 = sphi 0, %s350
      %s365 = sphi 0, %s351
      %s369 = sphi 0, %s369
      %s371 = sphi 0, %s369
      %s372 = sphi 0, %s371
      %s386 = sphi 0, %s372
      %s394 = sphi 0, %s396
      %s397 = sphi 0, %s394
      %s398 = sphi 0, %s397
      %s414 = sphi 0, %s398
      %s420 = sphi 0, %s422
      %s423 = sphi 0, %s420
      %s424 = sphi 0, %s423
      %s440 = sphi 0, %s424
    $region4: #{tpu_custom_call.1} parent=1 // loop_header_branch
      %31 = sbr.rel (%p29) target = $region8
    $region5: #{tpu_custom_call.1} parent=1 // loop_body
      %s33 = ssub.s32 %s28, 1
      %s34 = ssub.s32 %s28, 2
      %s41 = sadd.s32 1, %s36
      %p42 = scmp.ge.s32.totalorder %s41, 4
      %s43 = scalar_select %p42, 0, %s41
      %s44 = sadd.s32 1, %s35
      %s45 = scalar_select %p42, %s44, %s35
      %p46 = scmp.ge.s32.totalorder %s45, 1
      %s47 = scalar_select %p46, 0, %s45
      %s49 = sadd.s32 %s48, 1
      %p52 = scmp.eq.s32.totalorder %s28, 3
      %p53 = scmp.ne.s32.totalorder %s48, %s50
      %p54 = scmp.eq.s32.totalorder %s28, 0
      %p55 = por %p53, %p54
      %p56 = scmp.ne.s32.totalorder %s48, %s50
      %p57 = scmp.eq.s32.totalorder %s33, 3
      %p58 = por %p56, %p57
      %p59 = scmp.ne.s32.totalorder %s50, %s51
      %p60 = scmp.eq.s32.totalorder %s33, 0
      %p61 = por %p59, %p60
      %p62 = scmp.ne.s32.totalorder %s50, %s51
      %p63 = scmp.eq.s32.totalorder %s34, 3
      %p64 = por %p62, %p63
      %p66 = scmp.ne.s32.totalorder %s51, %s65
      %p67 = scmp.eq.s32.totalorder %s34, 0
      %p68 = por %p66, %p67
      %s69 = ssub.s32 %s35, %s47
      %p70 = scmp.eq.s32.totalorder %s69, 0
      %s72 = sadd.s32 %s71, 1
      %s73 = scalar_select %p70, %s71, %s72
      %p76 = pneg %p70
      %p77 = scmp.eq.s32.totalorder %s28, 3
      %p78 = por %p76, %p77
      %p79 = scmp.ne.s32.totalorder %s71, %s74
      %p80 = scmp.eq.s32.totalorder %s28, 0
      %p81 = por %p79, %p80
      %p82 = scmp.ne.s32.totalorder %s71, %s74
      %p83 = scmp.eq.s32.totalorder %s33, 3
      %p84 = por %p82, %p83
      %p85 = scmp.ne.s32.totalorder %s74, %s75
      %p86 = scmp.eq.s32.totalorder %s33, 0
      %p87 = por %p85, %p86
      %p88 = scmp.ne.s32.totalorder %s74, %s75
      %p89 = scmp.eq.s32.totalorder %s34, 3
      %p90 = por %p88, %p89
      %p92 = scmp.ne.s32.totalorder %s75, %s91
      %p93 = scmp.eq.s32.totalorder %s34, 0
      %p94 = por %p92, %p93
      %s95 = ssub.s32 %s35, %s47
      %p96 = scmp.eq.s32.totalorder %s95, 0
      %s98 = sadd.s32 %s97, 1
      %s99 = scalar_select %p96, %s97, %s98
      %p102 = pneg %p96
      %p103 = scmp.eq.s32.totalorder %s28, 3
      %p104 = por %p102, %p103
      %p105 = scmp.ne.s32.totalorder %s97, %s100
      %p106 = scmp.eq.s32.totalorder %s28, 0
      %p107 = por %p105, %p106
      %p108 = scmp.ne.s32.totalorder %s97, %s100
      %p109 = scmp.eq.s32.totalorder %s33, 3
      %p110 = por %p108, %p109
      %p111 = scmp.ne.s32.totalorder %s100, %s101
      %p112 = scmp.eq.s32.totalorder %s33, 0
      %p113 = por %p111, %p112
      %p114 = scmp.ne.s32.totalorder %s100, %s101
      %p115 = scmp.eq.s32.totalorder %s34, 3
      %p116 = por %p114, %p115
      %p118 = scmp.ne.s32.totalorder %s101, %s117
      %p119 = scmp.eq.s32.totalorder %s34, 0
      %p120 = por %p118, %p119
      %s121 = ssub.s32 %s35, %s47
      %p122 = scmp.eq.s32.totalorder %s121, 0
      %s124 = sadd.s32 %s123, 1
      %s125 = scalar_select %p122, %s123, %s124
      %p128 = pneg %p122
      %p129 = scmp.eq.s32.totalorder %s28, 3
      %p130 = por %p128, %p129
      %p131 = scmp.ne.s32.totalorder %s123, %s126
      %p132 = scmp.eq.s32.totalorder %s28, 0
      %p133 = por %p131, %p132
      %p134 = scmp.ne.s32.totalorder %s123, %s126
      %p135 = scmp.eq.s32.totalorder %s33, 3
      %p136 = por %p134, %p135
      %p137 = scmp.ne.s32.totalorder %s126, %s127
      %p138 = scmp.eq.s32.totalorder %s33, 0
      %p139 = por %p137, %p138
      %p140 = scmp.ne.s32.totalorder %s126, %s127
      %p141 = scmp.eq.s32.totalorder %s34, 3
      %p142 = por %p140, %p141
      %p144 = scmp.ne.s32.totalorder %s127, %s143
      %p145 = scmp.eq.s32.totalorder %s34, 0
      %p146 = por %p144, %p145
      %s147 = ssub.s32 %s35, %s47
      %p148 = scmp.eq.s32.totalorder %s147, 0
      %s150 = sadd.s32 %s149, 1
      %s151 = scalar_select %p148, %s149, %s150
      %p154 = pneg %p148
      %p155 = scmp.eq.s32.totalorder %s28, 3
      %p156 = por %p154, %p155
      %p157 = scmp.ne.s32.totalorder %s149, %s152
      %p158 = scmp.eq.s32.totalorder %s28, 0
      %p159 = por %p157, %p158
      %p160 = scmp.ne.s32.totalorder %s149, %s152
      %p161 = scmp.eq.s32.totalorder %s33, 3
      %p162 = por %p160, %p161
      %p163 = scmp.ne.s32.totalorder %s152, %s153
      %p164 = scmp.eq.s32.totalorder %s33, 0
      %p165 = por %p163, %p164
      %p166 = scmp.ne.s32.totalorder %s152, %s153
      %p167 = scmp.eq.s32.totalorder %s34, 3
      %p168 = por %p166, %p167
      %p170 = scmp.ne.s32.totalorder %s153, %s169
      %p171 = scmp.eq.s32.totalorder %s34, 0
      %p172 = por %p170, %p171
      %s173 = ssub.s32 %s35, %s47
      %s174 = ssub.s32 %s36, %s43
      %s175 = sor.u32 %s173, %s174
      %p176 = scmp.eq.s32.totalorder %s175, 0
      %s178 = sadd.s32 %s177, 1
      %s179 = scalar_select %p176, %s177, %s178
      %p182 = pneg %p176
      %p183 = scmp.eq.s32.totalorder %s28, 3
      %p184 = por %p182, %p183
      %p185 = scmp.ne.s32.totalorder %s177, %s180
      %p186 = scmp.eq.s32.totalorder %s28, 0
      %p187 = por %p185, %p186
      %p188 = scmp.ne.s32.totalorder %s177, %s180
      %p189 = scmp.eq.s32.totalorder %s33, 3
      %p190 = por %p188, %p189
      %p191 = scmp.ne.s32.totalorder %s180, %s181
      %p192 = scmp.eq.s32.totalorder %s33, 0
      %p193 = por %p191, %p192
      %p194 = scmp.ne.s32.totalorder %s180, %s181
      %p195 = scmp.eq.s32.totalorder %s34, 3
      %p196 = por %p194, %p195
      %p198 = scmp.ne.s32.totalorder %s181, %s197
      %p199 = scmp.eq.s32.totalorder %s34, 0
      %p200 = por %p198, %p199
      %s202 = sadd.s32 %s201, 1
      %p205 = scmp.eq.s32.totalorder %s28, 3
      %p206 = scmp.ne.s32.totalorder %s201, %s203
      %p207 = scmp.eq.s32.totalorder %s28, 0
      %p208 = por %p206, %p207
      %p209 = scmp.ne.s32.totalorder %s201, %s203
      %p210 = scmp.eq.s32.totalorder %s33, 3
      %p211 = por %p209, %p210
      %p212 = scmp.ne.s32.totalorder %s203, %s204
      %p213 = scmp.eq.s32.totalorder %s33, 0
      %p214 = por %p212, %p213
      %p215 = scmp.ne.s32.totalorder %s203, %s204
      %p216 = scmp.eq.s32.totalorder %s34, 3
      %p217 = por %p215, %p216
      %p219 = scmp.ne.s32.totalorder %s204, %s218
      %p220 = scmp.eq.s32.totalorder %s34, 0
      %p221 = por %p219, %p220
      %s223 = sadd.s32 %s222, 1
      %p226 = scmp.eq.s32.totalorder %s28, 3
      %p227 = scmp.ne.s32.totalorder %s222, %s224
      %p228 = scmp.eq.s32.totalorder %s28, 0
      %p229 = por %p227, %p228
      %p230 = scmp.ne.s32.totalorder %s222, %s224
      %p231 = scmp.eq.s32.totalorder %s33, 3
      %p232 = por %p230, %p231
      %p233 = scmp.ne.s32.totalorder %s224, %s225
      %p234 = scmp.eq.s32.totalorder %s33, 0
      %p235 = por %p233, %p234
      %p236 = scmp.ne.s32.totalorder %s224, %s225
      %p237 = scmp.eq.s32.totalorder %s34, 3
      %p238 = por %p236, %p237
      %p240 = scmp.ne.s32.totalorder %s225, %s239
      %p241 = scmp.eq.s32.totalorder %s34, 0
      %p242 = por %p240, %p241
      %s244 = sadd.s32 %s243, 1
      %p247 = scmp.eq.s32.totalorder %s28, 3
      %p248 = scmp.ne.s32.totalorder %s243, %s245
      %p249 = scmp.eq.s32.totalorder %s28, 0
      %p250 = por %p248, %p249
      %p251 = scmp.ne.s32.totalorder %s243, %s245
      %p252 = scmp.eq.s32.totalorder %s33, 3
      %p253 = por %p251, %p252
      %p254 = scmp.ne.s32.totalorder %s245, %s246
      %p255 = scmp.eq.s32.totalorder %s33, 0
      %p256 = por %p254, %p255
      %p257 = scmp.ne.s32.totalorder %s245, %s246
      %p258 = scmp.eq.s32.totalorder %s34, 3
      %p259 = por %p257, %p258
      %p261 = scmp.ne.s32.totalorder %s246, %s260
      %p262 = scmp.eq.s32.totalorder %s34, 0
      %p263 = por %p261, %p262
      %s265 = sadd.s32 %s264, 1
      %p268 = scmp.eq.s32.totalorder %s28, 3
      %p269 = scmp.ne.s32.totalorder %s264, %s266
      %p270 = scmp.eq.s32.totalorder %s28, 0
      %p271 = por %p269, %p270
      %p272 = scmp.ne.s32.totalorder %s264, %s266
      %p273 = scmp.eq.s32.totalorder %s33, 3
      %p274 = por %p272, %p273
      %p275 = scmp.ne.s32.totalorder %s266, %s267
      %p276 = scmp.eq.s32.totalorder %s33, 0
      %p277 = por %p275, %p276
      %p278 = scmp.ne.s32.totalorder %s266, %s267
      %p279 = scmp.eq.s32.totalorder %s34, 3
      %p280 = por %p278, %p279
      %p282 = scmp.ne.s32.totalorder %s267, %s281
      %p283 = scmp.eq.s32.totalorder %s34, 0
      %p284 = por %p282, %p283
      %s286 = sadd.s32 %s285, 1
      %p289 = scmp.eq.s32.totalorder %s28, 3
      %p290 = scmp.ne.s32.totalorder %s285, %s287
      %p291 = scmp.eq.s32.totalorder %s28, 0
      %p292 = por %p290, %p291
      %p293 = scmp.ne.s32.totalorder %s285, %s287
      %p294 = scmp.eq.s32.totalorder %s33, 3
      %p295 = por %p293, %p294
      %p296 = scmp.ne.s32.totalorder %s287, %s288
      %p297 = scmp.eq.s32.totalorder %s33, 0
      %p298 = por %p296, %p297
      %p299 = scmp.ne.s32.totalorder %s287, %s288
      %p300 = scmp.eq.s32.totalorder %s34, 3
      %p301 = por %p299, %p300
      %p303 = scmp.ne.s32.totalorder %s288, %s302
      %p304 = scmp.eq.s32.totalorder %s34, 0
      %p305 = por %p303, %p304
      %s307 = sadd.s32 %s306, 1
      %p310 = scmp.eq.s32.totalorder %s28, 3
      %p311 = scmp.ne.s32.totalorder %s306, %s308
      %p312 = scmp.eq.s32.totalorder %s28, 0
      %p313 = por %p311, %p312
      %p314 = scmp.ne.s32.totalorder %s306, %s308
      %p315 = scmp.eq.s32.totalorder %s33, 3
      %p316 = por %p314, %p315
      %p317 = scmp.ne.s32.totalorder %s308, %s309
      %p318 = scmp.eq.s32.totalorder %s33, 0
      %p319 = por %p317, %p318
      %p320 = scmp.ne.s32.totalorder %s308, %s309
      %p321 = scmp.eq.s32.totalorder %s34, 3
      %p322 = por %p320, %p321
      %p324 = scmp.ne.s32.totalorder %s309, %s323
      %p325 = scmp.eq.s32.totalorder %s34, 0
      %p326 = por %p324, %p325
      %s328 = sadd.s32 %s327, 1
      %p331 = scmp.eq.s32.totalorder %s28, 3
      %p332 = scmp.ne.s32.totalorder %s327, %s329
      %p333 = scmp.eq.s32.totalorder %s28, 0
      %p334 = por %p332, %p333
      %p335 = scmp.ne.s32.totalorder %s327, %s329
      %p336 = scmp.eq.s32.totalorder %s33, 3
      %p337 = por %p335, %p336
      %p338 = scmp.ne.s32.totalorder %s329, %s330
      %p339 = scmp.eq.s32.totalorder %s33, 0
      %p340 = por %p338, %p339
      %p341 = scmp.ne.s32.totalorder %s329, %s330
      %p342 = scmp.eq.s32.totalorder %s34, 3
      %p343 = por %p341, %p342
      %p345 = scmp.ne.s32.totalorder %s330, %s344
      %p346 = scmp.eq.s32.totalorder %s34, 0
      %p347 = por %p345, %p346
      %s349 = sadd.s32 %s348, 1
      %p352 = scmp.eq.s32.totalorder %s28, 3
      %p353 = scmp.ne.s32.totalorder %s348, %s350
      %p354 = scmp.eq.s32.totalorder %s28, 0
      %p355 = por %p353, %p354
      %p356 = scmp.ne.s32.totalorder %s348, %s350
      %p357 = scmp.eq.s32.totalorder %s33, 3
      %p358 = por %p356, %p357
      %p359 = scmp.ne.s32.totalorder %s350, %s351
      %p360 = scmp.eq.s32.totalorder %s33, 0
      %p361 = por %p359, %p360
      %p362 = scmp.ne.s32.totalorder %s350, %s351
      %p363 = scmp.eq.s32.totalorder %s34, 3
      %p364 = por %p362, %p363
      %p366 = scmp.ne.s32.totalorder %s351, %s365
      %p367 = scmp.eq.s32.totalorder %s34, 0
      %p368 = por %p366, %p367
      %s370 = sadd.s32 %s369, 1
      %p373 = scmp.eq.s32.totalorder %s28, 3
      %p374 = scmp.ne.s32.totalorder %s369, %s371
      %p375 = scmp.eq.s32.totalorder %s28, 0
      %p376 = por %p374, %p375
      %p377 = scmp.ne.s32.totalorder %s369, %s371
      %p378 = scmp.eq.s32.totalorder %s33, 3
      %p379 = por %p377, %p378
      %p380 = scmp.ne.s32.totalorder %s371, %s372
      %p381 = scmp.eq.s32.totalorder %s33, 0
      %p382 = por %p380, %p381
      %p383 = scmp.ne.s32.totalorder %s371, %s372
      %p384 = scmp.eq.s32.totalorder %s34, 3
      %p385 = por %p383, %p384
      %p387 = scmp.ne.s32.totalorder %s372, %s386
      %p388 = scmp.eq.s32.totalorder %s34, 0
      %p389 = por %p387, %p388
      %s390 = ssub.s32 %s35, %s47
      %s391 = ssub.s32 %s36, %s43
      %s392 = sor.u32 %s390, %s391
      %p393 = scmp.eq.s32.totalorder %s392, 0
      %s395 = sadd.s32 %s394, 1
      %s396 = scalar_select %p393, %s394, %s395
      %p399 = pneg %p393
      %p400 = scmp.eq.s32.totalorder %s28, 3
      %p401 = por %p399, %p400
      %p402 = scmp.ne.s32.totalorder %s394, %s397
      %p403 = scmp.eq.s32.totalorder %s28, 0
      %p404 = por %p402, %p403
      %p405 = scmp.ne.s32.totalorder %s394, %s397
      %p406 = scmp.eq.s32.totalorder %s33, 3
      %p407 = por %p405, %p406
      %p408 = scmp.ne.s32.totalorder %s397, %s398
      %p409 = scmp.eq.s32.totalorder %s33, 0
      %p410 = por %p408, %p409
      %p411 = scmp.ne.s32.totalorder %s397, %s398
      %p412 = scmp.eq.s32.totalorder %s34, 3
      %p413 = por %p411, %p412
      %p415 = scmp.ne.s32.totalorder %s398, %s414
      %p416 = scmp.eq.s32.totalorder %s34, 0
      %p417 = por %p415, %p416
      %s418 = ssub.s32 %s35, %s47
      %p419 = scmp.eq.s32.totalorder %s418, 0
      %s421 = sadd.s32 %s420, 1
      %s422 = scalar_select %p419, %s420, %s421
      %p425 = pneg %p419
      %p426 = scmp.eq.s32.totalorder %s28, 3
      %p427 = por %p425, %p426
      %p428 = scmp.ne.s32.totalorder %s420, %s423
      %p429 = scmp.eq.s32.totalorder %s28, 0
      %p430 = por %p428, %p429
      %p431 = scmp.ne.s32.totalorder %s420, %s423
      %p432 = scmp.eq.s32.totalorder %s33, 3
      %p433 = por %p431, %p432
      %p434 = scmp.ne.s32.totalorder %s423, %s424
      %p435 = scmp.eq.s32.totalorder %s33, 0
      %p436 = por %p434, %p435
      %p437 = scmp.ne.s32.totalorder %s423, %s424
      %p438 = scmp.eq.s32.totalorder %s34, 3
      %p439 = por %p437, %p438
      %p441 = scmp.ne.s32.totalorder %s424, %s440
      %p442 = scmp.eq.s32.totalorder %s34, 0
      %p443 = por %p441, %p442
      %p444 = scmp.le.s32.totalorder 1, %s28
      %p445 = scmp.lt.s32.totalorder %s28, 5
      %p446 = pnand %p444, %p445
      %p447 = pneg %p446
      // Predicated region
      $region9: #{tpu_custom_call.1} parent=5 // pred_check
        _
      $region10: #{tpu_custom_call.1} parent=5 // pred_check_branch
        %449 = sbr.rel (%p446) target = $region12
      $region11: #{tpu_custom_call.1} parent=5 // pred_region
        %s450 = ssub.s32 %s28, 1
        // Predicated region
        $region13: #{tpu_custom_call.1} parent=11 // pred_check
          %p451 = pneg %p61
        $region14: #{tpu_custom_call.1} parent=11 // pred_check_branch
          %453 = sbr.rel (%p451) target = $region16
        $region15: #{tpu_custom_call.1} parent=11 // pred_region
          _
        $region16: #{tpu_custom_call.1} parent=11 // pred_fallthru
          _
        // Predicated region
        $region17: #{tpu_custom_call.1} parent=11 // pred_check
          %p454 = pneg %p87
        $region18: #{tpu_custom_call.1} parent=11 // pred_check_branch
          %456 = sbr.rel (%p454) target = $region20
        $region19: #{tpu_custom_call.1} parent=11 // pred_region
          %s457 = smul.u32 2, %s37
          %s459 = ssub.s32 32, 32
          %460 = vsyncadd [#allocation6], %s459
          %s461 = smul.addr %s457, 16
          %s462 = scalar_lea.hbm %s1, %s461
          %s463 = sshll.u32 [#allocation5], 4
          %s464 = int_to_ptr.vmem [resolvable:$true] %s463
          %469 = dma.hbm_to_vmem [thread:$0]  %s462, 32, %s464, [#allocation6], 16, 16, 1
        $region20: #{tpu_custom_call.1} parent=11 // pred_fallthru
          _
        // Predicated region
        $region21: #{tpu_custom_call.1} parent=11 // pred_check
          %p470 = pneg %p113
        $region22: #{tpu_custom_call.1} parent=11 // pred_check_branch
          %472 = sbr.rel (%p470) target = $region24
        $region23: #{tpu_custom_call.1} parent=11 // pred_region
          %s473 = smul.u32 2, %s37
          %p474 = scmp.lt.s32.totalorder %s473, 1
          %s475 = scalar_select %p474, %s473, 1
          %s476 = smul.addr %s475, 2
          %s477 = smul.addr %s476, 4
          %s478 = scalar_lea.vmem %s2, %s477
          %s479 = smul.u32 2, %s37
        $region24: #{tpu_custom_call.1} parent=11 // pred_fallthru
          _
        // Predicated region
        $region25: #{tpu_custom_call.1} parent=11 // pred_check
          %p480 = pneg %p139
        $region26: #{tpu_custom_call.1} parent=11 // pred_check_branch
          %482 = sbr.rel (%p480) target = $region28
        $region27: #{tpu_custom_call.1} parent=11 // pred_region
          %s483 = smul.u32 2, %s37
          %s485 = ssub.s32 32, 32
          %486 = vsyncadd [#allocation8], %s485
          %s487 = smul.addr %s483, 16
          %s488 = scalar_lea.hbm %s3, %s487
          %s489 = sshll.u32 [#allocation7], 4
          %s490 = int_to_ptr.vmem [resolvable:$true] %s489
          %495 = dma.hbm_to_vmem [thread:$0]  %s488, 32, %s490, [#allocation8], 16, 16, 1
        $region28: #{tpu_custom_call.1} parent=11 // pred_fallthru
          _
        // Predicated region
        $region29: #{tpu_custom_call.1} parent=11 // pred_check
          %p496 = pneg %p165
        $region30: #{tpu_custom_call.1} parent=11 // pred_check_branch
          %498 = sbr.rel (%p496) target = $region32
        $region31: #{tpu_custom_call.1} parent=11 // pred_region
          %s499 = smul.u32 2, %s37
          %p500 = scmp.lt.s32.totalorder %s499, 1
          %s501 = scalar_select %p500, %s499, 1
          %s502 = smul.addr %s501, 2
          %s503 = smul.addr %s502, 8
          %s504 = scalar_lea.vmem %s4, %s503
          %s505 = smul.u32 2, %s37
        $region32: #{tpu_custom_call.1} parent=11 // pred_fallthru
          _
        // Predicated region
        $region33: #{tpu_custom_call.1} parent=11 // pred_check
          %p506 = pneg %p214
        $region34: #{tpu_custom_call.1} parent=11 // pred_check_branch
          %508 = sbr.rel (%p506) target = $region36
        $region35: #{tpu_custom_call.1} parent=11 // pred_region
          _
        $region36: #{tpu_custom_call.1} parent=11 // pred_fallthru
          _
        // Predicated region
        $region37: #{tpu_custom_call.1} parent=11 // pred_check
          %p509 = pneg %p235
        $region38: #{tpu_custom_call.1} parent=11 // pred_check_branch
          %511 = sbr.rel (%p509) target = $region40
        $region39: #{tpu_custom_call.1} parent=11 // pred_region
          %s513 = ssub.s32 3072, 3072
          %514 = vsyncadd [#allocation8], %s513
          %s515 = sshll.u32 [#allocation10], 4
          %s516 = int_to_ptr.vmem [resolvable:$true] %s515
          %521 = dma.hbm_to_vmem [thread:$0]  %s7, 3072, %s516, [#allocation8], 192, 192, 12
        $region40: #{tpu_custom_call.1} parent=11 // pred_fallthru
          _
        // Predicated region
        $region41: #{tpu_custom_call.1} parent=11 // pred_check
          %p522 = pneg %p256
        $region42: #{tpu_custom_call.1} parent=11 // pred_check_branch
          %524 = sbr.rel (%p522) target = $region44
        $region43: #{tpu_custom_call.1} parent=11 // pred_region
          %s526 = ssub.s32 48, 48
          %527 = vsyncadd [#allocation12], %s526
          %s529 = sshll.u32 [#allocation11], 4
          %s530 = int_to_ptr.vmem [resolvable:$true] %s529
          %532 = dma.hbm_to_vmem [thread:$0]  %s8, 48, %s530, [#allocation12]
        $region44: #{tpu_custom_call.1} parent=11 // pred_fallthru
          _
        // Predicated region
        $region45: #{tpu_custom_call.1} parent=11 // pred_check
          %p533 = pneg %p277
        $region46: #{tpu_custom_call.1} parent=11 // pred_check_branch
          %535 = sbr.rel (%p533) target = $region48
        $region47: #{tpu_custom_call.1} parent=11 // pred_region
          %s537 = ssub.s32 48, 48
          %538 = vsyncadd [#allocation12], %s537
          %s540 = sshll.u32 [#allocation13], 4
          %s541 = int_to_ptr.vmem [resolvable:$true] %s540
          %543 = dma.hbm_to_vmem [thread:$0]  %s9, 48, %s541, [#allocation12]
        $region48: #{tpu_custom_call.1} parent=11 // pred_fallthru
          _
        // Predicated region
        $region49: #{tpu_custom_call.1} parent=11 // pred_check
          %p544 = pneg %p298
        $region50: #{tpu_custom_call.1} parent=11 // pred_check_branch
          %546 = sbr.rel (%p544) target = $region52
        $region51: #{tpu_custom_call.1} parent=11 // pred_region
          %s548 = ssub.s32 2048, 2048
          %549 = vsyncadd [#allocation15], %s548
          %s550 = sshll.u32 [#allocation14], 4
          %s551 = int_to_ptr.vmem [resolvable:$true] %s550
          %556 = dma.hbm_to_vmem [thread:$0]  %s10, 2048, %s551, [#allocation15], 128, 128, 8
        $region52: #{tpu_custom_call.1} parent=11 // pred_fallthru
          _
        // Predicated region
        $region53: #{tpu_custom_call.1} parent=11 // pred_check
          %p557 = pneg %p319
        $region54: #{tpu_custom_call.1} parent=11 // pred_check_branch
          %559 = sbr.rel (%p557) target = $region56
        $region55: #{tpu_custom_call.1} parent=11 // pred_region
          _
        $region56: #{tpu_custom_call.1} parent=11 // pred_fallthru
          _
        // Predicated region
        $region57: #{tpu_custom_call.1} parent=11 // pred_check
          %p560 = pneg %p340
        $region58: #{tpu_custom_call.1} parent=11 // pred_check_branch
          %562 = sbr.rel (%p560) target = $region60
        $region59: #{tpu_custom_call.1} parent=11 // pred_region
          _
        $region60: #{tpu_custom_call.1} parent=11 // pred_fallthru
          _
        // Predicated region
        $region61: #{tpu_custom_call.1} parent=11 // pred_check
          %p563 = pneg %p361
        $region62: #{tpu_custom_call.1} parent=11 // pred_check_branch
          %565 = sbr.rel (%p563) target = $region64
        $region63: #{tpu_custom_call.1} parent=11 // pred_region
          _
        $region64: #{tpu_custom_call.1} parent=11 // pred_fallthru
          _
        // Predicated region
        $region65: #{tpu_custom_call.1} parent=11 // pred_check
          %p566 = pneg %p382
        $region66: #{tpu_custom_call.1} parent=11 // pred_check_branch
          %568 = sbr.rel (%p566) target = $region68
        $region67: #{tpu_custom_call.1} parent=11 // pred_region
          _
        $region68: #{tpu_custom_call.1} parent=11 // pred_fallthru
          _
      $region12: #{tpu_custom_call.1} parent=5 // pred_fallthru
        _
      %p569 = scmp.lt.s32.totalorder %s28, 4
      // Predicated region
      $region69: #{tpu_custom_call.1} parent=5 // pred_check
        %p570 = pneg %p569
      $region70: #{tpu_custom_call.1} parent=5 // pred_check_branch
        %572 = sbr.rel (%p570) target = $region72
      $region71: #{tpu_custom_call.1} parent=5 // pred_region
        // Predicated region
        $region73: #{tpu_custom_call.1} parent=71 // pred_check
          %p573 = pneg %p187
        $region74: #{tpu_custom_call.1} parent=71 // pred_check_branch
          %575 = sbr.rel (%p573) target = $region76
        $region75: #{tpu_custom_call.1} parent=71 // pred_region
          %s576 = sand.u32 %s177, 1
          %s577 = sand.u32 %s177, 1
          %s578 = smul.addr %s577, 8
          %s579 = scalar_lea.vmem [#allocation9], %s578
          %s580 = smul.u32 2, %s35
          %s581 = smul.addr %s580, 4
          %s582 = sadd.s32 %s36, %s581
          %s583 = smul.addr %s582, 4
          %s584 = scalar_lea.vmem %s5, %s583
          // Predicated region
          $region77: #{tpu_custom_call.1} parent=75 // pred_check
            _
          $region78: #{tpu_custom_call.1} parent=75 // pred_check_branch
            %586 = sbr.rel (0) target = $region80
          $region79: #{tpu_custom_call.1} parent=75 // pred_region
            // Predicated region
            $region81: #{tpu_custom_call.1} parent=79 // pred_check
              _
            $region82: #{tpu_custom_call.1} parent=79 // pred_check_branch
              %588 = sbr.rel target = $region84
            $region83: #{tpu_custom_call.1} parent=79 // pred_region
              // Predicated region
              $region96: #{tpu_custom_call.1} parent=83 // pred_check
                _
              $region97: #{tpu_custom_call.1} parent=83 // pred_check_branch
                %606 = sbr.rel (0) target = $region99
              $region98: #{tpu_custom_call.1} parent=83 // pred_region
                loop: start=0, step=1, limit=1
                $region100: #{tpu_custom_call.1} parent=98 // loop_pre_header
                  _
                $region101: #{tpu_custom_call.1} parent=98 // loop_header
                  %s608 = sphi 0, %s612
                  %p609 = scmp.ge.s32.totalorder %s608, 1
                  %s613 = sphi %s584, %s584
                  %s614 = sphi %s579, %s579
                $region102: #{tpu_custom_call.1} parent=98 // loop_header_branch
                  %611 = sbr.rel (%p609) target = $region106
                $region103: #{tpu_custom_call.1} parent=98 // loop_body
                  _
                $region104: #{tpu_custom_call.1} parent=98 // loop_footer
                  %s612 = sadd.s32 1, %s608
                $region105: #{tpu_custom_call.1} parent=98 // loop_footer_branch
                  %607 = sbr.rel target = $region101
                $region106: #{tpu_custom_call.1} parent=98 // loop_exit
                  _
                %s616 = ssub.s32 16, 1
                loop: start=0, step=1, limit=1
                $region107: #{tpu_custom_call.1} parent=98 // loop_pre_header
                  _
                $region108: #{tpu_custom_call.1} parent=98 // loop_header
                  %s618 = sphi 0, %s622
                  %p619 = scmp.ge.s32.totalorder %s618, 1
                  %s623 = sphi %s584, %s584
                  %s624 = sphi %s579, %s579
                $region109: #{tpu_custom_call.1} parent=98 // loop_header_branch
                  %621 = sbr.rel (%p619) target = $region113
                $region110: #{tpu_custom_call.1} parent=98 // loop_body
                  %v625 = vld [vmem:[%s623] sm:%s616]
                  %626 = vst [vmem:[%s624] sm:%s616] %v625
                  %v627 = vld [vmem:[%s623 + $0x10] sm:%s616]
                  %628 = vst [vmem:[%s624 + $0x4] sm:%s616] %v627
                $region111: #{tpu_custom_call.1} parent=98 // loop_footer
                  %s622 = sadd.s32 1, %s618
                $region112: #{tpu_custom_call.1} parent=98 // loop_footer_branch
                  %617 = sbr.rel target = $region108
                $region113: #{tpu_custom_call.1} parent=98 // loop_exit
                  _
              $region99: #{tpu_custom_call.1} parent=83 // pred_fallthru
                _
            $region84: #{tpu_custom_call.1} parent=79 // pred_fallthru
              _
            // Predicated region
            $region85: #{tpu_custom_call.1} parent=79 // pred_check
              _
            $region86: #{tpu_custom_call.1} parent=79 // pred_check_branch
              %590 = sbr.rel (0) target = $region88
            $region87: #{tpu_custom_call.1} parent=79 // pred_region
              %s592 = ssub.s32 16, 1
              loop: start=0, step=1, limit=1
              $region89: #{tpu_custom_call.1} parent=87 // loop_pre_header
                _
              $region90: #{tpu_custom_call.1} parent=87 // loop_header
                %s594 = sphi 0, %s598
                %p595 = scmp.ge.s32.totalorder %s594, 1
                %s599 = sphi %s584, %s584
                %s600 = sphi %s579, %s579
              $region91: #{tpu_custom_call.1} parent=87 // loop_header_branch
                %597 = sbr.rel (%p595) target = $region95
              $region92: #{tpu_custom_call.1} parent=87 // loop_body
                %v601 = vld [vmem:[%s599] sm:%s592]
                %602 = vst [vmem:[%s600] sm:%s592] %v601
                %v603 = vld [vmem:[%s599 + $0x10] sm:%s592]
                %604 = vst [vmem:[%s600 + $0x4] sm:%s592] %v603
              $region93: #{tpu_custom_call.1} parent=87 // loop_footer
                %s598 = sadd.s32 1, %s594
              $region94: #{tpu_custom_call.1} parent=87 // loop_footer_branch
                %593 = sbr.rel target = $region90
              $region95: #{tpu_custom_call.1} parent=87 // loop_exit
                _
            $region88: #{tpu_custom_call.1} parent=79 // pred_fallthru
              _
          $region80: #{tpu_custom_call.1} parent=75 // pred_fallthru
            _
          %629 = vnop
        $region76: #{tpu_custom_call.1} parent=71 // pred_fallthru
          _
      $region72: #{tpu_custom_call.1} parent=5 // pred_fallthru
        _
      %p630 = scmp.le.s32.totalorder 1, %s28
      %p631 = scmp.lt.s32.totalorder %s28, 5
      %p632 = pnand %p630, %p631
      %p633 = pneg %p632
      // Predicated region
      $region114: #{tpu_custom_call.1} parent=5 // pred_check
        _
      $region115: #{tpu_custom_call.1} parent=5 // pred_check_branch
        %635 = sbr.rel (%p632) target = $region117
      $region116: #{tpu_custom_call.1} parent=5 // pred_region
        %s636 = ssub.s32 %s28, 1
        // Predicated region
        $region118: #{tpu_custom_call.1} parent=116 // pred_check
          %p637 = pneg %p87
        $region119: #{tpu_custom_call.1} parent=116 // pred_check_branch
          %639 = sbr.rel (%p637) target = $region121
        $region120: #{tpu_custom_call.1} parent=116 // pred_region
          %640 = dma.done [#allocation6], 32
        $region121: #{tpu_custom_call.1} parent=116 // pred_fallthru
          _
        // Predicated region
        $region122: #{tpu_custom_call.1} parent=116 // pred_check
          %p641 = pneg %p139
        $region123: #{tpu_custom_call.1} parent=116 // pred_check_branch
          %643 = sbr.rel (%p641) target = $region125
        $region124: #{tpu_custom_call.1} parent=116 // pred_region
          %644 = dma.done [#allocation8], 32
        $region125: #{tpu_custom_call.1} parent=116 // pred_fallthru
          _
        %s645 = sand.u32 %s180, 1
        %s646 = sand.u32 %s180, 1
        %s647 = smul.addr %s646, 8
        %s648 = scalar_lea.vmem [#allocation9], %s647
        // Predicated region
        $region126: #{tpu_custom_call.1} parent=116 // pred_check
          %p649 = pneg %p193
        $region127: #{tpu_custom_call.1} parent=116 // pred_check_branch
          %651 = sbr.rel (%p649) target = $region129
        $region128: #{tpu_custom_call.1} parent=116 // pred_region
          _
        $region129: #{tpu_custom_call.1} parent=116 // pred_fallthru
          _
        // Predicated region
        $region130: #{tpu_custom_call.1} parent=116 // pred_check
          %p652 = pneg %p235
        $region131: #{tpu_custom_call.1} parent=116 // pred_check_branch
          %654 = sbr.rel (%p652) target = $region133
        $region132: #{tpu_custom_call.1} parent=116 // pred_region
          %655 = dma.done [#allocation8], 3072
        $region133: #{tpu_custom_call.1} parent=116 // pred_fallthru
          _
        // Predicated region
        $region134: #{tpu_custom_call.1} parent=116 // pred_check
          %p656 = pneg %p256
        $region135: #{tpu_custom_call.1} parent=116 // pred_check_branch
          %658 = sbr.rel (%p656) target = $region137
        $region136: #{tpu_custom_call.1} parent=116 // pred_region
          %659 = dma.done [#allocation12], 48
        $region137: #{tpu_custom_call.1} parent=116 // pred_fallthru
          _
        // Predicated region
        $region138: #{tpu_custom_call.1} parent=116 // pred_check
          %p660 = pneg %p277
        $region139: #{tpu_custom_call.1} parent=116 // pred_check_branch
          %662 = sbr.rel (%p660) target = $region141
        $region140: #{tpu_custom_call.1} parent=116 // pred_region
          %663 = dma.done [#allocation12], 48
        $region141: #{tpu_custom_call.1} parent=116 // pred_fallthru
          _
        // Predicated region
        $region142: #{tpu_custom_call.1} parent=116 // pred_check
          %p664 = pneg %p298
        $region143: #{tpu_custom_call.1} parent=116 // pred_check_branch
          %666 = sbr.rel (%p664) target = $region145
        $region144: #{tpu_custom_call.1} parent=116 // pred_region
          %667 = dma.done [#allocation15], 2048
        $region145: #{tpu_custom_call.1} parent=116 // pred_fallthru
          _
        %p668 = pneg %p61
        %p669 = pneg %p58
        %p670 = pneg %p87
        %p671 = pneg %p84
        %s672 = smul.u32 2, %s37
        %p673 = scmp.lt.s32.totalorder %s672, 1
        %s674 = scalar_select %p673, %s672, 1
        %s675 = smul.addr %s674, 2
        %s676 = smul.addr %s675, 4
        %s677 = scalar_lea.vmem %s2, %s676
        %p678 = pneg %p113
        %p679 = pneg %p110
        %p680 = pneg %p139
        %p681 = pneg %p136
        %s682 = smul.u32 2, %s37
        %p683 = scmp.lt.s32.totalorder %s682, 1
        %s684 = scalar_select %p683, %s682, 1
        %s685 = smul.addr %s684, 2
        %s686 = smul.addr %s685, 8
        %s687 = scalar_lea.vmem %s4, %s686
        %p688 = pneg %p165
        %p689 = pneg %p162
        %s690 = sand.u32 %s180, 1
        %s691 = sand.u32 %s180, 1
        %s692 = smul.addr %s691, 8
        %s693 = scalar_lea.vmem [#allocation9], %s692
        %p694 = pneg %p193
        %p695 = pneg %p190
        %p696 = pneg %p214
        %p697 = pneg %p211
        %p698 = pneg %p235
        %p699 = pneg %p232
        %p700 = pneg %p256
        %p701 = pneg %p253
        %p702 = pneg %p277
        %p703 = pneg %p274
        %p704 = pneg %p298
        %p705 = pneg %p295
        %p706 = pneg %p319
        %p707 = pneg %p316
        %p708 = pneg %p340
        %p709 = pneg %p337
        %p710 = pneg %p361
        %p711 = pneg %p358
        %p712 = pneg %p382
        %p713 = pneg %p379
        %p714 = pneg %p410
        %p715 = pneg %p407
        %s716 = sand.u32 %s397, 1
        %s717 = sand.u32 %s397, 1
        %s718 = smul.addr %s717, 16
        %s719 = scalar_lea.vmem [#allocation16], %s718
        %p720 = pneg %p436
        %p721 = pneg %p433
        %s722 = smul.u32 2, %s37
        %p723 = scmp.lt.s32.totalorder %s722, 1
        %s724 = scalar_select %p723, %s722, 1
        %s725 = smul.addr %s724, 4
        %s726 = scalar_lea.vmem %s16, %s725
        %s727 = smul.u32 2, %s37
        %s728 = smul.u32 2, %s37
        %p729 = scmp.lt.s32.totalorder %s728, 1
        %s730 = scalar_select %p729, %s728, 1
        %s731 = smul.addr %s730, 2
        %s732 = smul.addr %s731, 4
        %s733 = scalar_lea.vmem %s2, %s732
        %s734 = smul.u32 2, %s37
        %s735 = smul.u32 2, %s37
        %s736 = smul.u32 2, %s37
        %p737 = scmp.lt.s32.totalorder %s736, 1
        %s738 = scalar_select %p737, %s736, 1
        %s739 = smul.addr %s738, 2
        %s740 = smul.addr %s739, 8
        %s741 = scalar_lea.vmem %s4, %s740
        %s742 = smul.u32 2, %s37
        %s743 = smul.u32 2, %s37
        %s744 = smul.u32 2, %s37
        %s745 = smul.u32 2, %s37
        %p746 = scmp.lt.s32.totalorder %s745, 1
        %s747 = scalar_select %p746, %s745, 1
        %s748 = smul.addr %s747, 4
        %s749 = scalar_lea.vmem %s16, %s748
        %s750 = smul.u32 2, %s37
        %p752 = scmp.eq.s32.totalorder %s38, 0
        // Predicated region
        $region146: #{tpu_custom_call.1} parent=116 // pred_check
          %p753 = pneg %p752
        $region147: #{tpu_custom_call.1} parent=116 // pred_check_branch
          %755 = sbr.rel (%p753) target = $region149
        $region148: #{tpu_custom_call.1} parent=116 // pred_region
          %v756 = vld [vmem:[%s0] sm:$0x7]
          %v758 = vrot.slane %v756, 5
          %vm760 = vcmask 1042432
          %v761 = vsel %vm760, %v756, %v758
          %762 = vst [vmem:[#allocation3] sm:$0x3f] %v761
          %v763 = vld [vmem:[#allocation5] sm:$0x1]
          %v765 = vlaneseq
          %v766 = vshrl.u32 %v765, 7
          %v767 = vsub.s32 0, %v766
          %v768 = vrot.slane %v763, %v767
          %s770 = scalar_lea.vmem [#allocation5], 1
          %v771 = vld [vmem:[%s770] sm:$0x1]
          %v773 = vlaneseq
          %v774 = vshrl.u32 %v773, 7
          %v775 = vsub.s32 0, %v774
          %v776 = vrot.slane %v771, %v775
          %v778 = vsel %vm760, %v768, %v776
          %779 = vst [vmem:[#allocation2] sm:$0x3f] %v778
        $region149: #{tpu_custom_call.1} parent=116 // pred_fallthru
          _
        %v780 = vld [vmem:[#allocation3] sm:$0x3f]
        %v781 = vld [vmem:[#allocation2] sm:$0x3f]
        %v782 = vpack.c.bf16 %v780, %v780
        %v783 = vpack.c.bf16 %v781, %v781
        %v784 = vld [vmem:[%s6] sm:$0xff]
        %v785 = vld [vmem:[%s6 + $0x8] sm:$0xf]
        %v786 = vld [vmem:[%s6 + $0xc] sm:$0xff]
        %v787 = vld [vmem:[%s6 + $0x14] sm:$0xf]
        %v788 = vld [vmem:[%s6 + $0x18] sm:$0xff]
        %v789 = vld [vmem:[%s6 + $0x20] sm:$0xf]
        %v790 = vld [vmem:[%s6 + $0x24] sm:$0xff]
        %v791 = vld [vmem:[%s6 + $0x2c] sm:$0xf]
        %v792 = vld [vmem:[%s6 + $0x30] sm:$0xff]
        %v793 = vld [vmem:[%s6 + $0x38] sm:$0xf]
        %v794 = vld [vmem:[%s6 + $0x3c] sm:$0xff]
        %v795 = vld [vmem:[%s6 + $0x44] sm:$0xf]
        %v796 = vld [vmem:[%s6 + $0x48] sm:$0xff]
        %v797 = vld [vmem:[%s6 + $0x50] sm:$0xf]
        %v798 = vld [vmem:[%s6 + $0x54] sm:$0xff]
        %v799 = vld [vmem:[%s6 + $0x5c] sm:$0xf]
        %v800 = vld [vmem:[%s6 + $0x60] sm:$0xff]
        %v801 = vld [vmem:[%s6 + $0x68] sm:$0xf]
        %v802 = vld [vmem:[%s6 + $0x6c] sm:$0xff]
        %v803 = vld [vmem:[%s6 + $0x74] sm:$0xf]
        %v804 = vld [vmem:[%s6 + $0x78] sm:$0xff]
        %v805 = vld [vmem:[%s6 + $0x80] sm:$0xf]
        %v806 = vld [vmem:[%s6 + $0x84] sm:$0xff]
        %v807 = vld [vmem:[%s6 + $0x8c] sm:$0xf]
        %v808 = vld [vmem:[%s6 + $0x90] sm:$0xff]
        %v809 = vld [vmem:[%s6 + $0x98] sm:$0xf]
        %v810 = vld [vmem:[%s6 + $0x9c] sm:$0xff]
        %v811 = vld [vmem:[%s6 + $0xa4] sm:$0xf]
        %v812 = vld [vmem:[%s6 + $0xa8] sm:$0xff]
        %v813 = vld [vmem:[%s6 + $0xb0] sm:$0xf]
        %v814 = vld [vmem:[%s6 + $0xb4] sm:$0xff]
        %v815 = vld [vmem:[%s6 + $0xbc] sm:$0xf]
        %v816 = vld [vmem:[#allocation11] sm:$0x7]
        %v818 = vlaneseq
        %v819 = vshrl.u32 %v818, 7
        %v820 = vsub.s32 0, %v819
        %v821 = vrot.slane %v816, %v820
        %v822 = vlaneseq
        %v823 = vshrl.u32 %v822, 7
        %v824 = vsub.s32 1, %v823
        %v825 = vrot.slane %v816, %v824
        %v826 = vlaneseq
        %v827 = vshrl.u32 %v826, 7
        %v828 = vsub.s32 2, %v827
        %v829 = vrot.slane %v816, %v828
        %v865 = vunpack.c.l.b16 %v784
        %v866 = vunpack.c.h.b16 %v784
        %v867 = vunpack.c.l.b16 %v785
        %v868 = vunpack.c.l.b16 %v786
        %v869 = vunpack.c.h.b16 %v786
        %v870 = vunpack.c.l.b16 %v787
        %v871 = vunpack.c.l.b16 %v788
        %v872 = vunpack.c.h.b16 %v788
        %v873 = vunpack.c.l.b16 %v789
        %v874 = vunpack.c.l.b16 %v790
        %v875 = vunpack.c.h.b16 %v790
        %v876 = vunpack.c.l.b16 %v791
        %v877 = vunpack.c.l.b16 %v792
        %v878 = vunpack.c.h.b16 %v792
        %v879 = vunpack.c.l.b16 %v793
        %v880 = vunpack.c.l.b16 %v794
        %v881 = vunpack.c.h.b16 %v794
        %v882 = vunpack.c.l.b16 %v795
        %v883 = vunpack.c.l.b16 %v796
        %v884 = vunpack.c.h.b16 %v796
        %v885 = vunpack.c.l.b16 %v797
        %v886 = vunpack.c.l.b16 %v798
        %v887 = vunpack.c.h.b16 %v798
        %v888 = vunpack.c.l.b16 %v799
        %v889 = vunpack.c.l.b16 %v800
        %v890 = vunpack.c.h.b16 %v800
        %v891 = vunpack.c.l.b16 %v801
        %v892 = vunpack.c.l.b16 %v802
        %v893 = vunpack.c.h.b16 %v802
        %v894 = vunpack.c.l.b16 %v803
        %v895 = vunpack.c.l.b16 %v804
        %v896 = vunpack.c.h.b16 %v804
        %v897 = vunpack.c.l.b16 %v805
        %v898 = vunpack.c.l.b16 %v806
        %v899 = vunpack.c.h.b16 %v806
        %v900 = vunpack.c.l.b16 %v807
        %v901 = vunpack.c.l.b16 %v808
        %v902 = vunpack.c.h.b16 %v808
        %v903 = vunpack.c.l.b16 %v809
        %v904 = vunpack.c.l.b16 %v810
        %v905 = vunpack.c.h.b16 %v810
        %v906 = vunpack.c.l.b16 %v811
        %v907 = vunpack.c.l.b16 %v812
        %v908 = vunpack.c.h.b16 %v812
        %v909 = vunpack.c.l.b16 %v813
        %v910 = vunpack.c.l.b16 %v814
        %v911 = vunpack.c.h.b16 %v814
        %v912 = vunpack.c.l.b16 %v815
        %v913 = vpack.c.b16 %v868, %v865
        %v914 = vpack.c.b16 %v869, %v866
        %v915 = vpack.c.b16 %v870, %v867
        %v916 = vpack.c.b16 %v874, %v871
        %v917 = vpack.c.b16 %v875, %v872
        %v918 = vpack.c.b16 %v876, %v873
        %v919 = vpack.c.b16 %v880, %v877
        %v920 = vpack.c.b16 %v881, %v878
        %v921 = vpack.c.b16 %v882, %v879
        %v922 = vpack.c.b16 %v886, %v883
        %v923 = vpack.c.b16 %v887, %v884
        %v924 = vpack.c.b16 %v888, %v885
        %v925 = vpack.c.b16 %v892, %v889
        %v926 = vpack.c.b16 %v893, %v890
        %v927 = vpack.c.b16 %v894, %v891
        %v928 = vpack.c.b16 %v898, %v895
        %v929 = vpack.c.b16 %v899, %v896
        %v930 = vpack.c.b16 %v900, %v897
        %v931 = vpack.c.b16 %v904, %v901
        %v932 = vpack.c.b16 %v905, %v902
        %v933 = vpack.c.b16 %v906, %v903
        %v934 = vpack.c.b16 %v910, %v907
        %v935 = vpack.c.b16 %v911, %v908
        %v936 = vpack.c.b16 %v912, %v909
        %961 = vmatprep.subr.bf16.mxu0 %v935
        %962 = vmatpush1.bf16.msra.mxu0 %v934
        %963 = vmatprep.subr.bf16.mxu0 %v932
        %964 = vmatpush1.bf16.msra.mxu0 %v931
        %965 = vmatprep.subr.bf16.mxu0 %v929
        %966 = vmatpush1.bf16.msra.mxu0 %v928
        %967 = vmatprep.subr.bf16.mxu0 %v926
        %968 = vmatpush1.bf16.msra.mxu0 %v925
        %969 = vmatprep.subr.bf16.mxu0 %v923
        %970 = vmatpush1.bf16.msra.mxu0 %v922
        %971 = vmatprep.subr.bf16.mxu0 %v920
        %972 = vmatpush1.bf16.msra.mxu0 %v919
        %973 = vmatprep.subr.bf16.mxu0 %v917
        %974 = vmatpush1.bf16.msra.mxu0 %v916
        %975 = vmatprep.subr.bf16.mxu0 %v914
        %976 = vmatpush1.bf16.msra.mxu0 %v913
        %977 = vmatprep.subr.bf16.mxu0 0
        %978 = vmatpush2.bf16.msra.mxu0 0
        %979 = vmatprep.subr.bf16.mxu0 0
        %980 = vmatpush2.bf16.msra.mxu0 0
        %981 = vmatprep.subr.bf16.mxu0 0
        %982 = vmatpush2.bf16.msra.mxu0 0
        %983 = vmatprep.subr.bf16.mxu0 0
        %984 = vmatpush2.bf16.msra.mxu0 0
        %985 = vmatprep.subr.bf16.mxu0 0
        %986 = vmatpush2.bf16.msra.mxu0 0
        %987 = vmatprep.subr.bf16.mxu0 0
        %988 = vmatpush2.bf16.msra.mxu0 0
        %989 = vmatprep.subr.bf16.mxu0 0
        %990 = vmatpush2.bf16.msra.mxu0 0
        %991 = vmatprep.subr.bf16.mxu0 0
        %992 = vmatpush2.bf16.msra.mxu0 0
        %993 = vmatprep.mubr.bf16.mxu0 0
        %994 = vmatmul.mubr.bf16.gmra.mxu0 %v782
        %v995 = vpop.f32.mrf.mxu0
        %v996 = vadd.f32 %v821, %v995
        %v997 = vpop.f32.mrf.mxu0
        %v998 = vadd.f32 %v825, %v997
        %v999 = vpop.f32.mrf.mxu0
        %v1000 = vpop.f32.mrf.mxu0
        %1001 = vdwg.mxu0
        %1002 = vmatprep.subr.bf16.mxu0 0
        %1003 = vmatpush1.bf16.msra.mxu0 %v936
        %1004 = vmatprep.subr.bf16.mxu0 0
        %1005 = vmatpush1.bf16.msra.mxu0 %v933
        %1006 = vmatprep.subr.bf16.mxu0 0
        %1007 = vmatpush1.bf16.msra.mxu0 %v930
        %1008 = vmatprep.subr.bf16.mxu0 0
        %1009 = vmatpush1.bf16.msra.mxu0 %v927
        %1010 = vmatprep.subr.bf16.mxu0 0
        %1011 = vmatpush1.bf16.msra.mxu0 %v924
        %1012 = vmatprep.subr.bf16.mxu0 0
        %1013 = vmatpush1.bf16.msra.mxu0 %v921
        %1014 = vmatprep.subr.bf16.mxu0 0
        %1015 = vmatpush1.bf16.msra.mxu0 %v918
        %1016 = vmatprep.subr.bf16.mxu0 0
        %1017 = vmatpush1.bf16.msra.mxu0 %v915
        %1018 = vmatprep.subr.bf16.mxu0 0
        %1019 = vmatpush2.bf16.msra.mxu0 0
        %1020 = vmatprep.subr.bf16.mxu0 0
        %1021 = vmatpush2.bf16.msra.mxu0 0
        %1022 = vmatprep.subr.bf16.mxu0 0
        %1023 = vmatpush2.bf16.msra.mxu0 0
        %1024 = vmatprep.subr.bf16.mxu0 0
        %1025 = vmatpush2.bf16.msra.mxu0 0
        %1026 = vmatprep.subr.bf16.mxu0 0
        %1027 = vmatpush2.bf16.msra.mxu0 0
        %1028 = vmatprep.subr.bf16.mxu0 0
        %1029 = vmatpush2.bf16.msra.mxu0 0
        %1030 = vmatprep.subr.bf16.mxu0 0
        %1031 = vmatpush2.bf16.msra.mxu0 0
        %1032 = vmatprep.subr.bf16.mxu0 0
        %1033 = vmatpush2.bf16.msra.mxu0 0
        %1034 = vmatprep.mubr.bf16.mxu0 0
        %1035 = vmatmul.mubr.bf16.gmra.mxu0 %v782
        %v1036 = vpop.f32.mrf.mxu0
        %v1037 = vadd.f32 %v829, %v1036
        %v1038 = vpop.f32.mrf.mxu0
        %v1039 = vpop.f32.mrf.mxu0
        %v1040 = vpop.f32.mrf.mxu0
        %1041 = vdwg.mxu0
        %v1042 = vld [vmem:[#allocation10] sm:$0xff]
        %v1043 = vld [vmem:[#allocation10 + $0x8] sm:$0xf]
        %v1044 = vld [vmem:[#allocation10 + $0xc] sm:$0xff]
        %v1045 = vld [vmem:[#allocation10 + $0x14] sm:$0xf]
        %v1046 = vld [vmem:[#allocation10 + $0x18] sm:$0xff]
        %v1047 = vld [vmem:[#allocation10 + $0x20] sm:$0xf]
        %v1048 = vld [vmem:[#allocation10 + $0x24] sm:$0xff]
        %v1049 = vld [vmem:[#allocation10 + $0x2c] sm:$0xf]
        %v1050 = vld [vmem:[#allocation10 + $0x30] sm:$0xff]
        %v1051 = vld [vmem:[#allocation10 + $0x38] sm:$0xf]
        %v1052 = vld [vmem:[#allocation10 + $0x3c] sm:$0xff]
        %v1053 = vld [vmem:[#allocation10 + $0x44] sm:$0xf]
        %v1054 = vld [vmem:[#allocation10 + $0x48] sm:$0xff]
        %v1055 = vld [vmem:[#allocation10 + $0x50] sm:$0xf]
        %v1056 = vld [vmem:[#allocation10 + $0x54] sm:$0xff]
        %v1057 = vld [vmem:[#allocation10 + $0x5c] sm:$0xf]
        %v1058 = vld [vmem:[#allocation10 + $0x60] sm:$0xff]
        %v1059 = vld [vmem:[#allocation10 + $0x68] sm:$0xf]
        %v1060 = vld [vmem:[#allocation10 + $0x6c] sm:$0xff]
        %v1061 = vld [vmem:[#allocation10 + $0x74] sm:$0xf]
        %v1062 = vld [vmem:[#allocation10 + $0x78] sm:$0xff]
        %v1063 = vld [vmem:[#allocation10 + $0x80] sm:$0xf]
        %v1064 = vld [vmem:[#allocation10 + $0x84] sm:$0xff]
        %v1065 = vld [vmem:[#allocation10 + $0x8c] sm:$0xf]
        %v1066 = vld [vmem:[#allocation10 + $0x90] sm:$0xff]
        %v1067 = vld [vmem:[#allocation10 + $0x98] sm:$0xf]
        %v1068 = vld [vmem:[#allocation10 + $0x9c] sm:$0xff]
        %v1069 = vld [vmem:[#allocation10 + $0xa4] sm:$0xf]
        %v1070 = vld [vmem:[#allocation10 + $0xa8] sm:$0xff]
        %v1071 = vld [vmem:[#allocation10 + $0xb0] sm:$0xf]
        %v1072 = vld [vmem:[#allocation10 + $0xb4] sm:$0xff]
        %v1073 = vld [vmem:[#allocation10 + $0xbc] sm:$0xf]
        %v1074 = vld [vmem:[#allocation13] sm:$0x7]
        %v1076 = vlaneseq
        %v1077 = vshrl.u32 %v1076, 7
        %v1078 = vsub.s32 0, %v1077
        %v1079 = vrot.slane %v1074, %v1078
        %v1080 = vlaneseq
        %v1081 = vshrl.u32 %v1080, 7
        %v1082 = vsub.s32 1, %v1081
        %v1083 = vrot.slane %v1074, %v1082
        %v1084 = vlaneseq
        %v1085 = vshrl.u32 %v1084, 7
        %v1086 = vsub.s32 2, %v1085
        %v1087 = vrot.slane %v1074, %v1086
        %v1123 = vunpack.c.l.b16 %v1042
        %v1124 = vunpack.c.h.b16 %v1042
        %v1125 = vunpack.c.l.b16 %v1043
        %v1126 = vunpack.c.l.b16 %v1044
        %v1127 = vunpack.c.h.b16 %v1044
        %v1128 = vunpack.c.l.b16 %v1045
        %v1129 = vunpack.c.l.b16 %v1046
        %v1130 = vunpack.c.h.b16 %v1046
        %v1131 = vunpack.c.l.b16 %v1047
        %v1132 = vunpack.c.l.b16 %v1048
        %v1133 = vunpack.c.h.b16 %v1048
        %v1134 = vunpack.c.l.b16 %v1049
        %v1135 = vunpack.c.l.b16 %v1050
        %v1136 = vunpack.c.h.b16 %v1050
        %v1137 = vunpack.c.l.b16 %v1051
        %v1138 = vunpack.c.l.b16 %v1052
        %v1139 = vunpack.c.h.b16 %v1052
        %v1140 = vunpack.c.l.b16 %v1053
        %v1141 = vunpack.c.l.b16 %v1054
        %v1142 = vunpack.c.h.b16 %v1054
        %v1143 = vunpack.c.l.b16 %v1055
        %v1144 = vunpack.c.l.b16 %v1056
        %v1145 = vunpack.c.h.b16 %v1056
        %v1146 = vunpack.c.l.b16 %v1057
        %v1147 = vunpack.c.l.b16 %v1058
        %v1148 = vunpack.c.h.b16 %v1058
        %v1149 = vunpack.c.l.b16 %v1059
        %v1150 = vunpack.c.l.b16 %v1060
        %v1151 = vunpack.c.h.b16 %v1060
        %v1152 = vunpack.c.l.b16 %v1061
        %v1153 = vunpack.c.l.b16 %v1062
        %v1154 = vunpack.c.h.b16 %v1062
        %v1155 = vunpack.c.l.b16 %v1063
        %v1156 = vunpack.c.l.b16 %v1064
        %v1157 = vunpack.c.h.b16 %v1064
        %v1158 = vunpack.c.l.b16 %v1065
        %v1159 = vunpack.c.l.b16 %v1066
        %v1160 = vunpack.c.h.b16 %v1066
        %v1161 = vunpack.c.l.b16 %v1067
        %v1162 = vunpack.c.l.b16 %v1068
        %v1163 = vunpack.c.h.b16 %v1068
        %v1164 = vunpack.c.l.b16 %v1069
        %v1165 = vunpack.c.l.b16 %v1070
        %v1166 = vunpack.c.h.b16 %v1070
        %v1167 = vunpack.c.l.b16 %v1071
        %v1168 = vunpack.c.l.b16 %v1072
        %v1169 = vunpack.c.h.b16 %v1072
        %v1170 = vunpack.c.l.b16 %v1073
        %v1171 = vpack.c.b16 %v1126, %v1123
        %v1172 = vpack.c.b16 %v1127, %v1124
        %v1173 = vpack.c.b16 %v1128, %v1125
        %v1174 = vpack.c.b16 %v1132, %v1129
        %v1175 = vpack.c.b16 %v1133, %v1130
        %v1176 = vpack.c.b16 %v1134, %v1131
        %v1177 = vpack.c.b16 %v1138, %v1135
        %v1178 = vpack.c.b16 %v1139, %v1136
        %v1179 = vpack.c.b16 %v1140, %v1137
        %v1180 = vpack.c.b16 %v1144, %v1141
        %v1181 = vpack.c.b16 %v1145, %v1142
        %v1182 = vpack.c.b16 %v1146, %v1143
        %v1183 = vpack.c.b16 %v1150, %v1147
        %v1184 = vpack.c.b16 %v1151, %v1148
        %v1185 = vpack.c.b16 %v1152, %v1149
        %v1186 = vpack.c.b16 %v1156, %v1153
        %v1187 = vpack.c.b16 %v1157, %v1154
        %v1188 = vpack.c.b16 %v1158, %v1155
        %v1189 = vpack.c.b16 %v1162, %v1159
        %v1190 = vpack.c.b16 %v1163, %v1160
        %v1191 = vpack.c.b16 %v1164, %v1161
        %v1192 = vpack.c.b16 %v1168, %v1165
        %v1193 = vpack.c.b16 %v1169, %v1166
        %v1194 = vpack.c.b16 %v1170, %v1167
        %1219 = vmatprep.subr.bf16.mxu0 %v1193
        %1220 = vmatpush1.bf16.msra.mxu0 %v1192
        %1221 = vmatprep.subr.bf16.mxu0 %v1190
        %1222 = vmatpush1.bf16.msra.mxu0 %v1189
        %1223 = vmatprep.subr.bf16.mxu0 %v1187
        %1224 = vmatpush1.bf16.msra.mxu0 %v1186
        %1225 = vmatprep.subr.bf16.mxu0 %v1184
        %1226 = vmatpush1.bf16.msra.mxu0 %v1183
        %1227 = vmatprep.subr.bf16.mxu0 %v1181
        %1228 = vmatpush1.bf16.msra.mxu0 %v1180
        %1229 = vmatprep.subr.bf16.mxu0 %v1178
        %1230 = vmatpush1.bf16.msra.mxu0 %v1177
        %1231 = vmatprep.subr.bf16.mxu0 %v1175
        %1232 = vmatpush1.bf16.msra.mxu0 %v1174
        %1233 = vmatprep.subr.bf16.mxu0 %v1172
        %1234 = vmatpush1.bf16.msra.mxu0 %v1171
        %1235 = vmatprep.subr.bf16.mxu0 0
        %1236 = vmatpush2.bf16.msra.mxu0 0
        %1237 = vmatprep.subr.bf16.mxu0 0
        %1238 = vmatpush2.bf16.msra.mxu0 0
        %1239 = vmatprep.subr.bf16.mxu0 0
        %1240 = vmatpush2.bf16.msra.mxu0 0
        %1241 = vmatprep.subr.bf16.mxu0 0
        %1242 = vmatpush2.bf16.msra.mxu0 0
        %1243 = vmatprep.subr.bf16.mxu0 0
        %1244 = vmatpush2.bf16.msra.mxu0 0
        %1245 = vmatprep.subr.bf16.mxu0 0
        %1246 = vmatpush2.bf16.msra.mxu0 0
        %1247 = vmatprep.subr.bf16.mxu0 0
        %1248 = vmatpush2.bf16.msra.mxu0 0
        %1249 = vmatprep.subr.bf16.mxu0 0
        %1250 = vmatpush2.bf16.msra.mxu0 0
        %1251 = vmatprep.mubr.bf16.mxu0 0
        %1252 = vmatmul.mubr.bf16.gmra.mxu0 %v783
        %v1253 = vpop.f32.mrf.mxu0
        %v1254 = vadd.f32 %v1079, %v1253
        %v1255 = vpop.f32.mrf.mxu0
        %v1256 = vadd.f32 %v1083, %v1255
        %v1257 = vpop.f32.mrf.mxu0
        %v1258 = vpop.f32.mrf.mxu0
        %1259 = vdwg.mxu0
        %1260 = vmatprep.subr.bf16.mxu0 0
        %1261 = vmatpush1.bf16.msra.mxu0 %v1194
        %1262 = vmatprep.subr.bf16.mxu0 0
        %1263 = vmatpush1.bf16.msra.mxu0 %v1191
        %1264 = vmatprep.subr.bf16.mxu0 0
        %1265 = vmatpush1.bf16.msra.mxu0 %v1188
        %1266 = vmatprep.subr.bf16.mxu0 0
        %1267 = vmatpush1.bf16.msra.mxu0 %v1185
        %1268 = vmatprep.subr.bf16.mxu0 0
        %1269 = vmatpush1.bf16.msra.mxu0 %v1182
        %1270 = vmatprep.subr.bf16.mxu0 0
        %1271 = vmatpush1.bf16.msra.mxu0 %v1179
        %1272 = vmatprep.subr.bf16.mxu0 0
        %1273 = vmatpush1.bf16.msra.mxu0 %v1176
        %1274 = vmatprep.subr.bf16.mxu0 0
        %1275 = vmatpush1.bf16.msra.mxu0 %v1173
        %1276 = vmatprep.subr.bf16.mxu0 0
        %1277 = vmatpush2.bf16.msra.mxu0 0
        %1278 = vmatprep.subr.bf16.mxu0 0
        %1279 = vmatpush2.bf16.msra.mxu0 0
        %1280 = vmatprep.subr.bf16.mxu0 0
        %1281 = vmatpush2.bf16.msra.mxu0 0
        %1282 = vmatprep.subr.bf16.mxu0 0
        %1283 = vmatpush2.bf16.msra.mxu0 0
        %1284 = vmatprep.subr.bf16.mxu0 0
        %1285 = vmatpush2.bf16.msra.mxu0 0
        %1286 = vmatprep.subr.bf16.mxu0 0
        %1287 = vmatpush2.bf16.msra.mxu0 0
        %1288 = vmatprep.subr.bf16.mxu0 0
        %1289 = vmatpush2.bf16.msra.mxu0 0
        %1290 = vmatprep.subr.bf16.mxu0 0
        %1291 = vmatpush2.bf16.msra.mxu0 0
        %1292 = vmatprep.mubr.bf16.mxu0 0
        %1293 = vmatmul.mubr.bf16.gmra.mxu0 %v783
        %v1294 = vpop.f32.mrf.mxu0
        %v1295 = vadd.f32 %v1087, %v1294
        %v1296 = vpop.f32.mrf.mxu0
        %v1297 = vpop.f32.mrf.mxu0
        %v1298 = vpop.f32.mrf.mxu0
        %1299 = vdwg.mxu0
        %v1300 = vadd.f32 %v996, %v1254
        %v1301 = vxor.u32 %v1300, 2147483648
        %v1302 = vmul.f32 %v1301, 1.442695
        %v1303 = vpow.pop %v1302
        %v1304 = vadd.f32 %v1303, 1.0
        %v1305 = vrcp.pop %v1304
        %v1306 = vmul.f32 1.0, %v1305
        %v1307 = vadd.f32 %v998, %v1256
        %v1308 = vxor.u32 %v1307, 2147483648
        %v1309 = vmul.f32 %v1308, 1.442695
        %v1310 = vpow.pop %v1309
        %v1311 = vadd.f32 %v1310, 1.0
        %v1312 = vrcp.pop %v1311
        %v1313 = vmul.f32 1.0, %v1312
        %v1314 = vmul.f32 %v1306, %v1295
        %v1315 = vadd.f32 %v1037, %v1314
        %v1316 = vtanh.pop %v1315
        %v1317 = vsub.f32 1.0, %v1313
        %v1318 = vmul.f32 %v1317, %v1316
        %v1319 = vmul.f32 %v1313, %v781
        %v1320 = vadd.f32 %v1318, %v1319
        %1321 = vst [vmem:[#allocation2] sm:$0x3f] %v1320
        %v1322 = vpack.c.bf16 %v1320, %v1320
        %v1323 = vlaneseq
        %v1324 = vand.u32 %v1323, 127
        %v1325 = vadd.s32 %v1324, 128
        %v1326 = vld [vmem:[%s733] sm:$0xf]
        %v1327 = vld [vmem:[%s733 + $0x4] sm:$0xf]
        %v1328 = vld [vmem:[#allocation7] sm:$0x1]
        %v1330 = vlaneseq
        %v1331 = vshrl.u32 %v1330, 7
        %v1332 = vsub.s32 0, %v1331
        %v1333 = vrot.slane %v1328, %v1332
        %v1337 = vunpack.c.l.b16 %v1326
        %v1338 = vunpack.c.l.b16 %v1327
        %v1339 = vpack.c.b16 %v1338, %v1337
        %1341 = vmatprep.subr.bf16.mxu0 0
        %1342 = vmatpush1.bf16.xpose.msra.mxu0 0
        %1343 = vmatprep.subr.bf16.mxu0 0
        %1344 = vmatpush1.bf16.xpose.msra.mxu0 0
        %1345 = vmatprep.subr.bf16.mxu0 0
        %1346 = vmatpush1.bf16.xpose.msra.mxu0 0
        %1347 = vmatprep.subr.bf16.mxu0 0
        %1348 = vmatpush1.bf16.xpose.msra.mxu0 0
        %1349 = vmatprep.subr.bf16.mxu0 0
        %1350 = vmatpush1.bf16.xpose.msra.mxu0 0
        %1351 = vmatprep.subr.bf16.mxu0 0
        %1352 = vmatpush1.bf16.xpose.msra.mxu0 0
        %1353 = vmatprep.subr.bf16.mxu0 0
        %1354 = vmatpush1.bf16.xpose.msra.mxu0 0
        %1355 = vmatprep.subr.bf16.mxu0 0
        %1356 = vmatpush1.bf16.xpose.msra.mxu0 %v1339
        %1357 = vmatprep.subr.bf16.mxu0 0
        %1358 = vmatpush2.bf16.xpose.msra.mxu0 0
        %1359 = vmatprep.subr.bf16.mxu0 0
        %1360 = vmatpush2.bf16.xpose.msra.mxu0 0
        %1361 = vmatprep.subr.bf16.mxu0 0
        %1362 = vmatpush2.bf16.xpose.msra.mxu0 0
        %1363 = vmatprep.subr.bf16.mxu0 0
        %1364 = vmatpush2.bf16.xpose.msra.mxu0 0
        %1365 = vmatprep.subr.bf16.mxu0 0
        %1366 = vmatpush2.bf16.xpose.msra.mxu0 0
        %1367 = vmatprep.subr.bf16.mxu0 0
        %1368 = vmatpush2.bf16.xpose.msra.mxu0 0
        %1369 = vmatprep.subr.bf16.mxu0 0
        %1370 = vmatpush2.bf16.xpose.msra.mxu0 0
        %1371 = vmatprep.subr.bf16.mxu0 0
        %1372 = vmatpush2.bf16.xpose.msra.mxu0 0
        %1373 = vmatprep.mubr.bf16.mxu0 0
        %1374 = vmatmul.mubr.bf16.gmra.mxu0 %v1322
        %v1375 = vpop.f32.mrf.mxu0
        %v1376 = vadd.f32 %v1333, %v1375
        %v1377 = vpop.f32.mrf.mxu0
        %v1378 = vpop.f32.mrf.mxu0
        %v1379 = vpop.f32.mrf.mxu0
        %1380 = vdwg.mxu0
        %vm1381 = vcmask 124928
        %v1382 = vsel %vm1381, %v1376, -inf
        %1383 = vmax.xlane.f32.xlu0 %v1382
        %v1384 = vpop.xlane.xlu0 %1383
        %v1385 = vsub.f32 %v1376, %v1384
        %v1386 = vmul.f32 %v1385, 1.442695
        %v1387 = vpow.pop %v1386
        %v1388 = vsel %vm1381, %v1387, 0.0
        %1389 = vadd.xlane.f32.xlu0 %v1388
        %v1390 = vpop.xlane.xlu0 %1389
        %v1391 = vrcp.pop %v1390
        %v1392 = vmul.f32 %v1387, %v1391
        %v1393 = vpack.c.bf16 %v1392, %v1392
        %vm1394 = vcmask 130048
        %v1396 = vsel %vm1394, %v1393, 0
        %1398 = vmatprep.subr.bf16.mxu0 0
        %1399 = vmatpush1.bf16.msra.mxu0 0
        %1400 = vmatprep.subr.bf16.mxu0 0
        %1401 = vmatpush1.bf16.msra.mxu0 0
        %1402 = vmatprep.subr.bf16.mxu0 0
        %1403 = vmatpush1.bf16.msra.mxu0 0
        %1404 = vmatprep.subr.bf16.mxu0 0
        %1405 = vmatpush1.bf16.msra.mxu0 0
        %1406 = vmatprep.subr.bf16.mxu0 0
        %1407 = vmatpush1.bf16.msra.mxu0 0
        %1408 = vmatprep.subr.bf16.mxu0 0
        %1409 = vmatpush1.bf16.msra.mxu0 0
        %1410 = vmatprep.subr.bf16.mxu0 0
        %1411 = vmatpush1.bf16.msra.mxu0 0
        %1412 = vmatprep.subr.bf16.mxu0 0
        %1413 = vmatpush1.bf16.msra.mxu0 %v1339
        %1414 = vmatprep.subr.bf16.mxu0 0
        %1415 = vmatpush2.bf16.msra.mxu0 0
        %1416 = vmatprep.subr.bf16.mxu0 0
        %1417 = vmatpush2.bf16.msra.mxu0 0
        %1418 = vmatprep.subr.bf16.mxu0 0
        %1419 = vmatpush2.bf16.msra.mxu0 0
        %1420 = vmatprep.subr.bf16.mxu0 0
        %1421 = vmatpush2.bf16.msra.mxu0 0
        %1422 = vmatprep.subr.bf16.mxu0 0
        %1423 = vmatpush2.bf16.msra.mxu0 0
        %1424 = vmatprep.subr.bf16.mxu0 0
        %1425 = vmatpush2.bf16.msra.mxu0 0
        %1426 = vmatprep.subr.bf16.mxu0 0
        %1427 = vmatpush2.bf16.msra.mxu0 0
        %1428 = vmatprep.subr.bf16.mxu0 0
        %1429 = vmatpush2.bf16.msra.mxu0 0
        %1430 = vmatprep.mubr.bf16.mxu0 0
        %1431 = vmatmul.mubr.bf16.gmra.mxu0 %v1396
        %v1432 = vpop.f32.mrf.mxu0
        %v1433 = vadd.f32 0.0, %v1432
        %v1434 = vpop.f32.mrf.mxu0
        %v1435 = vpop.f32.mrf.mxu0
        %v1436 = vpop.f32.mrf.mxu0
        %1437 = vdwg.mxu0
        %v1438 = vld [vmem:[%s741] sm:$0xff]
        %v1439 = vld [vmem:[%s741 + $0x8] sm:$0xff]
        %1440 = vset.pattern.permute.xlu0 0
        %1441 = vperm.xlu0 %1440, %v1438
        %v1442 = vpop.permute.xlu0 %1441
        %1443 = vset.pattern.permute.xlu0 0
        %1444 = vperm.xlu0 %1443, %v1439
        %v1445 = vpop.permute.xlu0 %1444
        %vm1446 = vcmp.eq.s32.totalorder %v1442, %v1324
        %vm1447 = vcmp.eq.s32.totalorder %v1442, %v1325
        %vm1448 = vcmp.eq.s32.totalorder %v1445, %v1324
        %vm1449 = vcmp.eq.s32.totalorder %v1445, %v1325
        %v1450 = vsel %vm1446, 1, 0
        %v1451 = vsel %vm1447, 1, 0
        %v1452 = vsel %vm1448, 1, 0
        %v1453 = vsel %vm1449, 1, 0
        %v1454 = vcvt.s32.f32 %v1450
        %v1455 = vcvt.s32.f32 %v1451
        %v1456 = vcvt.s32.f32 %v1452
        %v1457 = vcvt.s32.f32 %v1453
        %v1458 = vpack.c.bf16 %v1456, %v1454
        %v1459 = vpack.c.bf16 %v1457, %v1455
        %1460 = vmatprep.subr.bf16.mxu0 0
        %1461 = vmatpush1.bf16.msra.mxu0 0
        %1462 = vmatprep.subr.bf16.mxu0 0
        %1463 = vmatpush1.bf16.msra.mxu0 0
        %1464 = vmatprep.subr.bf16.mxu0 0
        %1465 = vmatpush1.bf16.msra.mxu0 0
        %1466 = vmatprep.subr.bf16.mxu0 0
        %1467 = vmatpush1.bf16.msra.mxu0 0
        %1468 = vmatprep.subr.bf16.mxu0 0
        %1469 = vmatpush1.bf16.msra.mxu0 0
        %1470 = vmatprep.subr.bf16.mxu0 0
        %1471 = vmatpush1.bf16.msra.mxu0 0
        %1472 = vmatprep.subr.bf16.mxu0 0
        %1473 = vmatpush1.bf16.msra.mxu0 0
        %1474 = vmatprep.subr.bf16.mxu0 %v1459
        %1475 = vmatpush1.bf16.msra.mxu0 %v1458
        %1476 = vmatprep.subr.bf16.mxu0 0
        %1477 = vmatpush2.bf16.msra.mxu0 0
        %1478 = vmatprep.subr.bf16.mxu0 0
        %1479 = vmatpush2.bf16.msra.mxu0 0
        %1480 = vmatprep.subr.bf16.mxu0 0
        %1481 = vmatpush2.bf16.msra.mxu0 0
        %1482 = vmatprep.subr.bf16.mxu0 0
        %1483 = vmatpush2.bf16.msra.mxu0 0
        %1484 = vmatprep.subr.bf16.mxu0 0
        %1485 = vmatpush2.bf16.msra.mxu0 0
        %1486 = vmatprep.subr.bf16.mxu0 0
        %1487 = vmatpush2.bf16.msra.mxu0 0
        %1488 = vmatprep.subr.bf16.mxu0 0
        %1489 = vmatpush2.bf16.msra.mxu0 0
        %1490 = vmatprep.subr.bf16.mxu0 0
        %1491 = vmatpush2.bf16.msra.mxu0 0
        %1492 = vmatprep.mubr.bf16.mxu0 0
        %1493 = vmatmul.mubr.bf16.gmra.mxu0 %v1396
        %v1494 = vpop.f32.mrf.mxu0
        %v1495 = vadd.f32 0.0, %v1494
        %v1496 = vpop.f32.mrf.mxu0
        %v1497 = vadd.f32 0.0, %v1496
        %v1498 = vpop.f32.mrf.mxu0
        %v1499 = vpop.f32.mrf.mxu0
        %1500 = vdwg.mxu0
        %s1501 = scalar_lea.vmem %s733, 8
        %v1502 = vld [vmem:[%s1501] sm:$0xf]
        %v1503 = vld [vmem:[%s1501 + $0x4] sm:$0xf]
        %s1504 = scalar_lea.vmem [#allocation7], 1
        %v1505 = vld [vmem:[%s1504] sm:$0x1]
        %v1507 = vlaneseq
        %v1508 = vshrl.u32 %v1507, 7
        %v1509 = vsub.s32 0, %v1508
        %v1510 = vrot.slane %v1505, %v1509
        %v1513 = vshrl.u32 %v1322, 16
        %v1515 = vrot.slane %v1513, 1
        %v1516 = vshll.u32 %v1322, 16
        %v1518 = vrot.slane %v1516, 2
        %v1519 = vor.u32 %v1515, %v1518
        %v1523 = vunpack.c.l.b16 %v1502
        %v1524 = vunpack.c.l.b16 %v1503
        %v1525 = vpack.c.b16 %v1524, %v1523
        %1527 = vmatprep.subr.bf16.mxu0 0
        %1528 = vmatpush1.bf16.xpose.msra.mxu0 0
        %1529 = vmatprep.subr.bf16.mxu0 0
        %1530 = vmatpush1.bf16.xpose.msra.mxu0 0
        %1531 = vmatprep.subr.bf16.mxu0 0
        %1532 = vmatpush1.bf16.xpose.msra.mxu0 0
        %1533 = vmatprep.subr.bf16.mxu0 0
        %1534 = vmatpush1.bf16.xpose.msra.mxu0 0
        %1535 = vmatprep.subr.bf16.mxu0 0
        %1536 = vmatpush1.bf16.xpose.msra.mxu0 0
        %1537 = vmatprep.subr.bf16.mxu0 0
        %1538 = vmatpush1.bf16.xpose.msra.mxu0 0
        %1539 = vmatprep.subr.bf16.mxu0 0
        %1540 = vmatpush1.bf16.xpose.msra.mxu0 0
        %1541 = vmatprep.subr.bf16.mxu0 0
        %1542 = vmatpush1.bf16.xpose.msra.mxu0 %v1525
        %1543 = vmatprep.subr.bf16.mxu0 0
        %1544 = vmatpush2.bf16.xpose.msra.mxu0 0
        %1545 = vmatprep.subr.bf16.mxu0 0
        %1546 = vmatpush2.bf16.xpose.msra.mxu0 0
        %1547 = vmatprep.subr.bf16.mxu0 0
        %1548 = vmatpush2.bf16.xpose.msra.mxu0 0
        %1549 = vmatprep.subr.bf16.mxu0 0
        %1550 = vmatpush2.bf16.xpose.msra.mxu0 0
        %1551 = vmatprep.subr.bf16.mxu0 0
        %1552 = vmatpush2.bf16.xpose.msra.mxu0 0
        %1553 = vmatprep.subr.bf16.mxu0 0
        %1554 = vmatpush2.bf16.xpose.msra.mxu0 0
        %1555 = vmatprep.subr.bf16.mxu0 0
        %1556 = vmatpush2.bf16.xpose.msra.mxu0 0
        %1557 = vmatprep.subr.bf16.mxu0 0
        %1558 = vmatpush2.bf16.xpose.msra.mxu0 0
        %1559 = vmatprep.mubr.bf16.mxu0 0
        %1560 = vmatmul.mubr.bf16.gmra.mxu0 %v1519
        %v1561 = vpop.f32.mrf.mxu0
        %v1562 = vadd.f32 %v1510, %v1561
        %v1563 = vpop.f32.mrf.mxu0
        %v1564 = vpop.f32.mrf.mxu0
        %v1565 = vpop.f32.mrf.mxu0
        %1566 = vdwg.mxu0
        %v1567 = vsel %vm1381, %v1562, -inf
        %1568 = vmax.xlane.f32.xlu0 %v1567
        %v1569 = vpop.xlane.xlu0 %1568
        %v1570 = vsub.f32 %v1562, %v1569
        %v1571 = vmul.f32 %v1570, 1.442695
        %v1572 = vpow.pop %v1571
        %v1573 = vsel %vm1381, %v1572, 0.0
        %1574 = vadd.xlane.f32.xlu0 %v1573
        %v1575 = vpop.xlane.xlu0 %1574
        %v1576 = vrcp.pop %v1575
        %v1577 = vmul.f32 %v1572, %v1576
        %v1578 = vpack.c.bf16 %v1577, %v1577
        %v1580 = vsel %vm1394, %v1578, 0
        %1582 = vmatprep.subr.bf16.mxu0 0
        %1583 = vmatpush1.bf16.msra.mxu0 0
        %1584 = vmatprep.subr.bf16.mxu0 0
        %1585 = vmatpush1.bf16.msra.mxu0 0
        %1586 = vmatprep.subr.bf16.mxu0 0
        %1587 = vmatpush1.bf16.msra.mxu0 0
        %1588 = vmatprep.subr.bf16.mxu0 0
        %1589 = vmatpush1.bf16.msra.mxu0 0
        %1590 = vmatprep.subr.bf16.mxu0 0
        %1591 = vmatpush1.bf16.msra.mxu0 0
        %1592 = vmatprep.subr.bf16.mxu0 0
        %1593 = vmatpush1.bf16.msra.mxu0 0
        %1594 = vmatprep.subr.bf16.mxu0 0
        %1595 = vmatpush1.bf16.msra.mxu0 0
        %1596 = vmatprep.subr.bf16.mxu0 0
        %1597 = vmatpush1.bf16.msra.mxu0 %v1525
        %1598 = vmatprep.subr.bf16.mxu0 0
        %1599 = vmatpush2.bf16.msra.mxu0 0
        %1600 = vmatprep.subr.bf16.mxu0 0
        %1601 = vmatpush2.bf16.msra.mxu0 0
        %1602 = vmatprep.subr.bf16.mxu0 0
        %1603 = vmatpush2.bf16.msra.mxu0 0
        %1604 = vmatprep.subr.bf16.mxu0 0
        %1605 = vmatpush2.bf16.msra.mxu0 0
        %1606 = vmatprep.subr.bf16.mxu0 0
        %1607 = vmatpush2.bf16.msra.mxu0 0
        %1608 = vmatprep.subr.bf16.mxu0 0
        %1609 = vmatpush2.bf16.msra.mxu0 0
        %1610 = vmatprep.subr.bf16.mxu0 0
        %1611 = vmatpush2.bf16.msra.mxu0 0
        %1612 = vmatprep.subr.bf16.mxu0 0
        %1613 = vmatpush2.bf16.msra.mxu0 0
        %1614 = vmatprep.mubr.bf16.mxu0 0
        %1615 = vmatmul.mubr.bf16.gmra.mxu0 %v1580
        %v1616 = vpop.f32.mrf.mxu0
        %v1617 = vadd.f32 0.0, %v1616
        %v1618 = vpop.f32.mrf.mxu0
        %v1619 = vpop.f32.mrf.mxu0
        %v1620 = vpop.f32.mrf.mxu0
        %1621 = vdwg.mxu0
        %s1622 = scalar_lea.vmem %s741, 16
        %v1623 = vld [vmem:[%s1622] sm:$0xff]
        %v1624 = vld [vmem:[%s1622 + $0x8] sm:$0xff]
        %1625 = vset.pattern.permute.xlu0 0
        %1626 = vperm.xlu0 %1625, %v1623
        %v1627 = vpop.permute.xlu0 %1626
        %1628 = vset.pattern.permute.xlu0 0
        %1629 = vperm.xlu0 %1628, %v1624
        %v1630 = vpop.permute.xlu0 %1629
        %vm1631 = vcmp.eq.s32.totalorder %v1627, %v1324
        %vm1632 = vcmp.eq.s32.totalorder %v1627, %v1325
        %vm1633 = vcmp.eq.s32.totalorder %v1630, %v1324
        %vm1634 = vcmp.eq.s32.totalorder %v1630, %v1325
        %v1635 = vsel %vm1631, 1, 0
        %v1636 = vsel %vm1632, 1, 0
        %v1637 = vsel %vm1633, 1, 0
        %v1638 = vsel %vm1634, 1, 0
        %v1639 = vcvt.s32.f32 %v1635
        %v1640 = vcvt.s32.f32 %v1636
        %v1641 = vcvt.s32.f32 %v1637
        %v1642 = vcvt.s32.f32 %v1638
        %v1643 = vpack.c.bf16 %v1641, %v1639
        %v1644 = vpack.c.bf16 %v1642, %v1640
        %1645 = vmatprep.subr.bf16.mxu0 0
        %1646 = vmatpush1.bf16.msra.mxu0 0
        %1647 = vmatprep.subr.bf16.mxu0 0
        %1648 = vmatpush1.bf16.msra.mxu0 0
        %1649 = vmatprep.subr.bf16.mxu0 0
        %1650 = vmatpush1.bf16.msra.mxu0 0
        %1651 = vmatprep.subr.bf16.mxu0 0
        %1652 = vmatpush1.bf16.msra.mxu0 0
        %1653 = vmatprep.subr.bf16.mxu0 0
        %1654 = vmatpush1.bf16.msra.mxu0 0
        %1655 = vmatprep.subr.bf16.mxu0 0
        %1656 = vmatpush1.bf16.msra.mxu0 0
        %1657 = vmatprep.subr.bf16.mxu0 0
        %1658 = vmatpush1.bf16.msra.mxu0 0
        %1659 = vmatprep.subr.bf16.mxu0 %v1644
        %1660 = vmatpush1.bf16.msra.mxu0 %v1643
        %1661 = vmatprep.subr.bf16.mxu0 0
        %1662 = vmatpush2.bf16.msra.mxu0 0
        %1663 = vmatprep.subr.bf16.mxu0 0
        %1664 = vmatpush2.bf16.msra.mxu0 0
        %1665 = vmatprep.subr.bf16.mxu0 0
        %1666 = vmatpush2.bf16.msra.mxu0 0
        %1667 = vmatprep.subr.bf16.mxu0 0
        %1668 = vmatpush2.bf16.msra.mxu0 0
        %1669 = vmatprep.subr.bf16.mxu0 0
        %1670 = vmatpush2.bf16.msra.mxu0 0
        %1671 = vmatprep.subr.bf16.mxu0 0
        %1672 = vmatpush2.bf16.msra.mxu0 0
        %1673 = vmatprep.subr.bf16.mxu0 0
        %1674 = vmatpush2.bf16.msra.mxu0 0
        %1675 = vmatprep.subr.bf16.mxu0 0
        %1676 = vmatpush2.bf16.msra.mxu0 0
        %1677 = vmatprep.mubr.bf16.mxu0 0
        %1678 = vmatmul.mubr.bf16.gmra.mxu0 %v1580
        %v1679 = vpop.f32.mrf.mxu0
        %v1680 = vadd.f32 0.0, %v1679
        %v1681 = vpop.f32.mrf.mxu0
        %v1682 = vadd.f32 0.0, %v1681
        %v1683 = vpop.f32.mrf.mxu0
        %v1684 = vpop.f32.mrf.mxu0
        %1685 = vdwg.mxu0
        %v1687 = vrot.slane %v1617, 5
        %vm1689 = vcmask 1042432
        %v1690 = vsel %vm1689, %v1433, %v1687
        %v1693 = vrot.slane %v1680, 5
        %v1694 = vrot.slane %v1682, 5
        %v1697 = vsel %vm1689, %v1495, %v1693
        %v1698 = vsel %vm1689, %v1497, %v1694
        // Predicated region
        $region150: #{tpu_custom_call.1} parent=116 // pred_check
          %p1699 = pneg %p752
        $region151: #{tpu_custom_call.1} parent=116 // pred_check_branch
          %1701 = sbr.rel (%p1699) target = $region153
        $region152: #{tpu_custom_call.1} parent=116 // pred_region
          %v1702 = vld [vmem:[%s13] sm:$0xff]
          %v1703 = vld [vmem:[%s13 + $0x8] sm:$0xff]
          %v1704 = vld [vmem:[%s13 + $0x10] sm:$0xff]
          %v1705 = vld [vmem:[%s13 + $0x18] sm:$0xff]
          %v1706 = vld [vmem:[%s13 + $0x20] sm:$0xff]
          %v1707 = vld [vmem:[%s13 + $0x28] sm:$0xff]
          %v1708 = vld [vmem:[%s13 + $0x30] sm:$0xff]
          %v1709 = vld [vmem:[%s13 + $0x38] sm:$0xff]
          %v1710 = vld [vmem:[%s13 + $0x40] sm:$0xff]
          %v1711 = vld [vmem:[%s13 + $0x48] sm:$0xff]
          %v1712 = vld [vmem:[%s13 + $0x50] sm:$0xff]
          %v1713 = vld [vmem:[%s13 + $0x58] sm:$0xff]
          %v1714 = vld [vmem:[%s13 + $0x60] sm:$0xff]
          %v1715 = vld [vmem:[%s13 + $0x68] sm:$0xff]
          %v1716 = vld [vmem:[%s13 + $0x70] sm:$0xff]
          %v1717 = vld [vmem:[%s13 + $0x78] sm:$0xff]
          %v1718 = vld [vmem:[%s14] sm:$0x1]
          %v1720 = vlaneseq
          %v1721 = vshrl.u32 %v1720, 7
          %v1722 = vsub.s32 0, %v1721
          %v1723 = vrot.slane %v1718, %v1722
          %1725 = vmatprep.subr.mxu0 0.0
          %1726 = vmatpush1.msra.mxu0 %v1717
          %1727 = vmatprep.subr.mxu0 0.0
          %1728 = vmatpush1.msra.mxu0 %v1716
          %1729 = vmatprep.subr.mxu0 0.0
          %1730 = vmatpush1.msra.mxu0 %v1715
          %1731 = vmatprep.subr.mxu0 0.0
          %1732 = vmatpush1.msra.mxu0 %v1714
          %1733 = vmatprep.subr.mxu0 0.0
          %1734 = vmatpush1.msra.mxu0 %v1713
          %1735 = vmatprep.subr.mxu0 0.0
          %1736 = vmatpush1.msra.mxu0 %v1712
          %1737 = vmatprep.subr.mxu0 0.0
          %1738 = vmatpush1.msra.mxu0 %v1711
          %1739 = vmatprep.subr.mxu0 0.0
          %1740 = vmatpush1.msra.mxu0 %v1710
          %1741 = vmatprep.subr.mxu0 0.0
          %1742 = vmatpush1.msra.mxu0 %v1709
          %1743 = vmatprep.subr.mxu0 0.0
          %1744 = vmatpush1.msra.mxu0 %v1708
          %1745 = vmatprep.subr.mxu0 0.0
          %1746 = vmatpush1.msra.mxu0 %v1707
          %1747 = vmatprep.subr.mxu0 0.0
          %1748 = vmatpush1.msra.mxu0 %v1706
          %1749 = vmatprep.subr.mxu0 0.0
          %1750 = vmatpush1.msra.mxu0 %v1705
          %1751 = vmatprep.subr.mxu0 0.0
          %1752 = vmatpush1.msra.mxu0 %v1704
          %1753 = vmatprep.subr.mxu0 0.0
          %1754 = vmatpush1.msra.mxu0 %v1703
          %1755 = vmatprep.subr.mxu0 0.0
          %1756 = vmatpush1.msra.mxu0 %v1702
          %1757 = vmatprep.subr.mxu0 0.0
          %1758 = vmatpush2.msra.mxu0 0.0
          %1759 = vmatprep.subr.mxu0 0.0
          %1760 = vmatpush2.msra.mxu0 0.0
          %1761 = vmatprep.subr.mxu0 0.0
          %1762 = vmatpush2.msra.mxu0 0.0
          %1763 = vmatprep.subr.mxu0 0.0
          %1764 = vmatpush2.msra.mxu0 0.0
          %1765 = vmatprep.subr.mxu0 0.0
          %1766 = vmatpush2.msra.mxu0 0.0
          %1767 = vmatprep.subr.mxu0 0.0
          %1768 = vmatpush2.msra.mxu0 0.0
          %1769 = vmatprep.subr.mxu0 0.0
          %1770 = vmatpush2.msra.mxu0 0.0
          %1771 = vmatprep.subr.mxu0 0.0
          %1772 = vmatpush2.msra.mxu0 0.0
          %1773 = vmatprep.subr.mxu0 0.0
          %1774 = vmatpush2.msra.mxu0 0.0
          %1775 = vmatprep.subr.mxu0 0.0
          %1776 = vmatpush2.msra.mxu0 0.0
          %1777 = vmatprep.subr.mxu0 0.0
          %1778 = vmatpush2.msra.mxu0 0.0
          %1779 = vmatprep.subr.mxu0 0.0
          %1780 = vmatpush2.msra.mxu0 0.0
          %1781 = vmatprep.subr.mxu0 0.0
          %1782 = vmatpush2.msra.mxu0 0.0
          %1783 = vmatprep.subr.mxu0 0.0
          %1784 = vmatpush2.msra.mxu0 0.0
          %1785 = vmatprep.subr.mxu0 0.0
          %1786 = vmatpush2.msra.mxu0 0.0
          %1787 = vmatprep.subr.mxu0 0.0
          %1788 = vmatpush2.msra.mxu0 0.0
          %1789 = vmatprep.mubr.f32.mxu0 0.0
          %1790 = vmatmul.mubr.f32.gmra.mxu0 %v1690
          %v1791 = vpop.f32.mrf.mxu0
          %v1792 = vadd.f32 %v1723, %v1791
          %v1793 = vpop.f32.mrf.mxu0
          %1794 = vdwg.mxu0
          %vm1795 = vcmask 18432
          %1796 = vst.msk [vmem:[%s749] sm:$0x7] %vm1795, %v1792
          %s1797 = scalar_lea.vmem %s749, 4
          %vm1798 = vcmask 21507
          %1799 = vst.msk [vmem:[%s1797 - $0x3] sm:$0x38] %vm1798, %v1792
        $region153: #{tpu_custom_call.1} parent=116 // pred_fallthru
          _
        %v1800 = vld [vmem:[#allocation14] sm:$0xff]
        %v1801 = vld [vmem:[#allocation14 + $0x8] sm:$0xff]
        %v1802 = vld [vmem:[#allocation14 + $0x10] sm:$0xff]
        %v1803 = vld [vmem:[#allocation14 + $0x18] sm:$0xff]
        %v1804 = vld [vmem:[#allocation14 + $0x20] sm:$0xff]
        %v1805 = vld [vmem:[#allocation14 + $0x28] sm:$0xff]
        %v1806 = vld [vmem:[#allocation14 + $0x30] sm:$0xff]
        %v1807 = vld [vmem:[#allocation14 + $0x38] sm:$0xff]
        %v1808 = vld [vmem:[#allocation14 + $0x40] sm:$0xff]
        %v1809 = vld [vmem:[#allocation14 + $0x48] sm:$0xff]
        %v1810 = vld [vmem:[#allocation14 + $0x50] sm:$0xff]
        %v1811 = vld [vmem:[#allocation14 + $0x58] sm:$0xff]
        %v1812 = vld [vmem:[#allocation14 + $0x60] sm:$0xff]
        %v1813 = vld [vmem:[#allocation14 + $0x68] sm:$0xff]
        %v1814 = vld [vmem:[#allocation14 + $0x70] sm:$0xff]
        %v1815 = vld [vmem:[#allocation14 + $0x78] sm:$0xff]
        %v1832 = vunpack.c.l.b16 %v1800
        %v1833 = vunpack.c.h.b16 %v1800
        %v1834 = vunpack.c.l.b16 %v1801
        %v1835 = vunpack.c.h.b16 %v1801
        %v1836 = vunpack.c.l.b16 %v1802
        %v1837 = vunpack.c.h.b16 %v1802
        %v1838 = vunpack.c.l.b16 %v1803
        %v1839 = vunpack.c.h.b16 %v1803
        %v1840 = vunpack.c.l.b16 %v1804
        %v1841 = vunpack.c.h.b16 %v1804
        %v1842 = vunpack.c.l.b16 %v1805
        %v1843 = vunpack.c.h.b16 %v1805
        %v1844 = vunpack.c.l.b16 %v1806
        %v1845 = vunpack.c.h.b16 %v1806
        %v1846 = vunpack.c.l.b16 %v1807
        %v1847 = vunpack.c.h.b16 %v1807
        %v1848 = vunpack.c.l.b16 %v1808
        %v1849 = vunpack.c.h.b16 %v1808
        %v1850 = vunpack.c.l.b16 %v1809
        %v1851 = vunpack.c.h.b16 %v1809
        %v1852 = vunpack.c.l.b16 %v1810
        %v1853 = vunpack.c.h.b16 %v1810
        %v1854 = vunpack.c.l.b16 %v1811
        %v1855 = vunpack.c.h.b16 %v1811
        %v1856 = vunpack.c.l.b16 %v1812
        %v1857 = vunpack.c.h.b16 %v1812
        %v1858 = vunpack.c.l.b16 %v1813
        %v1859 = vunpack.c.h.b16 %v1813
        %v1860 = vunpack.c.l.b16 %v1814
        %v1861 = vunpack.c.h.b16 %v1814
        %v1862 = vunpack.c.l.b16 %v1815
        %v1863 = vunpack.c.h.b16 %v1815
        %v1864 = vpack.c.b16 %v1834, %v1832
        %v1865 = vpack.c.b16 %v1835, %v1833
        %v1866 = vpack.c.b16 %v1838, %v1836
        %v1867 = vpack.c.b16 %v1839, %v1837
        %v1868 = vpack.c.b16 %v1842, %v1840
        %v1869 = vpack.c.b16 %v1843, %v1841
        %v1870 = vpack.c.b16 %v1846, %v1844
        %v1871 = vpack.c.b16 %v1847, %v1845
        %v1872 = vpack.c.b16 %v1850, %v1848
        %v1873 = vpack.c.b16 %v1851, %v1849
        %v1874 = vpack.c.b16 %v1854, %v1852
        %v1875 = vpack.c.b16 %v1855, %v1853
        %v1876 = vpack.c.b16 %v1858, %v1856
        %v1877 = vpack.c.b16 %v1859, %v1857
        %v1878 = vpack.c.b16 %v1862, %v1860
        %v1879 = vpack.c.b16 %v1863, %v1861
        %1896 = vmatprep.subr.bf16.mxu0 %v1879
        %1897 = vmatpush1.bf16.msra.mxu0 %v1878
        %1898 = vmatprep.subr.bf16.mxu0 %v1877
        %1899 = vmatpush1.bf16.msra.mxu0 %v1876
        %1900 = vmatprep.subr.bf16.mxu0 %v1875
        %1901 = vmatpush1.bf16.msra.mxu0 %v1874
        %1902 = vmatprep.subr.bf16.mxu0 %v1873
        %1903 = vmatpush1.bf16.msra.mxu0 %v1872
        %1904 = vmatprep.subr.bf16.mxu0 %v1871
        %1905 = vmatpush1.bf16.msra.mxu0 %v1870
        %1906 = vmatprep.subr.bf16.mxu0 %v1869
        %1907 = vmatpush1.bf16.msra.mxu0 %v1868
        %1908 = vmatprep.subr.bf16.mxu0 %v1867
        %1909 = vmatpush1.bf16.msra.mxu0 %v1866
        %1910 = vmatprep.subr.bf16.mxu0 %v1865
        %1911 = vmatpush1.bf16.msra.mxu0 %v1864
        %1912 = vmatprep.subr.bf16.mxu0 0
        %1913 = vmatpush2.bf16.msra.mxu0 0
        %1914 = vmatprep.subr.bf16.mxu0 0
        %1915 = vmatpush2.bf16.msra.mxu0 0
        %1916 = vmatprep.subr.bf16.mxu0 0
        %1917 = vmatpush2.bf16.msra.mxu0 0
        %1918 = vmatprep.subr.bf16.mxu0 0
        %1919 = vmatpush2.bf16.msra.mxu0 0
        %1920 = vmatprep.subr.bf16.mxu0 0
        %1921 = vmatpush2.bf16.msra.mxu0 0
        %1922 = vmatprep.subr.bf16.mxu0 0
        %1923 = vmatpush2.bf16.msra.mxu0 0
        %1924 = vmatprep.subr.bf16.mxu0 0
        %1925 = vmatpush2.bf16.msra.mxu0 0
        %1926 = vmatprep.subr.bf16.mxu0 0
        %1927 = vmatpush2.bf16.msra.mxu0 0
        %1928 = vmatprep.mubr.bf16.mxu0 0
        %1929 = vmatmul.mubr.bf16.gmra.mxu0 %v1322
        %v1930 = vpop.f32.mrf.mxu0
        %v1931 = vadd.f32 0.0, %v1930
        %v1932 = vpop.f32.mrf.mxu0
        %v1933 = vadd.f32 0.0, %v1932
        %v1934 = vpop.f32.mrf.mxu0
        %v1935 = vpop.f32.mrf.mxu0
        %1936 = vdwg.mxu0
        %vm1937 = vcmask 1045504
        %v1938 = vsel %vm1937, %v1931, -inf
        %v1939 = vsel %vm1937, %v1933, -inf
        %v1940 = vmax.f32 %v1938, %v1939
        %1941 = vmax.xlane.f32.xlu0 %v1940
        %v1942 = vpop.xlane.xlu0 %1941
        %v1943 = vsub.f32 %v1931, %v1942
        %v1944 = vsub.f32 %v1933, %v1942
        %v1945 = vmul.f32 %v1943, 1.442695
        %v1946 = vpow.pop %v1945
        %v1947 = vmul.f32 %v1944, 1.442695
        %v1948 = vpow.pop %v1947
        %v1949 = vsel %vm1937, %v1946, 0.0
        %v1950 = vsel %vm1937, %v1948, 0.0
        %v1951 = vadd.f32 %v1949, %v1950
        %1952 = vadd.xlane.f32.xlu0 %v1951
        %v1953 = vpop.xlane.xlu0 %1952
        %v1954 = vrcp.pop %v1953
        %v1955 = vmul.f32 %v1946, %v1954
        %v1956 = vmul.f32 %v1948, %v1954
        %v1957 = vld [vmem:[%s11] sm:$0x7]
        %v1958 = vlaneseq
        %v1959 = vshrl.u32 %v1958, 7
        %v1960 = vsub.s32 0, %v1959
        %v1961 = vrot.slane %v1957, %v1960
        %v1962 = vmul.f32 %v1320, %v1961
        %v1963 = vsel %vm1937, %v1962, 0.0
        %1964 = vadd.xlane.f32.xlu0 %v1963
        %v1965 = vpop.xlane.xlu0 %1964
        %v1966 = vlaneseq
        %v1967 = vshrl.u32 %v1966, 7
        %v1968 = vsub.s32 1, %v1967
        %v1969 = vrot.slane %v1957, %v1968
        %v1970 = vmul.f32 %v1690, %v1969
        %v1971 = vsel %vm1937, %v1970, 0.0
        %1972 = vadd.xlane.f32.xlu0 %v1971
        %v1973 = vpop.xlane.xlu0 %1972
        %v1974 = vadd.f32 %v1965, %v1973
        %v1975 = vlaneseq
        %v1976 = vshrl.u32 %v1975, 7
        %v1977 = vsub.s32 2, %v1976
        %v1978 = vrot.slane %v1957, %v1977
        %v1979 = vmul.f32 %v780, %v1978
        %v1980 = vsel %vm1937, %v1979, 0.0
        %1981 = vadd.xlane.f32.xlu0 %v1980
        %v1982 = vpop.xlane.xlu0 %1981
        %v1983 = vadd.f32 %v1974, %v1982
        %s1984 = sld [smem:[#allocation4]]
        %v1985 = vstv %s1984
        %v1986 = vadd.f32 %v1983, %v1985
        %v1987 = vxor.u32 %v1986, 2147483648
        %v1988 = vmul.f32 %v1987, 1.442695
        %v1989 = vpow.pop %v1988
        %v1990 = vadd.f32 %v1989, 1.0
        %v1991 = vrcp.pop %v1990
        %v1992 = vmul.f32 1.0, %v1991
        %v1993 = vsub.f32 1.0, %v1992
        %v1994 = vmul.f32 %v1993, %v1697
        %v1995 = vmul.f32 %v1993, %v1698
        %v1996 = vmul.f32 %v1992, %v1955
        %v1997 = vmul.f32 %v1992, %v1956
        %v1998 = vadd.f32 %v1994, %v1996
        %v1999 = vadd.f32 %v1995, %v1997
        %v2002 = vcombine.low %v1998, %v1999
        %2004 = vst [vmem:[%s719] sm:$0x77] %v2002
        %v2005 = vcombine.high %v1998, %v1999
        %vm2006 = vcmask 1040384
        %vm2007 = vcmask 1044484
        %vm2008 = vmor %vm2006, %vm2007
        %v2009 = vrot.slane %v2002, 7
        %v2010 = vrot.slane %v2009, 4
        %v2011 = vrot.slane %v2005, 7
        %v2012 = vsel %vm2008, %v2010, %v2011
        %s2014 = scalar_lea.vmem %s719, 8 [#allocation16]
        %2015 = vst [vmem:[%s2014] sm:$0x77] %v2012
        %s2016 = sadd.s32 %s38, 1
        %p2017 = scmp.lt.s32.totalorder %s2016, 4
        // Predicated region
        $region154: #{tpu_custom_call.1} parent=116 // pred_check
          %p2018 = pneg %p2017
        $region155: #{tpu_custom_call.1} parent=116 // pred_check_branch
          %2020 = sbr.rel (%p2018) target = $region157
        $region156: #{tpu_custom_call.1} parent=116 // pred_region
          %v2021 = vsel %vm1937, %v1998, -inf
          %v2022 = vsel %vm1937, %v1999, -inf
          %v2023 = vmax.f32 %v2021, %v2022
          %2024 = vmax.xlane.f32.xlu0 %v2023
          %v2025 = vpop.xlane.xlu0 %2024
          %vm2026 = vcmp.eq.f32.partialorder %v1998, %v2025
          %vm2027 = vcmp.eq.f32.partialorder %v1999, %v2025
          %v2028 = vsel %vm2026, %v1324, 256
          %v2029 = vsel %vm2027, %v1325, 256
          %v2030 = vsel %vm1937, %v2028, 2147483647
          %v2031 = vsel %vm1937, %v2029, 2147483647
          %vm2032 = vcmp.lt.s32.totalorder %v2030, %v2031
          %v2033 = vsel %vm2032, %v2030, %v2031
          %v2034 = vand.u32 %v2033, 65535
          %v2035 = vshra.s32 %v2033, 16
          %v2036 = vcvt.s32.f32 %v2034
          %v2037 = vcvt.s32.f32 %v2035
          %2038 = vmin.xlane.f32.xlu0 %v2037
          %v2039 = vpop.xlane.xlu0 %2038
          %vm2040 = vcmp.eq.f32.partialorder %v2037, %v2039
          %v2041 = vsel %vm2040, %v2036, inf
          %2042 = vmin.xlane.f32.xlu0 %v2041
          %v2043 = vpop.xlane.xlu0 %2042
          %v2044 = vcvt.f32.s32 %v2043
          %v2045 = vcvt.f32.s32 %v2039
          %v2046 = vshll.u32 %v2045, 16
          %v2047 = vadd.s32 %v2046, %v2044
          %vm2048 = vcmp.eq.s32.totalorder %v2047, %v1324
          %vm2049 = vcmp.eq.s32.totalorder %v2047, %v1325
          %v2050 = vsel %vm2048, 1, 0
          %v2051 = vsel %vm2049, 1, 0
          %v2052 = vcvt.s32.f32 %v2050
          %v2053 = vcvt.s32.f32 %v2051
          %v2054 = vpack.c.bf16 %v2052, %v2052
          %v2055 = vpack.c.bf16 %v2053, %v2053
          %v2056 = vld [vmem:[#allocation14] sm:$0xff]
          %v2057 = vld [vmem:[#allocation14 + $0x8] sm:$0xff]
          %v2058 = vld [vmem:[#allocation14 + $0x10] sm:$0xff]
          %v2059 = vld [vmem:[#allocation14 + $0x18] sm:$0xff]
          %v2060 = vld [vmem:[#allocation14 + $0x20] sm:$0xff]
          %v2061 = vld [vmem:[#allocation14 + $0x28] sm:$0xff]
          %v2062 = vld [vmem:[#allocation14 + $0x30] sm:$0xff]
          %v2063 = vld [vmem:[#allocation14 + $0x38] sm:$0xff]
          %v2064 = vld [vmem:[#allocation14 + $0x40] sm:$0xff]
          %v2065 = vld [vmem:[#allocation14 + $0x48] sm:$0xff]
          %v2066 = vld [vmem:[#allocation14 + $0x50] sm:$0xff]
          %v2067 = vld [vmem:[#allocation14 + $0x58] sm:$0xff]
          %v2068 = vld [vmem:[#allocation14 + $0x60] sm:$0xff]
          %v2069 = vld [vmem:[#allocation14 + $0x68] sm:$0xff]
          %v2070 = vld [vmem:[#allocation14 + $0x70] sm:$0xff]
          %v2071 = vld [vmem:[#allocation14 + $0x78] sm:$0xff]
          %v2088 = vunpack.c.l.b16 %v2056
          %v2089 = vunpack.c.h.b16 %v2056
          %v2090 = vunpack.c.l.b16 %v2057
          %v2091 = vunpack.c.h.b16 %v2057
          %v2092 = vunpack.c.l.b16 %v2058
          %v2093 = vunpack.c.h.b16 %v2058
          %v2094 = vunpack.c.l.b16 %v2059
          %v2095 = vunpack.c.h.b16 %v2059
          %v2096 = vunpack.c.l.b16 %v2060
          %v2097 = vunpack.c.h.b16 %v2060
          %v2098 = vunpack.c.l.b16 %v2061
          %v2099 = vunpack.c.h.b16 %v2061
          %v2100 = vunpack.c.l.b16 %v2062
          %v2101 = vunpack.c.h.b16 %v2062
          %v2102 = vunpack.c.l.b16 %v2063
          %v2103 = vunpack.c.h.b16 %v2063
          %v2104 = vunpack.c.l.b16 %v2064
          %v2105 = vunpack.c.h.b16 %v2064
          %v2106 = vunpack.c.l.b16 %v2065
          %v2107 = vunpack.c.h.b16 %v2065
          %v2108 = vunpack.c.l.b16 %v2066
          %v2109 = vunpack.c.h.b16 %v2066
          %v2110 = vunpack.c.l.b16 %v2067
          %v2111 = vunpack.c.h.b16 %v2067
          %v2112 = vunpack.c.l.b16 %v2068
          %v2113 = vunpack.c.h.b16 %v2068
          %v2114 = vunpack.c.l.b16 %v2069
          %v2115 = vunpack.c.h.b16 %v2069
          %v2116 = vunpack.c.l.b16 %v2070
          %v2117 = vunpack.c.h.b16 %v2070
          %v2118 = vunpack.c.l.b16 %v2071
          %v2119 = vunpack.c.h.b16 %v2071
          %v2120 = vpack.c.b16 %v2090, %v2088
          %v2121 = vpack.c.b16 %v2091, %v2089
          %v2122 = vpack.c.b16 %v2094, %v2092
          %v2123 = vpack.c.b16 %v2095, %v2093
          %v2124 = vpack.c.b16 %v2098, %v2096
          %v2125 = vpack.c.b16 %v2099, %v2097
          %v2126 = vpack.c.b16 %v2102, %v2100
          %v2127 = vpack.c.b16 %v2103, %v2101
          %v2128 = vpack.c.b16 %v2106, %v2104
          %v2129 = vpack.c.b16 %v2107, %v2105
          %v2130 = vpack.c.b16 %v2110, %v2108
          %v2131 = vpack.c.b16 %v2111, %v2109
          %v2132 = vpack.c.b16 %v2114, %v2112
          %v2133 = vpack.c.b16 %v2115, %v2113
          %v2134 = vpack.c.b16 %v2118, %v2116
          %v2135 = vpack.c.b16 %v2119, %v2117
          %2152 = vmatprep.subr.bf16.mxu0 %v2135
          %2153 = vmatpush1.bf16.xpose.msra.mxu0 %v2134
          %2154 = vmatprep.subr.bf16.mxu0 %v2133
          %2155 = vmatpush1.bf16.xpose.msra.mxu0 %v2132
          %2156 = vmatprep.subr.bf16.mxu0 %v2131
          %2157 = vmatpush1.bf16.xpose.msra.mxu0 %v2130
          %2158 = vmatprep.subr.bf16.mxu0 %v2129
          %2159 = vmatpush1.bf16.xpose.msra.mxu0 %v2128
          %2160 = vmatprep.subr.bf16.mxu0 %v2127
          %2161 = vmatpush1.bf16.xpose.msra.mxu0 %v2126
          %2162 = vmatprep.subr.bf16.mxu0 %v2125
          %2163 = vmatpush1.bf16.xpose.msra.mxu0 %v2124
          %2164 = vmatprep.subr.bf16.mxu0 %v2123
          %2165 = vmatpush1.bf16.xpose.msra.mxu0 %v2122
          %2166 = vmatprep.subr.bf16.mxu0 %v2121
          %2167 = vmatpush1.bf16.xpose.msra.mxu0 %v2120
          %2168 = vmatprep.subr.bf16.mxu0 0
          %2169 = vmatpush2.bf16.xpose.msra.mxu0 0
          %2170 = vmatprep.subr.bf16.mxu0 0
          %2171 = vmatpush2.bf16.xpose.msra.mxu0 0
          %2172 = vmatprep.subr.bf16.mxu0 0
          %2173 = vmatpush2.bf16.xpose.msra.mxu0 0
          %2174 = vmatprep.subr.bf16.mxu0 0
          %2175 = vmatpush2.bf16.xpose.msra.mxu0 0
          %2176 = vmatprep.subr.bf16.mxu0 0
          %2177 = vmatpush2.bf16.xpose.msra.mxu0 0
          %2178 = vmatprep.subr.bf16.mxu0 0
          %2179 = vmatpush2.bf16.xpose.msra.mxu0 0
          %2180 = vmatprep.subr.bf16.mxu0 0
          %2181 = vmatpush2.bf16.xpose.msra.mxu0 0
          %2182 = vmatprep.subr.bf16.mxu0 0
          %2183 = vmatpush2.bf16.xpose.msra.mxu0 0
          %2184 = vmatprep.mubr.bf16.mxu0 %v2055
          %2185 = vmatmul.mubr.bf16.gmra.mxu0 %v2054
          %v2186 = vpop.f32.mrf.mxu0
          %v2187 = vadd.f32 0.0, %v2186
          %v2188 = vpop.f32.mrf.mxu0
          %v2189 = vpop.f32.mrf.mxu0
          %v2190 = vpop.f32.mrf.mxu0
          %2191 = vdwg.mxu0
          %2192 = vst [vmem:[#allocation3] sm:$0x3f] %v2187
        $region157: #{tpu_custom_call.1} parent=116 // pred_fallthru
          _
        %s2193 = sand.u32 %s397, 1
        %s2194 = sand.u32 %s397, 1
        %s2195 = smul.addr %s2194, 16
        %s2196 = scalar_lea.vmem [#allocation16], %s2195
        %s2197 = smul.u32 2, %s37
        %p2198 = scmp.lt.s32.totalorder %s2197, 1
        %s2199 = scalar_select %p2198, %s2197, 1
        %s2200 = smul.addr %s2199, 4
        %s2201 = scalar_lea.vmem %s16, %s2200
        // Predicated region
        $region158: #{tpu_custom_call.1} parent=116 // pred_check
          %p2202 = pneg %p407
        $region159: #{tpu_custom_call.1} parent=116 // pred_check_branch
          %2204 = sbr.rel (%p2202) target = $region161
        $region160: #{tpu_custom_call.1} parent=116 // pred_region
          %s2205 = smul.u32 2, %s37
          %s2206 = smul.addr %s38, 2
          %s2207 = smul.addr %s2205, 8
          %s2208 = sadd.s32 %s2206, %s2207
          %s2209 = smul.addr %s2208, 4
          %s2210 = scalar_lea.vmem %s15, %s2209
          // Predicated region
          $region162: #{tpu_custom_call.1} parent=160 // pred_check
            _
          $region163: #{tpu_custom_call.1} parent=160 // pred_check_branch
            %2212 = sbr.rel (0) target = $region165
          $region164: #{tpu_custom_call.1} parent=160 // pred_region
            // Predicated region
            $region166: #{tpu_custom_call.1} parent=164 // pred_check
              _
            $region167: #{tpu_custom_call.1} parent=164 // pred_check_branch
              %2214 = sbr.rel (0) target = $region169
            $region168: #{tpu_custom_call.1} parent=164 // pred_region
              // Predicated region
              $region181: #{tpu_custom_call.1} parent=168 // pred_check
                _
              $region182: #{tpu_custom_call.1} parent=168 // pred_check_branch
                %2232 = sbr.rel (0) target = $region184
              $region183: #{tpu_custom_call.1} parent=168 // pred_region
                loop: start=0, step=1, limit=1
                $region185: #{tpu_custom_call.1} parent=183 // loop_pre_header
                  _
                $region186: #{tpu_custom_call.1} parent=183 // loop_header
                  %s2234 = sphi 0, %s2238
                  %p2235 = scmp.ge.s32.totalorder %s2234, 1
                  %s2239 = sphi %s2196, %s2196
                  %s2240 = sphi %s2210, %s2210
                $region187: #{tpu_custom_call.1} parent=183 // loop_header_branch
                  %2237 = sbr.rel (%p2235) target = $region191
                $region188: #{tpu_custom_call.1} parent=183 // loop_body
                  %v2241 = vld [vmem:[%s2239] sm:$0xff]
                  %2242 = vst [vmem:[%s2240] sm:$0xff] %v2241
                  %v2243 = vld [vmem:[%s2239 + $0x8] sm:$0xff]
                  %2244 = vst [vmem:[%s2240 + $0x20] sm:$0xff] %v2243
                $region189: #{tpu_custom_call.1} parent=183 // loop_footer
                  %s2238 = sadd.s32 1, %s2234
                $region190: #{tpu_custom_call.1} parent=183 // loop_footer_branch
                  %2233 = sbr.rel target = $region186
                $region191: #{tpu_custom_call.1} parent=183 // loop_exit
                  _
              $region184: #{tpu_custom_call.1} parent=168 // pred_fallthru
                _
              // Predicated region
              $region192: #{tpu_custom_call.1} parent=168 // pred_check
                _
              $region193: #{tpu_custom_call.1} parent=168 // pred_check_branch
                %2246 = sbr.rel target = $region195
              $region194: #{tpu_custom_call.1} parent=168 // pred_region
                _
              $region195: #{tpu_custom_call.1} parent=168 // pred_fallthru
                _
            $region169: #{tpu_custom_call.1} parent=164 // pred_fallthru
              _
            // Predicated region
            $region170: #{tpu_custom_call.1} parent=164 // pred_check
              _
            $region171: #{tpu_custom_call.1} parent=164 // pred_check_branch
              %2216 = sbr.rel target = $region173
            $region172: #{tpu_custom_call.1} parent=164 // pred_region
              %s2218 = ssub.s32 256, 1
              loop: start=0, step=1, limit=1
              $region174: #{tpu_custom_call.1} parent=172 // loop_pre_header
                _
              $region175: #{tpu_custom_call.1} parent=172 // loop_header
                %s2220 = sphi 0, %s2224
                %p2221 = scmp.ge.s32.totalorder %s2220, 1
                %s2225 = sphi %s2196, %s2196
                %s2226 = sphi %s2210, %s2210
              $region176: #{tpu_custom_call.1} parent=172 // loop_header_branch
                %2223 = sbr.rel (%p2221) target = $region180
              $region177: #{tpu_custom_call.1} parent=172 // loop_body
                %v2227 = vld [vmem:[%s2225] sm:%s2218]
                %2228 = vst [vmem:[%s2226] sm:%s2218] %v2227
                %v2229 = vld [vmem:[%s2225 + $0x8] sm:%s2218]
                %2230 = vst [vmem:[%s2226 + $0x20] sm:%s2218] %v2229
              $region178: #{tpu_custom_call.1} parent=172 // loop_footer
                %s2224 = sadd.s32 1, %s2220
              $region179: #{tpu_custom_call.1} parent=172 // loop_footer_branch
                %2219 = sbr.rel target = $region175
              $region180: #{tpu_custom_call.1} parent=172 // loop_exit
                _
            $region173: #{tpu_custom_call.1} parent=164 // pred_fallthru
              _
          $region165: #{tpu_custom_call.1} parent=160 // pred_fallthru
            _
          %2247 = vnop
        $region161: #{tpu_custom_call.1} parent=116 // pred_fallthru
          _
        // Predicated region
        $region196: #{tpu_custom_call.1} parent=116 // pred_check
          %p2248 = pneg %p433
        $region197: #{tpu_custom_call.1} parent=116 // pred_check_branch
          %2250 = sbr.rel (%p2248) target = $region199
        $region198: #{tpu_custom_call.1} parent=116 // pred_region
          %s2251 = smul.u32 2, %s37
        $region199: #{tpu_custom_call.1} parent=116 // pred_fallthru
          _
        // Predicated region
        $region200: #{tpu_custom_call.1} parent=116 // pred_check
          %p2252 = pneg %p433
        $region201: #{tpu_custom_call.1} parent=116 // pred_check_branch
          %2254 = sbr.rel (%p2252) target = $region203
        $region202: #{tpu_custom_call.1} parent=116 // pred_region
          %s2255 = smul.u32 2, %s37
          %p2256 = scmp.lt.s32.totalorder %s2255, 1
          %s2257 = scalar_select %p2256, %s2255, 1
          %s2258 = smul.addr %s2257, 4
          %s2259 = scalar_lea.vmem %s16, %s2258
        $region203: #{tpu_custom_call.1} parent=116 // pred_fallthru
          _
      $region117: #{tpu_custom_call.1} parent=5 // pred_fallthru
        _
      %p2260 = scmp.le.s32.totalorder 2, %s28
      // Predicated region
      $region204: #{tpu_custom_call.1} parent=5 // pred_check
        %p2261 = pneg %p2260
      $region205: #{tpu_custom_call.1} parent=5 // pred_check_branch
        %2263 = sbr.rel (%p2261) target = $region207
      $region206: #{tpu_custom_call.1} parent=5 // pred_region
        %s2264 = ssub.s32 %s28, 2
        // Predicated region
        $region208: #{tpu_custom_call.1} parent=206 // pred_check
          %p2265 = pneg %p413
        $region209: #{tpu_custom_call.1} parent=206 // pred_check_branch
          %2267 = sbr.rel (%p2265) target = $region211
        $region210: #{tpu_custom_call.1} parent=206 // pred_region
          %s2268 = sand.u32 %s398, 1
          %s2269 = sand.u32 %s398, 1
          %s2270 = smul.addr %s2269, 16
          %s2271 = scalar_lea.vmem [#allocation16], %s2270
        $region211: #{tpu_custom_call.1} parent=206 // pred_fallthru
          _
      $region207: #{tpu_custom_call.1} parent=5 // pred_fallthru
        _
    $region6: #{tpu_custom_call.1} parent=1 // loop_footer
      %s32 = sadd.s32 1, %s28
    $region7: #{tpu_custom_call.1} parent=1 // loop_footer_branch
      %27 = sbr.rel target = $region3
    $region8: #{tpu_custom_call.1} parent=1 // loop_exit
      _
    %2272 = vsyncpa [#allocation6], 1
    %s2273 = scalar_lea.sflag [#allocation6], 1
    %2274 = vsyncpa %s2273, 1
    %2275 = vsyncpa [#allocation8], 1
    %2276 = vsyncpa [#allocation12], 1
    %2277 = vsyncpa [#allocation15], 1

// kernel: tpu_custom_call.1
$region0: #{tpu_custom_call.1}
  #allocation0 [shape = 'u32[]', space=smem, size = 0x4, offset = 0x4, fixed_abs, tag = 'smem constant byte address 0x4 - core index']
  #allocation1 [shape = 'u32[144,128]{1,0:T(1,128)}', space=vmem, size = 0x12000, scoped, tag = 'internal scratch']
  #allocation2 [shape = 'f32[6,128]{1,0:T(8,128)}', space=vmem, size = 0x1000, scoped, tag = 'scratch operand']
  #allocation3 [shape = 'f32[6,128]{1,0:T(8,128)}', space=vmem, size = 0x1000, scoped, tag = 'scratch operand']
  #allocation4 [shape = 'f32[1,1]{1,0:T(1,128)S(6)}', space=smem, size = 0x200, scoped, tag = 'scoped memory for tpu_custom_call.1']
  %s0 = inlined_call_operand.vmem [shape: f32[3,128], index: 0, kind: input, shape index: {}]
  %s1 = inlined_call_operand.hbm [shape: f32[2,1,128], index: 1, kind: input, shape index: {}]
  %s2 = inlined_call_operand.vmem [shape: bf16[2,16,128], index: 2, kind: input, shape index: {}]
  %s3 = inlined_call_operand.hbm [shape: f32[2,1,16], index: 3, kind: input, shape index: {}]
  %s4 = inlined_call_operand.vmem [shape: s32[2,16,1], index: 4, kind: input, shape index: {}]
  %s5 = inlined_call_operand.vmem [shape: s32[2,4,3,1], index: 5, kind: input, shape index: {}]
  %s6 = inlined_call_operand.vmem [shape: bf16[128,384], index: 6, kind: input, shape index: {}]
  %s7 = inlined_call_operand.hbm [shape: bf16[128,384], index: 7, kind: input, shape index: {}]
  %s8 = inlined_call_operand.hbm [shape: f32[1,384], index: 8, kind: input, shape index: {}]
  %s9 = inlined_call_operand.hbm [shape: f32[1,384], index: 9, kind: input, shape index: {}]
  %s10 = inlined_call_operand.hbm [shape: bf16[128,256], index: 10, kind: input, shape index: {}]
  %s11 = inlined_call_operand.vmem [shape: f32[3,128], index: 11, kind: input, shape index: {}]
  %s12 = inlined_call_operand.<no memory space> [shape: f32[1,1], index: 12, kind: input, shape index: {}]
  %s13 = inlined_call_operand.vmem [shape: f32[128,3], index: 13, kind: input, shape index: {}]
  %s14 = inlined_call_operand.vmem [shape: f32[1,3], index: 14, kind: input, shape index: {}]
  %s15 = inlined_call_operand.vmem [shape: f32[2,4,3,256], index: 15, kind: output, shape index: {0}]
  %s16 = inlined_call_operand.vmem [shape: f32[2,3,3], index: 16, kind: output, shape index: {1}]
  %17 = xla_tuple %s15, %s16
  %s18 = sld [smem:[#allocation0]]
  $region212: #{tpu_custom_call.1} parent=0
    _
  %s20 = ssub.s32 1, %s18
  %s21 = scalar_select 0, %s20, %s18
  %22 = sst [smem:[#allocation4]] %s12
  $region1: #{tpu_custom_call.1} parent=0
    #allocation5 [shape = 'u8[1024]{0}', space=vmem, size = 0x400, scoped, tag = 'input window, operand 1, single buffered']
    #allocation6 [shape = 's32[2]{0}', space=sflag, size = 0x8, scoped, tag = 'scoped memory for tpu_custom_call.1']
    #allocation7 [shape = 'u8[1024]{0}', space=vmem, size = 0x400, scoped, tag = 'input window, operand 3, single buffered']
    #allocation8 [shape = 's32[1]{0}', space=sflag, size = 0x4, scoped, tag = 'scoped memory for tpu_custom_call.1']
    #allocation9 [shape = 'u8[8192]{0}', space=vmem, size = 0x2000, scoped, tag = 'input window, operand 5']
    #allocation10 [shape = 'u8[98304]{0}', space=vmem, size = 0x18000, scoped, tag = 'input window, operand 7, single buffered']
    #allocation11 [shape = 'u8[1536]{0}', space=vmem, size = 0x800, scoped, tag = 'input window, operand 8, single buffered']
    #allocation12 [shape = 's32[1]{0}', space=sflag, size = 0x4, scoped, tag = 'scoped memory for tpu_custom_call.1']
    #allocation13 [shape = 'u8[1536]{0}', space=vmem, size = 0x800, scoped, tag = 'input window, operand 9, single buffered']
    #allocation14 [shape = 'u8[65536]{0}', space=vmem, size = 0x10000, scoped, tag = 'input window, operand 10, single buffered']
    #allocation15 [shape = 's32[1]{0}', space=sflag, size = 0x4, scoped, tag = 'scoped memory for tpu_custom_call.1']
    #allocation16 [shape = 'u8[16384]{0}', space=vmem, size = 0x4000, scoped, tag = 'output window, operand 0']
    %23 = vsyncpa [#allocation6], 0
    %24 = vsyncpa [#allocation8], 0
    %25 = vsyncpa [#allocation12], 0
    %26 = vsyncpa [#allocation15], 0
    loop: start=0, step=1, limit=6
    $region2: #{tpu_custom_call.1} parent=1 // loop_pre_header
      _
    $region3: #{tpu_custom_call.1} parent=1 // loop_header
      %s28 = sphi 0, %s32
      %p29 = scmp.ge.s32.totalorder %s28, 6
      %s35 = sphi 0, %s47
      %s36 = sphi 0, %s43
      %s37 = sphi 0, %s35
      %s38 = sphi 0, %s36
      %s39 = sphi 0, %s37
      %s40 = sphi 0, %s38
      %s48 = sphi 0, %s48
      %s50 = sphi 0, %s48
      %s51 = sphi 0, %s50
      %s65 = sphi 0, %s51
      %s71 = sphi 0, %s73
      %s74 = sphi 0, %s71
      %s75 = sphi 0, %s74
      %s91 = sphi 0, %s75
      %s97 = sphi 0, %s99
      %s100 = sphi 0, %s97
      %s101 = sphi 0, %s100
      %s117 = sphi 0, %s101
      %s123 = sphi 0, %s125
      %s126 = sphi 0, %s123
      %s127 = sphi 0, %s126
      %s143 = sphi 0, %s127
      %s149 = sphi 0, %s151
      %s152 = sphi 0, %s149
      %s153 = sphi 0, %s152
      %s169 = sphi 0, %s153
      %s177 = sphi 0, %s179
      %s180 = sphi 0, %s177
      %s181 = sphi 0, %s180
      %s197 = sphi 0, %s181
      %s201 = sphi 0, %s201
      %s203 = sphi 0, %s201
      %s204 = sphi 0, %s203
      %s218 = sphi 0, %s204
      %s222 = sphi 0, %s222
      %s224 = sphi 0, %s222
      %s225 = sphi 0, %s224
      %s239 = sphi 0, %s225
      %s243 = sphi 0, %s243
      %s245 = sphi 0, %s243
      %s246 = sphi 0, %s245
      %s260 = sphi 0, %s246
      %s264 = sphi 0, %s264
      %s266 = sphi 0, %s264
      %s267 = sphi 0, %s266
      %s281 = sphi 0, %s267
      %s285 = sphi 0, %s285
      %s287 = sphi 0, %s285
      %s288 = sphi 0, %s287
      %s302 = sphi 0, %s288
      %s306 = sphi 0, %s306
      %s308 = sphi 0, %s306
      %s309 = sphi 0, %s308
      %s323 = sphi 0, %s309
      %s327 = sphi 0, %s327
      %s329 = sphi 0, %s327
      %s330 = sphi 0, %s329
      %s344 = sphi 0, %s330
      %s348 = sphi 0, %s348
      %s350 = sphi 0, %s348
      %s351 = sphi 0, %s350
      %s365 = sphi 0, %s351
      %s369 = sphi 0, %s369
      %s371 = sphi 0, %s369
      %s372 = sphi 0, %s371
      %s386 = sphi 0, %s372
      %s394 = sphi 0, %s396
      %s397 = sphi 0, %s394
      %s398 = sphi 0, %s397
      %s414 = sphi 0, %s398
      %s420 = sphi 0, %s422
      %s423 = sphi 0, %s420
      %s424 = sphi 0, %s423
      %s440 = sphi 0, %s424
    $region4: #{tpu_custom_call.1} parent=1 // loop_header_branch
      %31 = sbr.rel (%p29) target = $region8
    $region5: #{tpu_custom_call.1} parent=1 // loop_body
      %s33 = ssub.s32 %s28, 1
      %s34 = ssub.s32 %s28, 2
      %s41 = sadd.s32 1, %s36
      %p42 = scmp.ge.s32.totalorder %s41, 4
      %s43 = scalar_select %p42, 0, %s41
      %s44 = sadd.s32 1, %s35
      %s45 = scalar_select %p42, %s44, %s35
      %p46 = scmp.ge.s32.totalorder %s45, 1
      %s47 = scalar_select %p46, 0, %s45
      %s49 = sadd.s32 %s48, 1
      %p52 = scmp.eq.s32.totalorder %s28, 3
      %p53 = scmp.ne.s32.totalorder %s48, %s50
      %p54 = scmp.eq.s32.totalorder %s28, 0
      %p55 = por %p53, %p54
      %p56 = scmp.ne.s32.totalorder %s48, %s50
      %p57 = scmp.eq.s32.totalorder %s33, 3
      %p58 = por %p56, %p57
      %p59 = scmp.ne.s32.totalorder %s50, %s51
      %p60 = scmp.eq.s32.totalorder %s33, 0
      %p61 = por %p59, %p60
      %p62 = scmp.ne.s32.totalorder %s50, %s51
      %p63 = scmp.eq.s32.totalorder %s34, 3
      %p64 = por %p62, %p63
      %p66 = scmp.ne.s32.totalorder %s51, %s65
      %p67 = scmp.eq.s32.totalorder %s34, 0
      %p68 = por %p66, %p67
      %s69 = ssub.s32 %s35, %s47
      %p70 = scmp.eq.s32.totalorder %s69, 0
      %s72 = sadd.s32 %s71, 1
      %s73 = scalar_select %p70, %s71, %s72
      %p76 = pneg %p70
      %p77 = scmp.eq.s32.totalorder %s28, 3
      %p78 = por %p76, %p77
      %p79 = scmp.ne.s32.totalorder %s71, %s74
      %p80 = scmp.eq.s32.totalorder %s28, 0
      %p81 = por %p79, %p80
      %p82 = scmp.ne.s32.totalorder %s71, %s74
      %p83 = scmp.eq.s32.totalorder %s33, 3
      %p84 = por %p82, %p83
      %p85 = scmp.ne.s32.totalorder %s74, %s75
      %p86 = scmp.eq.s32.totalorder %s33, 0
      %p87 = por %p85, %p86
      %p88 = scmp.ne.s32.totalorder %s74, %s75
      %p89 = scmp.eq.s32.totalorder %s34, 3
      %p90 = por %p88, %p89
      %p92 = scmp.ne.s32.totalorder %s75, %s91
      %p93 = scmp.eq.s32.totalorder %s34, 0
      %p94 = por %p92, %p93
      %s95 = ssub.s32 %s35, %s47
      %p96 = scmp.eq.s32.totalorder %s95, 0
      %s98 = sadd.s32 %s97, 1
      %s99 = scalar_select %p96, %s97, %s98
      %p102 = pneg %p96
      %p103 = scmp.eq.s32.totalorder %s28, 3
      %p104 = por %p102, %p103
      %p105 = scmp.ne.s32.totalorder %s97, %s100
      %p106 = scmp.eq.s32.totalorder %s28, 0
      %p107 = por %p105, %p106
      %p108 = scmp.ne.s32.totalorder %s97, %s100
      %p109 = scmp.eq.s32.totalorder %s33, 3
      %p110 = por %p108, %p109
      %p111 = scmp.ne.s32.totalorder %s100, %s101
      %p112 = scmp.eq.s32.totalorder %s33, 0
      %p113 = por %p111, %p112
      %p114 = scmp.ne.s32.totalorder %s100, %s101
      %p115 = scmp.eq.s32.totalorder %s34, 3
      %p116 = por %p114, %p115
      %p118 = scmp.ne.s32.totalorder %s101, %s117
      %p119 = scmp.eq.s32.totalorder %s34, 0
      %p120 = por %p118, %p119
      %s121 = ssub.s32 %s35, %s47
      %p122 = scmp.eq.s32.totalorder %s121, 0
      %s124 = sadd.s32 %s123, 1
      %s125 = scalar_select %p122, %s123, %s124
      %p128 = pneg %p122
      %p129 = scmp.eq.s32.totalorder %s28, 3
      %p130 = por %p128, %p129
      %p131 = scmp.ne.s32.totalorder %s123, %s126
      %p132 = scmp.eq.s32.totalorder %s28, 0
      %p133 = por %p131, %p132
      %p134 = scmp.ne.s32.totalorder %s123, %s126
      %p135 = scmp.eq.s32.totalorder %s33, 3
      %p136 = por %p134, %p135
      %p137 = scmp.ne.s32.totalorder %s126, %s127
      %p138 = scmp.eq.s32.totalorder %s33, 0
      %p139 = por %p137, %p138
      %p140 = scmp.ne.s32.totalorder %s126, %s127
      %p141 = scmp.eq.s32.totalorder %s34, 3
      %p142 = por %p140, %p141
      %p144 = scmp.ne.s32.totalorder %s127, %s143
      %p145 = scmp.eq.s32.totalorder %s34, 0
      %p146 = por %p144, %p145
      %s147 = ssub.s32 %s35, %s47
      %p148 = scmp.eq.s32.totalorder %s147, 0
      %s150 = sadd.s32 %s149, 1
      %s151 = scalar_select %p148, %s149, %s150
      %p154 = pneg %p148
      %p155 = scmp.eq.s32.totalorder %s28, 3
      %p156 = por %p154, %p155
      %p157 = scmp.ne.s32.totalorder %s149, %s152
      %p158 = scmp.eq.s32.totalorder %s28, 0
      %p159 = por %p157, %p158
      %p160 = scmp.ne.s32.totalorder %s149, %s152
      %p161 = scmp.eq.s32.totalorder %s33, 3
      %p162 = por %p160, %p161
      %p163 = scmp.ne.s32.totalorder %s152, %s153
      %p164 = scmp.eq.s32.totalorder %s33, 0
      %p165 = por %p163, %p164
      %p166 = scmp.ne.s32.totalorder %s152, %s153
      %p167 = scmp.eq.s32.totalorder %s34, 3
      %p168 = por %p166, %p167
      %p170 = scmp.ne.s32.totalorder %s153, %s169
      %p171 = scmp.eq.s32.totalorder %s34, 0
      %p172 = por %p170, %p171
      %s173 = ssub.s32 %s35, %s47
      %s174 = ssub.s32 %s36, %s43
      %s175 = sor.u32 %s173, %s174
      %p176 = scmp.eq.s32.totalorder %s175, 0
      %s178 = sadd.s32 %s177, 1
      %s179 = scalar_select %p176, %s177, %s178
      %p182 = pneg %p176
      %p183 = scmp.eq.s32.totalorder %s28, 3
      %p184 = por %p182, %p183
      %p185 = scmp.ne.s32.totalorder %s177, %s180
      %p186 = scmp.eq.s32.totalorder %s28, 0
      %p187 = por %p185, %p186
      %p188 = scmp.ne.s32.totalorder %s177, %s180
      %p189 = scmp.eq.s32.totalorder %s33, 3
      %p190 = por %p188, %p189
      %p191 = scmp.ne.s32.totalorder %s180, %s181
      %p192 = scmp.eq.s32.totalorder %s33, 0
      %p193 = por %p191, %p192
      %p194 = scmp.ne.s32.totalorder %s180, %s181
      %p195 = scmp.eq.s32.totalorder %s34, 3
      %p196 = por %p194, %p195
      %p198 = scmp.ne.s32.totalorder %s181, %s197
      %p199 = scmp.eq.s32.totalorder %s34, 0
      %p200 = por %p198, %p199
      %s202 = sadd.s32 %s201, 1
      %p205 = scmp.eq.s32.totalorder %s28, 3
      %p206 = scmp.ne.s32.totalorder %s201, %s203
      %p207 = scmp.eq.s32.totalorder %s28, 0
      %p208 = por %p206, %p207
      %p209 = scmp.ne.s32.totalorder %s201, %s203
      %p210 = scmp.eq.s32.totalorder %s33, 3
      %p211 = por %p209, %p210
      %p212 = scmp.ne.s32.totalorder %s203, %s204
      %p213 = scmp.eq.s32.totalorder %s33, 0
      %p214 = por %p212, %p213
      %p215 = scmp.ne.s32.totalorder %s203, %s204
      %p216 = scmp.eq.s32.totalorder %s34, 3
      %p217 = por %p215, %p216
      %p219 = scmp.ne.s32.totalorder %s204, %s218
      %p220 = scmp.eq.s32.totalorder %s34, 0
      %p221 = por %p219, %p220
      %s223 = sadd.s32 %s222, 1
      %p226 = scmp.eq.s32.totalorder %s28, 3
      %p227 = scmp.ne.s32.totalorder %s222, %s224
      %p228 = scmp.eq.s32.totalorder %s28, 0
      %p229 = por %p227, %p228
      %p230 = scmp.ne.s32.totalorder %s222, %s224
      %p231 = scmp.eq.s32.totalorder %s33, 3
      %p232 = por %p230, %p231
      %p233 = scmp.ne.s32.totalorder %s224, %s225
      %p234 = scmp.eq.s32.totalorder %s33, 0
      %p235 = por %p233, %p234
      %p236 = scmp.ne.s32.totalorder %s224, %s225
      %p237 = scmp.eq.s32.totalorder %s34, 3
      %p238 = por %p236, %p237
      %p240 = scmp.ne.s32.totalorder %s225, %s239
      %p241 = scmp.eq.s32.totalorder %s34, 0
      %p242 = por %p240, %p241
      %s244 = sadd.s32 %s243, 1
      %p247 = scmp.eq.s32.totalorder %s28, 3
      %p248 = scmp.ne.s32.totalorder %s243, %s245
      %p249 = scmp.eq.s32.totalorder %s28, 0
      %p250 = por %p248, %p249
      %p251 = scmp.ne.s32.totalorder %s243, %s245
      %p252 = scmp.eq.s32.totalorder %s33, 3
      %p253 = por %p251, %p252
      %p254 = scmp.ne.s32.totalorder %s245, %s246
      %p255 = scmp.eq.s32.totalorder %s33, 0
      %p256 = por %p254, %p255
      %p257 = scmp.ne.s32.totalorder %s245, %s246
      %p258 = scmp.eq.s32.totalorder %s34, 3
      %p259 = por %p257, %p258
      %p261 = scmp.ne.s32.totalorder %s246, %s260
      %p262 = scmp.eq.s32.totalorder %s34, 0
      %p263 = por %p261, %p262
      %s265 = sadd.s32 %s264, 1
      %p268 = scmp.eq.s32.totalorder %s28, 3
      %p269 = scmp.ne.s32.totalorder %s264, %s266
      %p270 = scmp.eq.s32.totalorder %s28, 0
      %p271 = por %p269, %p270
      %p272 = scmp.ne.s32.totalorder %s264, %s266
      %p273 = scmp.eq.s32.totalorder %s33, 3
      %p274 = por %p272, %p273
      %p275 = scmp.ne.s32.totalorder %s266, %s267
      %p276 = scmp.eq.s32.totalorder %s33, 0
      %p277 = por %p275, %p276
      %p278 = scmp.ne.s32.totalorder %s266, %s267
      %p279 = scmp.eq.s32.totalorder %s34, 3
      %p280 = por %p278, %p279
      %p282 = scmp.ne.s32.totalorder %s267, %s281
      %p283 = scmp.eq.s32.totalorder %s34, 0
      %p284 = por %p282, %p283
      %s286 = sadd.s32 %s285, 1
      %p289 = scmp.eq.s32.totalorder %s28, 3
      %p290 = scmp.ne.s32.totalorder %s285, %s287
      %p291 = scmp.eq.s32.totalorder %s28, 0
      %p292 = por %p290, %p291
      %p293 = scmp.ne.s32.totalorder %s285, %s287
      %p294 = scmp.eq.s32.totalorder %s33, 3
      %p295 = por %p293, %p294
      %p296 = scmp.ne.s32.totalorder %s287, %s288
      %p297 = scmp.eq.s32.totalorder %s33, 0
      %p298 = por %p296, %p297
      %p299 = scmp.ne.s32.totalorder %s287, %s288
      %p300 = scmp.eq.s32.totalorder %s34, 3
      %p301 = por %p299, %p300
      %p303 = scmp.ne.s32.totalorder %s288, %s302
      %p304 = scmp.eq.s32.totalorder %s34, 0
      %p305 = por %p303, %p304
      %s307 = sadd.s32 %s306, 1
      %p310 = scmp.eq.s32.totalorder %s28, 3
      %p311 = scmp.ne.s32.totalorder %s306, %s308
      %p312 = scmp.eq.s32.totalorder %s28, 0
      %p313 = por %p311, %p312
      %p314 = scmp.ne.s32.totalorder %s306, %s308
      %p315 = scmp.eq.s32.totalorder %s33, 3
      %p316 = por %p314, %p315
      %p317 = scmp.ne.s32.totalorder %s308, %s309
      %p318 = scmp.eq.s32.totalorder %s33, 0
      %p319 = por %p317, %p318
      %p320 = scmp.ne.s32.totalorder %s308, %s309
      %p321 = scmp.eq.s32.totalorder %s34, 3
      %p322 = por %p320, %p321
      %p324 = scmp.ne.s32.totalorder %s309, %s323
      %p325 = scmp.eq.s32.totalorder %s34, 0
      %p326 = por %p324, %p325
      %s328 = sadd.s32 %s327, 1
      %p331 = scmp.eq.s32.totalorder %s28, 3
      %p332 = scmp.ne.s32.totalorder %s327, %s329
      %p333 = scmp.eq.s32.totalorder %s28, 0
      %p334 = por %p332, %p333
      %p335 = scmp.ne.s32.totalorder %s327, %s329
      %p336 = scmp.eq.s32.totalorder %s33, 3
      %p337 = por %p335, %p336
      %p338 = scmp.ne.s32.totalorder %s329, %s330
      %p339 = scmp.eq.s32.totalorder %s33, 0
      %p340 = por %p338, %p339
      %p341 = scmp.ne.s32.totalorder %s329, %s330
      %p342 = scmp.eq.s32.totalorder %s34, 3
      %p343 = por %p341, %p342
      %p345 = scmp.ne.s32.totalorder %s330, %s344
      %p346 = scmp.eq.s32.totalorder %s34, 0
      %p347 = por %p345, %p346
      %s349 = sadd.s32 %s348, 1
      %p352 = scmp.eq.s32.totalorder %s28, 3
      %p353 = scmp.ne.s32.totalorder %s348, %s350
      %p354 = scmp.eq.s32.totalorder %s28, 0
      %p355 = por %p353, %p354
      %p356 = scmp.ne.s32.totalorder %s348, %s350
      %p357 = scmp.eq.s32.totalorder %s33, 3
      %p358 = por %p356, %p357
      %p359 = scmp.ne.s32.totalorder %s350, %s351
      %p360 = scmp.eq.s32.totalorder %s33, 0
      %p361 = por %p359, %p360
      %p362 = scmp.ne.s32.totalorder %s350, %s351
      %p363 = scmp.eq.s32.totalorder %s34, 3
      %p364 = por %p362, %p363
      %p366 = scmp.ne.s32.totalorder %s351, %s365
      %p367 = scmp.eq.s32.totalorder %s34, 0
      %p368 = por %p366, %p367
      %s370 = sadd.s32 %s369, 1
      %p373 = scmp.eq.s32.totalorder %s28, 3
      %p374 = scmp.ne.s32.totalorder %s369, %s371
      %p375 = scmp.eq.s32.totalorder %s28, 0
      %p376 = por %p374, %p375
      %p377 = scmp.ne.s32.totalorder %s369, %s371
      %p378 = scmp.eq.s32.totalorder %s33, 3
      %p379 = por %p377, %p378
      %p380 = scmp.ne.s32.totalorder %s371, %s372
      %p381 = scmp.eq.s32.totalorder %s33, 0
      %p382 = por %p380, %p381
      %p383 = scmp.ne.s32.totalorder %s371, %s372
      %p384 = scmp.eq.s32.totalorder %s34, 3
      %p385 = por %p383, %p384
      %p387 = scmp.ne.s32.totalorder %s372, %s386
      %p388 = scmp.eq.s32.totalorder %s34, 0
      %p389 = por %p387, %p388
      %s390 = ssub.s32 %s35, %s47
      %s391 = ssub.s32 %s36, %s43
      %s392 = sor.u32 %s390, %s391
      %p393 = scmp.eq.s32.totalorder %s392, 0
      %s395 = sadd.s32 %s394, 1
      %s396 = scalar_select %p393, %s394, %s395
      %p399 = pneg %p393
      %p400 = scmp.eq.s32.totalorder %s28, 3
      %p401 = por %p399, %p400
      %p402 = scmp.ne.s32.totalorder %s394, %s397
      %p403 = scmp.eq.s32.totalorder %s28, 0
      %p404 = por %p402, %p403
      %p405 = scmp.ne.s32.totalorder %s394, %s397
      %p406 = scmp.eq.s32.totalorder %s33, 3
      %p407 = por %p405, %p406
      %p408 = scmp.ne.s32.totalorder %s397, %s398
      %p409 = scmp.eq.s32.totalorder %s33, 0
      %p410 = por %p408, %p409
      %p411 = scmp.ne.s32.totalorder %s397, %s398
      %p412 = scmp.eq.s32.totalorder %s34, 3
      %p413 = por %p411, %p412
      %p415 = scmp.ne.s32.totalorder %s398, %s414
      %p416 = scmp.eq.s32.totalorder %s34, 0
      %p417 = por %p415, %p416
      %s418 = ssub.s32 %s35, %s47
      %p419 = scmp.eq.s32.totalorder %s418, 0
      %s421 = sadd.s32 %s420, 1
      %s422 = scalar_select %p419, %s420, %s421
      %p425 = pneg %p419
      %p426 = scmp.eq.s32.totalorder %s28, 3
      %p427 = por %p425, %p426
      %p428 = scmp.ne.s32.totalorder %s420, %s423
      %p429 = scmp.eq.s32.totalorder %s28, 0
      %p430 = por %p428, %p429
      %p431 = scmp.ne.s32.totalorder %s420, %s423
      %p432 = scmp.eq.s32.totalorder %s33, 3
      %p433 = por %p431, %p432
      %p434 = scmp.ne.s32.totalorder %s423, %s424
      %p435 = scmp.eq.s32.totalorder %s33, 0
      %p436 = por %p434, %p435
      %p437 = scmp.ne.s32.totalorder %s423, %s424
      %p438 = scmp.eq.s32.totalorder %s34, 3
      %p439 = por %p437, %p438
      %p441 = scmp.ne.s32.totalorder %s424, %s440
      %p442 = scmp.eq.s32.totalorder %s34, 0
      %p443 = por %p441, %p442
      %p444 = scmp.le.s32.totalorder 1, %s28
      %p445 = scmp.lt.s32.totalorder %s28, 5
      %p446 = pnand %p444, %p445
      %p447 = pneg %p446
      // Predicated region
      $region9: #{tpu_custom_call.1} parent=5 // pred_check
        _
      $region10: #{tpu_custom_call.1} parent=5 // pred_check_branch
        %449 = sbr.rel (%p446) target = $region12
      $region11: #{tpu_custom_call.1} parent=5 // pred_region
        %s450 = ssub.s32 %s28, 1
        // Predicated region
        $region13: #{tpu_custom_call.1} parent=11 // pred_check
          %p451 = pneg %p61
        $region14: #{tpu_custom_call.1} parent=11 // pred_check_branch
          %453 = sbr.rel (%p451) target = $region16
        $region15: #{tpu_custom_call.1} parent=11 // pred_region
          _
        $region16: #{tpu_custom_call.1} parent=11 // pred_fallthru
          _
        // Predicated region
        $region17: #{tpu_custom_call.1} parent=11 // pred_check
          %p454 = pneg %p87
        $region18: #{tpu_custom_call.1} parent=11 // pred_check_branch
          %456 = sbr.rel (%p454) target = $region20
        $region19: #{tpu_custom_call.1} parent=11 // pred_region
          %s457 = smul.u32 2, %s37
          %s459 = ssub.s32 32, 32
          %460 = vsyncadd [#allocation6], %s459
          %s461 = smul.addr %s457, 16
          %s462 = scalar_lea.hbm %s1, %s461
          %s463 = sshll.u32 [#allocation5], 4
          %s464 = int_to_ptr.vmem [resolvable:$true] %s463
          %469 = dma.hbm_to_vmem [thread:$0]  %s462, 32, %s464, [#allocation6], 16, 16, 1
        $region20: #{tpu_custom_call.1} parent=11 // pred_fallthru
          _
        // Predicated region
        $region21: #{tpu_custom_call.1} parent=11 // pred_check
          %p470 = pneg %p113
        $region22: #{tpu_custom_call.1} parent=11 // pred_check_branch
          %472 = sbr.rel (%p470) target = $region24
        $region23: #{tpu_custom_call.1} parent=11 // pred_region
          %s473 = smul.u32 2, %s37
          %p474 = scmp.lt.s32.totalorder %s473, 1
          %s475 = scalar_select %p474, %s473, 1
          %s476 = smul.addr %s475, 2
          %s477 = smul.addr %s476, 4
          %s478 = scalar_lea.vmem %s2, %s477
          %s479 = smul.u32 2, %s37
        $region24: #{tpu_custom_call.1} parent=11 // pred_fallthru
          _
        // Predicated region
        $region25: #{tpu_custom_call.1} parent=11 // pred_check
          %p480 = pneg %p139
        $region26: #{tpu_custom_call.1} parent=11 // pred_check_branch
          %482 = sbr.rel (%p480) target = $region28
        $region27: #{tpu_custom_call.1} parent=11 // pred_region
          %s483 = smul.u32 2, %s37
          %s485 = ssub.s32 32, 32
          %486 = vsyncadd [#allocation8], %s485
          %s487 = smul.addr %s483, 16
          %s488 = scalar_lea.hbm %s3, %s487
          %s489 = sshll.u32 [#allocation7], 4
          %s490 = int_to_ptr.vmem [resolvable:$true] %s489
          %495 = dma.hbm_to_vmem [thread:$0]  %s488, 32, %s490, [#allocation8], 16, 16, 1
        $region28: #{tpu_custom_call.1} parent=11 // pred_fallthru
          _
        // Predicated region
        $region29: #{tpu_custom_call.1} parent=11 // pred_check
          %p496 = pneg %p165
        $region30: #{tpu_custom_call.1} parent=11 // pred_check_branch
          %498 = sbr.rel (%p496) target = $region32
        $region31: #{tpu_custom_call.1} parent=11 // pred_region
          %s499 = smul.u32 2, %s37
          %p500 = scmp.lt.s32.totalorder %s499, 1
          %s501 = scalar_select %p500, %s499, 1
          %s502 = smul.addr %s501, 2
          %s503 = smul.addr %s502, 8
          %s504 = scalar_lea.vmem %s4, %s503
          %s505 = smul.u32 2, %s37
        $region32: #{tpu_custom_call.1} parent=11 // pred_fallthru
          _
        // Predicated region
        $region33: #{tpu_custom_call.1} parent=11 // pred_check
          %p506 = pneg %p214
        $region34: #{tpu_custom_call.1} parent=11 // pred_check_branch
          %508 = sbr.rel (%p506) target = $region36
        $region35: #{tpu_custom_call.1} parent=11 // pred_region
          _
        $region36: #{tpu_custom_call.1} parent=11 // pred_fallthru
          _
        // Predicated region
        $region37: #{tpu_custom_call.1} parent=11 // pred_check
          %p509 = pneg %p235
        $region38: #{tpu_custom_call.1} parent=11 // pred_check_branch
          %511 = sbr.rel (%p509) target = $region40
        $region39: #{tpu_custom_call.1} parent=11 // pred_region
          %s513 = ssub.s32 3072, 3072
          %514 = vsyncadd [#allocation8], %s513
          %s515 = sshll.u32 [#allocation10], 4
          %s516 = int_to_ptr.vmem [resolvable:$true] %s515
          %521 = dma.hbm_to_vmem [thread:$0]  %s7, 3072, %s516, [#allocation8], 192, 192, 12
        $region40: #{tpu_custom_call.1} parent=11 // pred_fallthru
          _
        // Predicated region
        $region41: #{tpu_custom_call.1} parent=11 // pred_check
          %p522 = pneg %p256
        $region42: #{tpu_custom_call.1} parent=11 // pred_check_branch
          %524 = sbr.rel (%p522) target = $region44
        $region43: #{tpu_custom_call.1} parent=11 // pred_region
          %s526 = ssub.s32 48, 48
          %527 = vsyncadd [#allocation12], %s526
          %s529 = sshll.u32 [#allocation11], 4
          %s530 = int_to_ptr.vmem [resolvable:$true] %s529
          %532 = dma.hbm_to_vmem [thread:$0]  %s8, 48, %s530, [#allocation12]
        $region44: #{tpu_custom_call.1} parent=11 // pred_fallthru
          _
        // Predicated region
        $region45: #{tpu_custom_call.1} parent=11 // pred_check
          %p533 = pneg %p277
        $region46: #{tpu_custom_call.1} parent=11 // pred_check_branch
          %535 = sbr.rel (%p533) target = $region48
        $region47: #{tpu_custom_call.1} parent=11 // pred_region
          %s537 = ssub.s32 48, 48
          %538 = vsyncadd [#allocation12], %s537
          %s540 = sshll.u32 [#allocation13], 4
          %s541 = int_to_ptr.vmem [resolvable:$true] %s540
          %543 = dma.hbm_to_vmem [thread:$0]  %s9, 48, %s541, [#allocation12]
        $region48: #{tpu_custom_call.1} parent=11 // pred_fallthru
          _
        // Predicated region
        $region49: #{tpu_custom_call.1} parent=11 // pred_check
          %p544 = pneg %p298
        $region50: #{tpu_custom_call.1} parent=11 // pred_check_branch
          %546 = sbr.rel (%p544) target = $region52
        $region51: #{tpu_custom_call.1} parent=11 // pred_region
          %s548 = ssub.s32 2048, 2048
          %549 = vsyncadd [#allocation15], %s548
          %s550 = sshll.u32 [#allocation14], 4
          %s551 = int_to_ptr.vmem [resolvable:$true] %s550
          %556 = dma.hbm_to_vmem [thread:$0]  %s10, 2048, %s551, [#allocation15], 128, 128, 8
        $region52: #{tpu_custom_call.1} parent=11 // pred_fallthru
          _
        // Predicated region
        $region53: #{tpu_custom_call.1} parent=11 // pred_check
          %p557 = pneg %p319
        $region54: #{tpu_custom_call.1} parent=11 // pred_check_branch
          %559 = sbr.rel (%p557) target = $region56
        $region55: #{tpu_custom_call.1} parent=11 // pred_region
          _
        $region56: #{tpu_custom_call.1} parent=11 // pred_fallthru
          _
        // Predicated region
        $region57: #{tpu_custom_call.1} parent=11 // pred_check
          %p560 = pneg %p340
        $region58: #{tpu_custom_call.1} parent=11 // pred_check_branch
          %562 = sbr.rel (%p560) target = $region60
        $region59: #{tpu_custom_call.1} parent=11 // pred_region
          _
        $region60: #{tpu_custom_call.1} parent=11 // pred_fallthru
          _
        // Predicated region
        $region61: #{tpu_custom_call.1} parent=11 // pred_check
          %p563 = pneg %p361
        $region62: #{tpu_custom_call.1} parent=11 // pred_check_branch
          %565 = sbr.rel (%p563) target = $region64
        $region63: #{tpu_custom_call.1} parent=11 // pred_region
          _
        $region64: #{tpu_custom_call.1} parent=11 // pred_fallthru
          _
        // Predicated region
        $region65: #{tpu_custom_call.1} parent=11 // pred_check
          %p566 = pneg %p382
        $region66: #{tpu_custom_call.1} parent=11 // pred_check_branch
          %568 = sbr.rel (%p566) target = $region68
        $region67: #{tpu_custom_call.1} parent=11 // pred_region
          _
        $region68: #{tpu_custom_call.1} parent=11 // pred_fallthru
          _
      $region12: #{tpu_custom_call.1} parent=5 // pred_fallthru
        _
      %p569 = scmp.lt.s32.totalorder %s28, 4
      // Predicated region
      $region69: #{tpu_custom_call.1} parent=5 // pred_check
        %p570 = pneg %p569
      $region70: #{tpu_custom_call.1} parent=5 // pred_check_branch
        %572 = sbr.rel (%p570) target = $region72
      $region71: #{tpu_custom_call.1} parent=5 // pred_region
        // Predicated region
        $region73: #{tpu_custom_call.1} parent=71 // pred_check
          %p573 = pneg %p187
        $region74: #{tpu_custom_call.1} parent=71 // pred_check_branch
          %575 = sbr.rel (%p573) target = $region76
        $region75: #{tpu_custom_call.1} parent=71 // pred_region
          %s576 = sand.u32 %s177, 1
          %s577 = sand.u32 %s177, 1
          %s578 = smul.addr %s577, 8
          %s579 = scalar_lea.vmem [#allocation9], %s578
          %s580 = smul.u32 2, %s35
          %s581 = smul.addr %s580, 4
          %s582 = sadd.s32 %s36, %s581
          %s583 = smul.addr %s582, 4
          %s584 = scalar_lea.vmem %s5, %s583
          // Predicated region
          $region77: #{tpu_custom_call.1} parent=75 // pred_check
            _
          $region78: #{tpu_custom_call.1} parent=75 // pred_check_branch
            %586 = sbr.rel (0) target = $region80
          $region79: #{tpu_custom_call.1} parent=75 // pred_region
            // Predicated region
            $region81: #{tpu_custom_call.1} parent=79 // pred_check
              _
            $region82: #{tpu_custom_call.1} parent=79 // pred_check_branch
              %588 = sbr.rel target = $region84
            $region83: #{tpu_custom_call.1} parent=79 // pred_region
              // Predicated region
              $region96: #{tpu_custom_call.1} parent=83 // pred_check
                _
              $region97: #{tpu_custom_call.1} parent=83 // pred_check_branch
                %606 = sbr.rel (0) target = $region99
              $region98: #{tpu_custom_call.1} parent=83 // pred_region
                loop: start=0, step=1, limit=1
                $region100: #{tpu_custom_call.1} parent=98 // loop_pre_header
                  _
                $region101: #{tpu_custom_call.1} parent=98 // loop_header
                  %s608 = sphi 0, %s612
                  %p609 = scmp.ge.s32.totalorder %s608, 1
                  %s613 = sphi %s584, %s584
                  %s614 = sphi %s579, %s579
                $region102: #{tpu_custom_call.1} parent=98 // loop_header_branch
                  %611 = sbr.rel (%p609) target = $region106
                $region103: #{tpu_custom_call.1} parent=98 // loop_body
                  _
                $region104: #{tpu_custom_call.1} parent=98 // loop_footer
                  %s612 = sadd.s32 1, %s608
                $region105: #{tpu_custom_call.1} parent=98 // loop_footer_branch
                  %607 = sbr.rel target = $region101
                $region106: #{tpu_custom_call.1} parent=98 // loop_exit
                  _
                %s616 = ssub.s32 16, 1
                loop: start=0, step=1, limit=1
                $region107: #{tpu_custom_call.1} parent=98 // loop_pre_header
                  _
                $region108: #{tpu_custom_call.1} parent=98 // loop_header
                  %s618 = sphi 0, %s622
                  %p619 = scmp.ge.s32.totalorder %s618, 1
                  %s623 = sphi %s584, %s584
                  %s624 = sphi %s579, %s579
                $region109: #{tpu_custom_call.1} parent=98 // loop_header_branch
                  %621 = sbr.rel (%p619) target = $region113
                $region110: #{tpu_custom_call.1} parent=98 // loop_body
                  %v625 = vld [vmem:[%s623] sm:%s616]
                  %626 = vst [vmem:[%s624] sm:%s616] %v625
                  %v627 = vld [vmem:[%s623 + $0x10] sm:%s616]
                  %628 = vst [vmem:[%s624 + $0x4] sm:%s616] %v627
                $region111: #{tpu_custom_call.1} parent=98 // loop_footer
                  %s622 = sadd.s32 1, %s618
                $region112: #{tpu_custom_call.1} parent=98 // loop_footer_branch
                  %617 = sbr.rel target = $region108
                $region113: #{tpu_custom_call.1} parent=98 // loop_exit
                  _
              $region99: #{tpu_custom_call.1} parent=83 // pred_fallthru
                _
            $region84: #{tpu_custom_call.1} parent=79 // pred_fallthru
              _
            // Predicated region
            $region85: #{tpu_custom_call.1} parent=79 // pred_check
              _
            $region86: #{tpu_custom_call.1} parent=79 // pred_check_branch
              %590 = sbr.rel (0) target = $region88
            $region87: #{tpu_custom_call.1} parent=79 // pred_region
              %s592 = ssub.s32 16, 1
              loop: start=0, step=1, limit=1
              $region89: #{tpu_custom_call.1} parent=87 // loop_pre_header
                _
              $region90: #{tpu_custom_call.1} parent=87 // loop_header
                %s594 = sphi 0, %s598
                %p595 = scmp.ge.s32.totalorder %s594, 1
                %s599 = sphi %s584, %s584
                %s600 = sphi %s579, %s579
              $region91: #{tpu_custom_call.1} parent=87 // loop_header_branch
                %597 = sbr.rel (%p595) target = $region95
              $region92: #{tpu_custom_call.1} parent=87 // loop_body
                %v601 = vld [vmem:[%s599] sm:%s592]
                %602 = vst [vmem:[%s600] sm:%s592] %v601
                %v603 = vld [vmem:[%s599 + $0x10] sm:%s592]
                %604 = vst [vmem:[%s600 + $0x4] sm:%s592] %v603
              $region93: #{tpu_custom_call.1} parent=87 // loop_footer
                %s598 = sadd.s32 1, %s594
              $region94: #{tpu_custom_call.1} parent=87 // loop_footer_branch
                %593 = sbr.rel target = $region90
              $region95: #{tpu_custom_call.1} parent=87 // loop_exit
                _
            $region88: #{tpu_custom_call.1} parent=79 // pred_fallthru
              _
          $region80: #{tpu_custom_call.1} parent=75 // pred_fallthru
            _
          %629 = vnop
        $region76: #{tpu_custom_call.1} parent=71 // pred_fallthru
          _
      $region72: #{tpu_custom_call.1} parent=5 // pred_fallthru
        _
      %p630 = scmp.le.s32.totalorder 1, %s28
      %p631 = scmp.lt.s32.totalorder %s28, 5
      %p632 = pnand %p630, %p631
      %p633 = pneg %p632
      // Predicated region
      $region114: #{tpu_custom_call.1} parent=5 // pred_check
        _
      $region115: #{tpu_custom_call.1} parent=5 // pred_check_branch
        %635 = sbr.rel (%p632) target = $region117
      $region116: #{tpu_custom_call.1} parent=5 // pred_region
        %s636 = ssub.s32 %s28, 1
        // Predicated region
        $region118: #{tpu_custom_call.1} parent=116 // pred_check
          %p637 = pneg %p87
        $region119: #{tpu_custom_call.1} parent=116 // pred_check_branch
          %639 = sbr.rel (%p637) target = $region121
        $region120: #{tpu_custom_call.1} parent=116 // pred_region
          %640 = dma.done [#allocation6], 32
        $region121: #{tpu_custom_call.1} parent=116 // pred_fallthru
          _
        // Predicated region
        $region122: #{tpu_custom_call.1} parent=116 // pred_check
          %p641 = pneg %p139
        $region123: #{tpu_custom_call.1} parent=116 // pred_check_branch
          %643 = sbr.rel (%p641) target = $region125
        $region124: #{tpu_custom_call.1} parent=116 // pred_region
          %644 = dma.done [#allocation8], 32
        $region125: #{tpu_custom_call.1} parent=116 // pred_fallthru
          _
        %s645 = sand.u32 %s180, 1
        %s646 = sand.u32 %s180, 1
        %s647 = smul.addr %s646, 8
        %s648 = scalar_lea.vmem [#allocation9], %s647
        // Predicated region
        $region126: #{tpu_custom_call.1} parent=116 // pred_check
          %p649 = pneg %p193
        $region127: #{tpu_custom_call.1} parent=116 // pred_check_branch
          %651 = sbr.rel (%p649) target = $region129
        $region128: #{tpu_custom_call.1} parent=116 // pred_region
          _
        $region129: #{tpu_custom_call.1} parent=116 // pred_fallthru
          _
        // Predicated region
        $region130: #{tpu_custom_call.1} parent=116 // pred_check
          %p652 = pneg %p235
        $region131: #{tpu_custom_call.1} parent=116 // pred_check_branch
          %654 = sbr.rel (%p652) target = $region133
        $region132: #{tpu_custom_call.1} parent=116 // pred_region
          %655 = dma.done [#allocation8], 3072
        $region133: #{tpu_custom_call.1} parent=116 // pred_fallthru
          _
        // Predicated region
        $region134: #{tpu_custom_call.1} parent=116 // pred_check
          %p656 = pneg %p256
        $region135: #{tpu_custom_call.1} parent=116 // pred_check_branch
          %658 = sbr.rel (%p656) target = $region137
        $region136: #{tpu_custom_call.1} parent=116 // pred_region
          %659 = dma.done [#allocation12], 48
        $region137: #{tpu_custom_call.1} parent=116 // pred_fallthru
          _
        // Predicated region
        $region138: #{tpu_custom_call.1} parent=116 // pred_check
          %p660 = pneg %p277
        $region139: #{tpu_custom_call.1} parent=116 // pred_check_branch
          %662 = sbr.rel (%p660) target = $region141
        $region140: #{tpu_custom_call.1} parent=116 // pred_region
          %663 = dma.done [#allocation12], 48
        $region141: #{tpu_custom_call.1} parent=116 // pred_fallthru
          _
        // Predicated region
        $region142: #{tpu_custom_call.1} parent=116 // pred_check
          %p664 = pneg %p298
        $region143: #{tpu_custom_call.1} parent=116 // pred_check_branch
          %666 = sbr.rel (%p664) target = $region145
        $region144: #{tpu_custom_call.1} parent=116 // pred_region
          %667 = dma.done [#allocation15], 2048
        $region145: #{tpu_custom_call.1} parent=116 // pred_fallthru
          _
        %p668 = pneg %p61
        %p669 = pneg %p58
        %p670 = pneg %p87
        %p671 = pneg %p84
        %s672 = smul.u32 2, %s37
        %p673 = scmp.lt.s32.totalorder %s672, 1
        %s674 = scalar_select %p673, %s672, 1
        %s675 = smul.addr %s674, 2
        %s676 = smul.addr %s675, 4
        %s677 = scalar_lea.vmem %s2, %s676
        %p678 = pneg %p113
        %p679 = pneg %p110
        %p680 = pneg %p139
        %p681 = pneg %p136
        %s682 = smul.u32 2, %s37
        %p683 = scmp.lt.s32.totalorder %s682, 1
        %s684 = scalar_select %p683, %s682, 1
        %s685 = smul.addr %s684, 2
        %s686 = smul.addr %s685, 8
        %s687 = scalar_lea.vmem %s4, %s686
        %p688 = pneg %p165
        %p689 = pneg %p162
        %s690 = sand.u32 %s180, 1
        %s691 = sand.u32 %s180, 1
        %s692 = smul.addr %s691, 8
        %s693 = scalar_lea.vmem [#allocation9], %s692
        %p694 = pneg %p193
        %p695 = pneg %p190
        %p696 = pneg %p214
        %p697 = pneg %p211
        %p698 = pneg %p235
        %p699 = pneg %p232
        %p700 = pneg %p256
        %p701 = pneg %p253
        %p702 = pneg %p277
        %p703 = pneg %p274
        %p704 = pneg %p298
        %p705 = pneg %p295
        %p706 = pneg %p319
        %p707 = pneg %p316
        %p708 = pneg %p340
        %p709 = pneg %p337
        %p710 = pneg %p361
        %p711 = pneg %p358
        %p712 = pneg %p382
        %p713 = pneg %p379
        %p714 = pneg %p410
        %p715 = pneg %p407
        %s716 = sand.u32 %s397, 1
        %s717 = sand.u32 %s397, 1
        %s718 = smul.addr %s717, 16
        %s719 = scalar_lea.vmem [#allocation16], %s718
        %p720 = pneg %p436
        %p721 = pneg %p433
        %s722 = smul.u32 2, %s37
        %p723 = scmp.lt.s32.totalorder %s722, 1
        %s724 = scalar_select %p723, %s722, 1
        %s725 = smul.addr %s724, 4
        %s726 = scalar_lea.vmem %s16, %s725
        %s727 = smul.u32 2, %s37
        %s728 = smul.u32 2, %s37
        %p729 = scmp.lt.s32.totalorder %s728, 1
        %s730 = scalar_select %p729, %s728, 1
        %s731 = smul.addr %s730, 2
        %s732 = smul.addr %s731, 4
        %s733 = scalar_lea.vmem %s2, %s732
        %s734 = smul.u32 2, %s37
        %s735 = smul.u32 2, %s37
        %s736 = smul.u32 2, %s37
        %p737 = scmp.lt.s32.totalorder %s736, 1
        %s738 = scalar_select %p737, %s736, 1
        %s739 = smul.addr %s738, 2
        %s740 = smul.addr %s739, 8
        %s741 = scalar_lea.vmem %s4, %s740
        %s742 = smul.u32 2, %s37
        %s743 = smul.u32 2, %s37
        %s744 = smul.u32 2, %s37
        %s745 = smul.u32 2, %s37
        %p746 = scmp.lt.s32.totalorder %s745, 1
        %s747 = scalar_select %p746, %s745, 1
        %s748 = smul.addr %s747, 4
        %s749 = scalar_lea.vmem %s16, %s748
        %s750 = smul.u32 2, %s37
        %p752 = scmp.eq.s32.totalorder %s38, 0
        // Predicated region
        $region146: #{tpu_custom_call.1} parent=116 // pred_check
          %p753 = pneg %p752
        $region147: #{tpu_custom_call.1} parent=116 // pred_check_branch
          %755 = sbr.rel (%p753) target = $region149
        $region148: #{tpu_custom_call.1} parent=116 // pred_region
          %v756 = vld [vmem:[%s0] sm:$0x7]
          %v758 = vrot.slane %v756, 5
          %vm760 = vcmask 1042432
          %v761 = vsel %vm760, %v756, %v758
          %762 = vst [vmem:[#allocation3] sm:$0x3f] %v761
          %v763 = vld [vmem:[#allocation5] sm:$0x1]
          %v765 = vlaneseq
          %v766 = vshrl.u32 %v765, 7
          %v767 = vsub.s32 0, %v766
          %v768 = vrot.slane %v763, %v767
          %s770 = scalar_lea.vmem [#allocation5], 1
          %v771 = vld [vmem:[%s770] sm:$0x1]
          %v773 = vlaneseq
          %v774 = vshrl.u32 %v773, 7
          %v775 = vsub.s32 0, %v774
          %v776 = vrot.slane %v771, %v775
          %v778 = vsel %vm760, %v768, %v776
          %779 = vst [vmem:[#allocation2] sm:$0x3f] %v778
        $region149: #{tpu_custom_call.1} parent=116 // pred_fallthru
          _
        %v780 = vld [vmem:[#allocation3] sm:$0x3f]
        %v781 = vld [vmem:[#allocation2] sm:$0x3f]
        %v782 = vpack.c.bf16 %v780, %v780
        %v783 = vpack.c.bf16 %v781, %v781
        %v784 = vld [vmem:[%s6] sm:$0xff]
        %v785 = vld [vmem:[%s6 + $0x8] sm:$0xf]
        %v786 = vld [vmem:[%s6 + $0xc] sm:$0xff]
        %v787 = vld [vmem:[%s6 + $0x14] sm:$0xf]
        %v788 = vld [vmem:[%s6 + $0x18] sm:$0xff]
        %v789 = vld [vmem:[%s6 + $0x20] sm:$0xf]
        %v790 = vld [vmem:[%s6 + $0x24] sm:$0xff]
        %v791 = vld [vmem:[%s6 + $0x2c] sm:$0xf]
        %v792 = vld [vmem:[%s6 + $0x30] sm:$0xff]
        %v793 = vld [vmem:[%s6 + $0x38] sm:$0xf]
        %v794 = vld [vmem:[%s6 + $0x3c] sm:$0xff]
        %v795 = vld [vmem:[%s6 + $0x44] sm:$0xf]
        %v796 = vld [vmem:[%s6 + $0x48] sm:$0xff]
        %v797 = vld [vmem:[%s6 + $0x50] sm:$0xf]
        %v798 = vld [vmem:[%s6 + $0x54] sm:$0xff]
        %v799 = vld [vmem:[%s6 + $0x5c] sm:$0xf]
        %v800 = vld [vmem:[%s6 + $0x60] sm:$0xff]
        %v801 = vld [vmem:[%s6 + $0x68] sm:$0xf]
        %v802 = vld [vmem:[%s6 + $0x6c] sm:$0xff]
        %v803 = vld [vmem:[%s6 + $0x74] sm:$0xf]
        %v804 = vld [vmem:[%s6 + $0x78] sm:$0xff]
        %v805 = vld [vmem:[%s6 + $0x80] sm:$0xf]
        %v806 = vld [vmem:[%s6 + $0x84] sm:$0xff]
        %v807 = vld [vmem:[%s6 + $0x8c] sm:$0xf]
        %v808 = vld [vmem:[%s6 + $0x90] sm:$0xff]
        %v809 = vld [vmem:[%s6 + $0x98] sm:$0xf]
        %v810 = vld [vmem:[%s6 + $0x9c] sm:$0xff]
        %v811 = vld [vmem:[%s6 + $0xa4] sm:$0xf]
        %v812 = vld [vmem:[%s6 + $0xa8] sm:$0xff]
        %v813 = vld [vmem:[%s6 + $0xb0] sm:$0xf]
        %v814 = vld [vmem:[%s6 + $0xb4] sm:$0xff]
        %v815 = vld [vmem:[%s6 + $0xbc] sm:$0xf]
        %v816 = vld [vmem:[#allocation11] sm:$0x7]
        %v818 = vlaneseq
        %v819 = vshrl.u32 %v818, 7
        %v820 = vsub.s32 0, %v819
        %v821 = vrot.slane %v816, %v820
        %v822 = vlaneseq
        %v823 = vshrl.u32 %v822, 7
        %v824 = vsub.s32 1, %v823
        %v825 = vrot.slane %v816, %v824
        %v826 = vlaneseq
        %v827 = vshrl.u32 %v826, 7
        %v828 = vsub.s32 2, %v827
        %v829 = vrot.slane %v816, %v828
        %v865 = vunpack.c.l.b16 %v784
        %v866 = vunpack.c.h.b16 %v784
        %v867 = vunpack.c.l.b16 %v785
        %v868 = vunpack.c.l.b16 %v786
        %v869 = vunpack.c.h.b16 %v786
        %v870 = vunpack.c.l.b16 %v787
        %v871 = vunpack.c.l.b16 %v788
        %v872 = vunpack.c.h.b16 %v788
        %v873 = vunpack.c.l.b16 %v789
        %v874 = vunpack.c.l.b16 %v790
        %v875 = vunpack.c.h.b16 %v790
        %v876 = vunpack.c.l.b16 %v791
        %v877 = vunpack.c.l.b16 %v792
        %v878 = vunpack.c.h.b16 %v792
        %v879 = vunpack.c.l.b16 %v793
        %v880 = vunpack.c.l.b16 %v794
        %v881 = vunpack.c.h.b16 %v794
        %v882 = vunpack.c.l.b16 %v795
        %v883 = vunpack.c.l.b16 %v796
        %v884 = vunpack.c.h.b16 %v796
        %v885 = vunpack.c.l.b16 %v797
        %v886 = vunpack.c.l.b16 %v798
        %v887 = vunpack.c.h.b16 %v798
        %v888 = vunpack.c.l.b16 %v799
        %v889 = vunpack.c.l.b16 %v800
        %v890 = vunpack.c.h.b16 %v800
        %v891 = vunpack.c.l.b16 %v801
        %v892 = vunpack.c.l.b16 %v802
        %v893 = vunpack.c.h.b16 %v802
        %v894 = vunpack.c.l.b16 %v803
        %v895 = vunpack.c.l.b16 %v804
        %v896 = vunpack.c.h.b16 %v804
        %v897 = vunpack.c.l.b16 %v805
        %v898 = vunpack.c.l.b16 %v806
        %v899 = vunpack.c.h.b16 %v806
        %v900 = vunpack.c.l.b16 %v807
        %v901 = vunpack.c.l.b16 %v808
        %v902 = vunpack.c.h.b16 %v808
        %v903 = vunpack.c.l.b16 %v809
        %v904 = vunpack.c.l.b16 %v810
        %v905 = vunpack.c.h.b16 %v810
        %v906 = vunpack.c.l.b16 %v811
        %v907 = vunpack.c.l.b16 %v812
        %v908 = vunpack.c.h.b16 %v812
        %v909 = vunpack.c.l.b16 %v813
        %v910 = vunpack.c.l.b16 %v814
        %v911 = vunpack.c.h.b16 %v814
        %v912 = vunpack.c.l.b16 %v815
        %v913 = vpack.c.b16 %v868, %v865
        %v914 = vpack.c.b16 %v869, %v866
        %v915 = vpack.c.b16 %v870, %v867
        %v916 = vpack.c.b16 %v874, %v871
        %v917 = vpack.c.b16 %v875, %v872
        %v918 = vpack.c.b16 %v876, %v873
        %v919 = vpack.c.b16 %v880, %v877
        %v920 = vpack.c.b16 %v881, %v878
        %v921 = vpack.c.b16 %v882, %v879
        %v922 = vpack.c.b16 %v886, %v883
        %v923 = vpack.c.b16 %v887, %v884
        %v924 = vpack.c.b16 %v888, %v885
        %v925 = vpack.c.b16 %v892, %v889
        %v926 = vpack.c.b16 %v893, %v890
        %v927 = vpack.c.b16 %v894, %v891
        %v928 = vpack.c.b16 %v898, %v895
        %v929 = vpack.c.b16 %v899, %v896
        %v930 = vpack.c.b16 %v900, %v897
        %v931 = vpack.c.b16 %v904, %v901
        %v932 = vpack.c.b16 %v905, %v902
        %v933 = vpack.c.b16 %v906, %v903
        %v934 = vpack.c.b16 %v910, %v907
        %v935 = vpack.c.b16 %v911, %v908
        %v936 = vpack.c.b16 %v912, %v909
        %961 = vmatprep.subr.bf16.mxu0 %v935
        %962 = vmatpush1.bf16.msra.mxu0 %v934
        %963 = vmatprep.subr.bf16.mxu0 %v932
        %964 = vmatpush1.bf16.msra.mxu0 %v931
        %965 = vmatprep.subr.bf16.mxu0 %v929
        %966 = vmatpush1.bf16.msra.mxu0 %v928
        %967 = vmatprep.subr.bf16.mxu0 %v926
        %968 = vmatpush1.bf16.msra.mxu0 %v925
        %969 = vmatprep.subr.bf16.mxu0 %v923
        %970 = vmatpush1.bf16.msra.mxu0 %v922
        %971 = vmatprep.subr.bf16.mxu0 %v920
        %972 = vmatpush1.bf16.msra.mxu0 %v919
        %973 = vmatprep.subr.bf16.mxu0 %v917
        %974 = vmatpush1.bf16.msra.mxu0 %v916
        %975 = vmatprep.subr.bf16.mxu0 %v914
        %976 = vmatpush1.bf16.msra.mxu0 %v913
        %977 = vmatprep.subr.bf16.mxu0 0
        %978 = vmatpush2.bf16.msra.mxu0 0
        %979 = vmatprep.subr.bf16.mxu0 0
        %980 = vmatpush2.bf16.msra.mxu0 0
        %981 = vmatprep.subr.bf16.mxu0 0
        %982 = vmatpush2.bf16.msra.mxu0 0
        %983 = vmatprep.subr.bf16.mxu0 0
        %984 = vmatpush2.bf16.msra.mxu0 0
        %985 = vmatprep.subr.bf16.mxu0 0
        %986 = vmatpush2.bf16.msra.mxu0 0
        %987 = vmatprep.subr.bf16.mxu0 0
        %988 = vmatpush2.bf16.msra.mxu0 0
        %989 = vmatprep.subr.bf16.mxu0 0
        %990 = vmatpush2.bf16.msra.mxu0 0
        %991 = vmatprep.subr.bf16.mxu0 0
        %992 = vmatpush2.bf16.msra.mxu0 0
        %993 = vmatprep.mubr.bf16.mxu0 0
        %994 = vmatmul.mubr.bf16.gmra.mxu0 %v782
        %v995 = vpop.f32.mrf.mxu0
        %v996 = vadd.f32 %v821, %v995
        %v997 = vpop.f32.mrf.mxu0
        %v998 = vadd.f32 %v825, %v997
        %v999 = vpop.f32.mrf.mxu0
        %v1000 = vpop.f32.mrf.mxu0
        %1001 = vdwg.mxu0
        %1002 = vmatprep.subr.bf16.mxu0 0
        %1003 = vmatpush1.bf16.msra.mxu0 %v936
        %1004 = vmatprep.subr.bf16.mxu0 0
        %1005 = vmatpush1.bf16.msra.mxu0 %v933
        %1006 = vmatprep.subr.bf16.mxu0 0
        %1007 = vmatpush1.bf16.msra.mxu0 %v930
        %1008 = vmatprep.subr.bf16.mxu0 0
        %1009 = vmatpush1.bf16.msra.mxu0 %v927
        %1010 = vmatprep.subr.bf16.mxu0 0
        %1011 = vmatpush1.bf16.msra.mxu0 %v924
        %1012 = vmatprep.subr.bf16.mxu0 0
        %1013 = vmatpush1.bf16.msra.mxu0 %v921
        %1014 = vmatprep.subr.bf16.mxu0 0
        %1015 = vmatpush1.bf16.msra.mxu0 %v918
        %1016 = vmatprep.subr.bf16.mxu0 0
        %1017 = vmatpush1.bf16.msra.mxu0 %v915
        %1018 = vmatprep.subr.bf16.mxu0 0
        %1019 = vmatpush2.bf16.msra.mxu0 0
        %1020 = vmatprep.subr.bf16.mxu0 0
        %1021 = vmatpush2.bf16.msra.mxu0 0
        %1022 = vmatprep.subr.bf16.mxu0 0
        %1023 = vmatpush2.bf16.msra.mxu0 0
        %1024 = vmatprep.subr.bf16.mxu0 0
        %1025 = vmatpush2.bf16.msra.mxu0 0
        %1026 = vmatprep.subr.bf16.mxu0 0
        %1027 = vmatpush2.bf16.msra.mxu0 0
        %1028 = vmatprep.subr.bf16.mxu0 0
        %1029 = vmatpush2.bf16.msra.mxu0 0
        %1030 = vmatprep.subr.bf16.mxu0 0
        %1031 = vmatpush2.bf16.msra.mxu0 0
        %1032 = vmatprep.subr.bf16.mxu0 0
        %1033 = vmatpush2.bf16.msra.mxu0 0
        %1034 = vmatprep.mubr.bf16.mxu0 0
        %1035 = vmatmul.mubr.bf16.gmra.mxu0 %v782
        %v1036 = vpop.f32.mrf.mxu0
        %v1037 = vadd.f32 %v829, %v1036
        %v1038 = vpop.f32.mrf.mxu0
        %v1039 = vpop.f32.mrf.mxu0
        %v1040 = vpop.f32.mrf.mxu0
        %1041 = vdwg.mxu0
        %v1042 = vld [vmem:[#allocation10] sm:$0xff]
        %v1043 = vld [vmem:[#allocation10 + $0x8] sm:$0xf]
        %v1044 = vld [vmem:[#allocation10 + $0xc] sm:$0xff]
        %v1045 = vld [vmem:[#allocation10 + $0x14] sm:$0xf]
        %v1046 = vld [vmem:[#allocation10 + $0x18] sm:$0xff]
        %v1047 = vld [vmem:[#allocation10 + $0x20] sm:$0xf]
        %v1048 = vld [vmem:[#allocation10 + $0x24] sm:$0xff]
        %v1049 = vld [vmem:[#allocation10 + $0x2c] sm:$0xf]
        %v1050 = vld [vmem:[#allocation10 + $0x30] sm:$0xff]
        %v1051 = vld [vmem:[#allocation10 + $0x38] sm:$0xf]
        %v1052 = vld [vmem:[#allocation10 + $0x3c] sm:$0xff]
        %v1053 = vld [vmem:[#allocation10 + $0x44] sm:$0xf]
        %v1054 = vld [vmem:[#allocation10 + $0x48] sm:$0xff]
        %v1055 = vld [vmem:[#allocation10 + $0x50] sm:$0xf]
        %v1056 = vld [vmem:[#allocation10 + $0x54] sm:$0xff]
        %v1057 = vld [vmem:[#allocation10 + $0x5c] sm:$0xf]
        %v1058 = vld [vmem:[#allocation10 + $0x60] sm:$0xff]
        %v1059 = vld [vmem:[#allocation10 + $0x68] sm:$0xf]
        %v1060 = vld [vmem:[#allocation10 + $0x6c] sm:$0xff]
        %v1061 = vld [vmem:[#allocation10 + $0x74] sm:$0xf]
        %v1062 = vld [vmem:[#allocation10 + $0x78] sm:$0xff]
        %v1063 = vld [vmem:[#allocation10 + $0x80] sm:$0xf]
        %v1064 = vld [vmem:[#allocation10 + $0x84] sm:$0xff]
        %v1065 = vld [vmem:[#allocation10 + $0x8c] sm:$0xf]
        %v1066 = vld [vmem:[#allocation10 + $0x90] sm:$0xff]
        %v1067 = vld [vmem:[#allocation10 + $0x98] sm:$0xf]
        %v1068 = vld [vmem:[#allocation10 + $0x9c] sm:$0xff]
        %v1069 = vld [vmem:[#allocation10 + $0xa4] sm:$0xf]
        %v1070 = vld [vmem:[#allocation10 + $0xa8] sm:$0xff]
        %v1071 = vld [vmem:[#allocation10 + $0xb0] sm:$0xf]
        %v1072 = vld [vmem:[#allocation10 + $0xb4] sm:$0xff]
        %v1073 = vld [vmem:[#allocation10 + $0xbc] sm:$0xf]
        %v1074 = vld [vmem:[#allocation13] sm:$0x7]
        %v1076 = vlaneseq
        %v1077 = vshrl.u32 %v1076, 7
        %v1078 = vsub.s32 0, %v1077
        %v1079 = vrot.slane %v1074, %v1078
        %v1080 = vlaneseq
        %v1081 = vshrl.u32 %v1080, 7
        %v1082 = vsub.s32 1, %v1081
        %v1083 = vrot.slane %v1074, %v1082
        %v1084 = vlaneseq
        %v1085 = vshrl.u32 %v1084, 7
        %v1086 = vsub.s32 2, %v1085
        %v1087 = vrot.slane %v1074, %v1086
        %v1123 = vunpack.c.l.b16 %v1042
        %v1124 = vunpack.c.h.b16 %v1042
        %v1125 = vunpack.c.l.b16 %v1043
        %v1126 = vunpack.c.l.b16 %v1044
        %v1127 = vunpack.c.h.b16 %v1044
        %v1128 = vunpack.c.l.b16 %v1045
        %v1129 = vunpack.c.l.b16 %v1046
        %v1130 = vunpack.c.h.b16 %v1046
        %v1131 = vunpack.c.l.b16 %v1047
        %v1132 = vunpack.c.l.b16 %v1048
        %v1133 = vunpack.c.h.b16 %v1048
        %v1134 = vunpack.c.l.b16 %v1049
        %v1135 = vunpack.c.l.b16 %v1050
        %v1136 = vunpack.c.h.b16 %v1050
        %v1137 = vunpack.c.l.b16 %v1051
        %v1138 = vunpack.c.l.b16 %v1052
        %v1139 = vunpack.c.h.b16 %v1052
        %v1140 = vunpack.c.l.b16 %v1053
        %v1141 = vunpack.c.l.b16 %v1054
        %v1142 = vunpack.c.h.b16 %v1054
        %v1143 = vunpack.c.l.b16 %v1055
        %v1144 = vunpack.c.l.b16 %v1056
        %v1145 = vunpack.c.h.b16 %v1056
        %v1146 = vunpack.c.l.b16 %v1057
        %v1147 = vunpack.c.l.b16 %v1058
        %v1148 = vunpack.c.h.b16 %v1058
        %v1149 = vunpack.c.l.b16 %v1059
        %v1150 = vunpack.c.l.b16 %v1060
        %v1151 = vunpack.c.h.b16 %v1060
        %v1152 = vunpack.c.l.b16 %v1061
        %v1153 = vunpack.c.l.b16 %v1062
        %v1154 = vunpack.c.h.b16 %v1062
        %v1155 = vunpack.c.l.b16 %v1063
        %v1156 = vunpack.c.l.b16 %v1064
        %v1157 = vunpack.c.h.b16 %v1064
        %v1158 = vunpack.c.l.b16 %v1065
        %v1159 = vunpack.c.l.b16 %v1066
        %v1160 = vunpack.c.h.b16 %v1066
        %v1161 = vunpack.c.l.b16 %v1067
        %v1162 = vunpack.c.l.b16 %v1068
        %v1163 = vunpack.c.h.b16 %v1068
        %v1164 = vunpack.c.l.b16 %v1069
        %v1165 = vunpack.c.l.b16 %v1070
        %v1166 = vunpack.c.h.b16 %v1070
        %v1167 = vunpack.c.l.b16 %v1071
        %v1168 = vunpack.c.l.b16 %v1072
        %v1169 = vunpack.c.h.b16 %v1072
        %v1170 = vunpack.c.l.b16 %v1073
        %v1171 = vpack.c.b16 %v1126, %v1123
        %v1172 = vpack.c.b16 %v1127, %v1124
        %v1173 = vpack.c.b16 %v1128, %v1125
        %v1174 = vpack.c.b16 %v1132, %v1129
        %v1175 = vpack.c.b16 %v1133, %v1130
        %v1176 = vpack.c.b16 %v1134, %v1131
        %v1177 = vpack.c.b16 %v1138, %v1135
        %v1178 = vpack.c.b16 %v1139, %v1136
        %v1179 = vpack.c.b16 %v1140, %v1137
        %v1180 = vpack.c.b16 %v1144, %v1141
        %v1181 = vpack.c.b16 %v1145, %v1142
        %v1182 = vpack.c.b16 %v1146, %v1143
        %v1183 = vpack.c.b16 %v1150, %v1147
        %v1184 = vpack.c.b16 %v1151, %v1148
        %v1185 = vpack.c.b16 %v1152, %v1149
        %v1186 = vpack.c.b16 %v1156, %v1153
        %v1187 = vpack.c.b16 %v1157, %v1154
        %v1188 = vpack.c.b16 %v1158, %v1155
        %v1189 = vpack.c.b16 %v1162, %v1159
        %v1190 = vpack.c.b16 %v1163, %v1160
        %v1191 = vpack.c.b16 %v1164, %v1161
        %v1192 = vpack.c.b16 %v1168, %v1165
        %v1193 = vpack.c.b16 %v1169, %v1166
        %v1194 = vpack.c.b16 %v1170, %v1167
        %1219 = vmatprep.subr.bf16.mxu0 %v1193
        %1220 = vmatpush1.bf16.msra.mxu0 %v1192
        %1221 = vmatprep.subr.bf16.mxu0 %v1190
        %1222 = vmatpush1.bf16.msra.mxu0 %v1189
        %1223 = vmatprep.subr.bf16.mxu0 %v1187
        %1224 = vmatpush1.bf16.msra.mxu0 %v1186
        %1225 = vmatprep.subr.bf16.mxu0 %v1184
        %1226 = vmatpush1.bf16.msra.mxu0 %v1183
        %1227 = vmatprep.subr.bf16.mxu0 %v1181
        %1228 = vmatpush1.bf16.msra.mxu0 %v1180
        %1229 = vmatprep.subr.bf16.mxu0 %v1178
        %1230 = vmatpush1.bf16.msra.mxu0 %v1177
        %1231 = vmatprep.subr.bf16.mxu0 %v1175
        %1232 = vmatpush1.bf16.msra.mxu0 %v1174
        %1233 = vmatprep.subr.bf16.mxu0 %v1172
        %1234 = vmatpush1.bf16.msra.mxu0 %v1171
        %1235 = vmatprep.subr.bf16.mxu0 0
        %1236 = vmatpush2.bf16.msra.mxu0 0
        %1237 = vmatprep.subr.bf16.mxu0 0
        %1238 = vmatpush2.bf16.msra.mxu0 0
        %1239 = vmatprep.subr.bf16.mxu0 0
        %1240 = vmatpush2.bf16.msra.mxu0 0
        %1241 = vmatprep.subr.bf16.mxu0 0
        %1242 = vmatpush2.bf16.msra.mxu0 0
        %1243 = vmatprep.subr.bf16.mxu0 0
        %1244 = vmatpush2.bf16.msra.mxu0 0
        %1245 = vmatprep.subr.bf16.mxu0 0
        %1246 = vmatpush2.bf16.msra.mxu0 0
        %1247 = vmatprep.subr.bf16.mxu0 0
        %1248 = vmatpush2.bf16.msra.mxu0 0
        %1249 = vmatprep.subr.bf16.mxu0 0
        %1250 = vmatpush2.bf16.msra.mxu0 0
        %1251 = vmatprep.mubr.bf16.mxu0 0
        %1252 = vmatmul.mubr.bf16.gmra.mxu0 %v783
        %v1253 = vpop.f32.mrf.mxu0
        %v1254 = vadd.f32 %v1079, %v1253
        %v1255 = vpop.f32.mrf.mxu0
        %v1256 = vadd.f32 %v1083, %v1255
        %v1257 = vpop.f32.mrf.mxu0
        %v1258 = vpop.f32.mrf.mxu0
        %1259 = vdwg.mxu0
        %1260 = vmatprep.subr.bf16.mxu0 0
        %1261 = vmatpush1.bf16.msra.mxu0 %v1194
        %1262 = vmatprep.subr.bf16.mxu0 0
        %1263 = vmatpush1.bf16.msra.mxu0 %v1191
        %1264 = vmatprep.subr.bf16.mxu0 0
        %1265 = vmatpush1.bf16.msra.mxu0 %v1188
        %1266 = vmatprep.subr.bf16.mxu0 0
        %1267 = vmatpush1.bf16.msra.mxu0 %v1185
        %1268 = vmatprep.subr.bf16.mxu0 0
        %1269 = vmatpush1.bf16.msra.mxu0 %v1182
        %1270 = vmatprep.subr.bf16.mxu0 0
        %1271 = vmatpush1.bf16.msra.mxu0 %v1179
        %1272 = vmatprep.subr.bf16.mxu0 0
        %1273 = vmatpush1.bf16.msra.mxu0 %v1176
        %1274 = vmatprep.subr.bf16.mxu0 0
        %1275 = vmatpush1.bf16.msra.mxu0 %v1173
        %1276 = vmatprep.subr.bf16.mxu0 0
        %1277 = vmatpush2.bf16.msra.mxu0 0
        %1278 = vmatprep.subr.bf16.mxu0 0
        %1279 = vmatpush2.bf16.msra.mxu0 0
        %1280 = vmatprep.subr.bf16.mxu0 0
        %1281 = vmatpush2.bf16.msra.mxu0 0
        %1282 = vmatprep.subr.bf16.mxu0 0
        %1283 = vmatpush2.bf16.msra.mxu0 0
        %1284 = vmatprep.subr.bf16.mxu0 0
        %1285 = vmatpush2.bf16.msra.mxu0 0
        %1286 = vmatprep.subr.bf16.mxu0 0
        %1287 = vmatpush2.bf16.msra.mxu0 0
        %1288 = vmatprep.subr.bf16.mxu0 0
        %1289 = vmatpush2.bf16.msra.mxu0 0
        %1290 = vmatprep.subr.bf16.mxu0 0
        %1291 = vmatpush2.bf16.msra.mxu0 0
        %1292 = vmatprep.mubr.bf16.mxu0 0
        %1293 = vmatmul.mubr.bf16.gmra.mxu0 %v783
        %v1294 = vpop.f32.mrf.mxu0
        %v1295 = vadd.f32 %v1087, %v1294
        %v1296 = vpop.f32.mrf.mxu0
        %v1297 = vpop.f32.mrf.mxu0
        %v1298 = vpop.f32.mrf.mxu0
        %1299 = vdwg.mxu0
        %v1300 = vadd.f32 %v996, %v1254
        %v1301 = vxor.u32 %v1300, 2147483648
        %v1302 = vmul.f32 %v1301, 1.442695
        %v1303 = vpow.pop %v1302
        %v1304 = vadd.f32 %v1303, 1.0
        %v1305 = vrcp.pop %v1304
        %v1306 = vmul.f32 1.0, %v1305
        %v1307 = vadd.f32 %v998, %v1256
        %v1308 = vxor.u32 %v1307, 2147483648
        %v1309 = vmul.f32 %v1308, 1.442695
        %v1310 = vpow.pop %v1309
        %v1311 = vadd.f32 %v1310, 1.0
        %v1312 = vrcp.pop %v1311
        %v1313 = vmul.f32 1.0, %v1312
        %v1314 = vmul.f32 %v1306, %v1295
        %v1315 = vadd.f32 %v1037, %v1314
        %v1316 = vtanh.pop %v1315
        %v1317 = vsub.f32 1.0, %v1313
        %v1318 = vmul.f32 %v1317, %v1316
        %v1319 = vmul.f32 %v1313, %v781
        %v1320 = vadd.f32 %v1318, %v1319
        %1321 = vst [vmem:[#allocation2] sm:$0x3f] %v1320
        %v1322 = vpack.c.bf16 %v1320, %v1320
        %v1323 = vlaneseq
        %v1324 = vand.u32 %v1323, 127
        %v1325 = vadd.s32 %v1324, 128
        %v1326 = vld [vmem:[%s733] sm:$0xf]
        %v1327 = vld [vmem:[%s733 + $0x4] sm:$0xf]
        %v1328 = vld [vmem:[#allocation7] sm:$0x1]
        %v1330 = vlaneseq
        %v1331 = vshrl.u32 %v1330, 7
        %v1332 = vsub.s32 0, %v1331
        %v1333 = vrot.slane %v1328, %v1332
        %v1337 = vunpack.c.l.b16 %v1326
        %v1338 = vunpack.c.l.b16 %v1327
        %v1339 = vpack.c.b16 %v1338, %v1337
        %1341 = vmatprep.subr.bf16.mxu0 0
        %1342 = vmatpush1.bf16.xpose.msra.mxu0 0
        %1343 = vmatprep.subr.bf16.mxu0 0
        %1344 = vmatpush1.bf16.xpose.msra.mxu0 0
        %1345 = vmatprep.subr.bf16.mxu0 0
        %1346 = vmatpush1.bf16.xpose.msra.mxu0 0
        %1347 = vmatprep.subr.bf16.mxu0 0
        %1348 = vmatpush1.bf16.xpose.msra.mxu0 0
        %1349 = vmatprep.subr.bf16.mxu0 0
        %1350 = vmatpush1.bf16.xpose.msra.mxu0 0
        %1351 = vmatprep.subr.bf16.mxu0 0
        %1352 = vmatpush1.bf16.xpose.msra.mxu0 0
        %1353 = vmatprep.subr.bf16.mxu0 0
        %1354 = vmatpush1.bf16.xpose.msra.mxu0 0
        %1355 = vmatprep.subr.bf16.mxu0 0
        %1356 = vmatpush1.bf16.xpose.msra.mxu0 %v1339
        %1357 = vmatprep.subr.bf16.mxu0 0
        %1358 = vmatpush2.bf16.xpose.msra.mxu0 0
        %1359 = vmatprep.subr.bf16.mxu0 0
        %1360 = vmatpush2.bf16.xpose.msra.mxu0 0
        %1361 = vmatprep.subr.bf16.mxu0 0
        %1362 = vmatpush2.bf16.xpose.msra.mxu0 0
        %1363 = vmatprep.subr.bf16.mxu0 0
        %1364 = vmatpush2.bf16.xpose.msra.mxu0 0
        %1365 = vmatprep.subr.bf16.mxu0 0
        %1366 = vmatpush2.bf16.xpose.msra.mxu0 0
        %1367 = vmatprep.subr.bf16.mxu0 0
        %1368 = vmatpush2.bf16.xpose.msra.mxu0 0
        %1369 = vmatprep.subr.bf16.mxu0 0
        %1370 = vmatpush2.bf16.xpose.msra.mxu0 0
        %1371 = vmatprep.subr.bf16.mxu0 0
        %1372 = vmatpush2.bf16.xpose.msra.mxu0 0
        %1373 = vmatprep.mubr.bf16.mxu0 0
        %1374 = vmatmul.mubr.bf16.gmra.mxu0 %v1322
        %v1375 = vpop.f32.mrf.mxu0
        %v1376 = vadd.f32 %v1333, %v1375
        %v1377 = vpop.f32.mrf.mxu0
        %v1378 = vpop.f32.mrf.mxu0
        %v1379 = vpop.f32.mrf.mxu0
        %1380 = vdwg.mxu0
        %vm1381 = vcmask 124928
        %v1382 = vsel %vm1381, %v1376, -inf
        %1383 = vmax.xlane.f32.xlu0 %v1382
        %v1384 = vpop.xlane.xlu0 %1383
        %v1385 = vsub.f32 %v1376, %v1384
        %v1386 = vmul.f32 %v1385, 1.442695
        %v1387 = vpow.pop %v1386
        %v1388 = vsel %vm1381, %v1387, 0.0
        %1389 = vadd.xlane.f32.xlu0 %v1388
        %v1390 = vpop.xlane.xlu0 %1389
        %v1391 = vrcp.pop %v1390
        %v1392 = vmul.f32 %v1387, %v1391
        %v1393 = vpack.c.bf16 %v1392, %v1392
        %vm1394 = vcmask 130048
        %v1396 = vsel %vm1394, %v1393, 0
        %1398 = vmatprep.subr.bf16.mxu0 0
        %1399 = vmatpush1.bf16.msra.mxu0 0
        %1400 = vmatprep.subr.bf16.mxu0 0
        %1401 = vmatpush1.bf16.msra.mxu0 0
        %1402 = vmatprep.subr.bf16.mxu0 0
        %1403 = vmatpush1.bf16.msra.mxu0 0
        %1404 = vmatprep.subr.bf16.mxu0 0
        %1405 = vmatpush1.bf16.msra.mxu0 0
        %1406 = vmatprep.subr.bf16.mxu0 0
        %1407 = vmatpush1.bf16.msra.mxu0 0
        %1408 = vmatprep.subr.bf16.mxu0 0
        %1409 = vmatpush1.bf16.msra.mxu0 0
        %1410 = vmatprep.subr.bf16.mxu0 0
        %1411 = vmatpush1.bf16.msra.mxu0 0
        %1412 = vmatprep.subr.bf16.mxu0 0
        %1413 = vmatpush1.bf16.msra.mxu0 %v1339
        %1414 = vmatprep.subr.bf16.mxu0 0
        %1415 = vmatpush2.bf16.msra.mxu0 0
        %1416 = vmatprep.subr.bf16.mxu0 0
        %1417 = vmatpush2.bf16.msra.mxu0 0
        %1418 = vmatprep.subr.bf16.mxu0 0
        %1419 = vmatpush2.bf16.msra.mxu0 0
        %1420 = vmatprep.subr.bf16.mxu0 0
        %1421 = vmatpush2.bf16.msra.mxu0 0
        %1422 = vmatprep.subr.bf16.mxu0 0
        %1423 = vmatpush2.bf16.msra.mxu0 0
        %1424 = vmatprep.subr.bf16.mxu0 0
        %1425 = vmatpush2.bf16.msra.mxu0 0
        %1426 = vmatprep.subr.bf16.mxu0 0
        %1427 = vmatpush2.bf16.msra.mxu0 0
        %1428 = vmatprep.subr.bf16.mxu0 0
        %1429 = vmatpush2.bf16.msra.mxu0 0
        %1430 = vmatprep.mubr.bf16.mxu0 0
        %1431 = vmatmul.mubr.bf16.gmra.mxu0 %v1396
        %v1432 = vpop.f32.mrf.mxu0
        %v1433 = vadd.f32 0.0, %v1432
        %v1434 = vpop.f32.mrf.mxu0
        %v1435 = vpop.f32.mrf.mxu0
        %v1436 = vpop.f32.mrf.mxu0
        %1437 = vdwg.mxu0
        %v1438 = vld [vmem:[%s741] sm:$0xff]
        %v1439 = vld [vmem:[%s741 + $0x8] sm:$0xff]
        %1440 = vset.pattern.permute.xlu0 0
        %1441 = vperm.xlu0 %1440, %v1438
        %v1442 = vpop.permute.xlu0 %1441
        %1443 = vset.pattern.permute.xlu0 0
        %1444 = vperm.xlu0 %1443, %v1439
        %v1445 = vpop.permute.xlu0 %1444
        %vm1446 = vcmp.eq.s32.totalorder %v1442, %v1324
        %vm1447 = vcmp.eq.s32.totalorder %v1442, %v1325
        %vm1448 = vcmp.eq.s32.totalorder %v1445, %v1324
        %vm1449 = vcmp.eq.s32.totalorder %v1445, %v1325
        %v1450 = vsel %vm1446, 1, 0
        %v1451 = vsel %vm1447, 1, 0
        %v1452 = vsel %vm1448, 1, 0
        %v1453 = vsel %vm1449, 1, 0
        %v1454 = vcvt.s32.f32 %v1450
        %v1455 = vcvt.s32.f32 %v1451
        %v1456 = vcvt.s32.f32 %v1452
        %v1457 = vcvt.s32.f32 %v1453
        %v1458 = vpack.c.bf16 %v1456, %v1454
        %v1459 = vpack.c.bf16 %v1457, %v1455
        %1460 = vmatprep.subr.bf16.mxu0 0
        %1461 = vmatpush1.bf16.msra.mxu0 0
        %1462 = vmatprep.subr.bf16.mxu0 0
        %1463 = vmatpush1.bf16.msra.mxu0 0
        %1464 = vmatprep.subr.bf16.mxu0 0
        %1465 = vmatpush1.bf16.msra.mxu0 0
        %1466 = vmatprep.subr.bf16.mxu0 0
        %1467 = vmatpush1.bf16.msra.mxu0 0
        %1468 = vmatprep.subr.bf16.mxu0 0
        %1469 = vmatpush1.bf16.msra.mxu0 0
        %1470 = vmatprep.subr.bf16.mxu0 0
        %1471 = vmatpush1.bf16.msra.mxu0 0
        %1472 = vmatprep.subr.bf16.mxu0 0
        %1473 = vmatpush1.bf16.msra.mxu0 0
        %1474 = vmatprep.subr.bf16.mxu0 %v1459
        %1475 = vmatpush1.bf16.msra.mxu0 %v1458
        %1476 = vmatprep.subr.bf16.mxu0 0
        %1477 = vmatpush2.bf16.msra.mxu0 0
        %1478 = vmatprep.subr.bf16.mxu0 0
        %1479 = vmatpush2.bf16.msra.mxu0 0
        %1480 = vmatprep.subr.bf16.mxu0 0
        %1481 = vmatpush2.bf16.msra.mxu0 0
        %1482 = vmatprep.subr.bf16.mxu0 0
        %1483 = vmatpush2.bf16.msra.mxu0 0
        %1484 = vmatprep.subr.bf16.mxu0 0
        %1485 = vmatpush2.bf16.msra.mxu0 0
        %1486 = vmatprep.subr.bf16.mxu0 0
        %1487 = vmatpush2.bf16.msra.mxu0 0
        %1488 = vmatprep.subr.bf16.mxu0 0
        %1489 = vmatpush2.bf16.msra.mxu0 0
        %1490 = vmatprep.subr.bf16.mxu0 0
        %1491 = vmatpush2.bf16.msra.mxu0 0
        %1492 = vmatprep.mubr.bf16.mxu0 0
        %1493 = vmatmul.mubr.bf16.gmra.mxu0 %v1396
        %v1494 = vpop.f32.mrf.mxu0
        %v1495 = vadd.f32 0.0, %v1494
        %v1496 = vpop.f32.mrf.mxu0
        %v1497 = vadd.f32 0.0, %v1496
        %v1498 = vpop.f32.mrf.mxu0
        %v1499 = vpop.f32.mrf.mxu0
        %1500 = vdwg.mxu0
        %s1501 = scalar_lea.vmem %s733, 8
        %v1502 = vld [vmem:[%s1501] sm:$0xf]
        %v1503 = vld [vmem:[%s1501 + $0x4] sm:$0xf]
        %s1504 = scalar_lea.vmem [#allocation7], 1
        %v1505 = vld [vmem:[%s1504] sm:$0x1]
        %v1507 = vlaneseq
        %v1508 = vshrl.u32 %v1507, 7
        %v1509 = vsub.s32 0, %v1508
        %v1510 = vrot.slane %v1505, %v1509
        %v1513 = vshrl.u32 %v1322, 16
        %v1515 = vrot.slane %v1513, 1
        %v1516 = vshll.u32 %v1322, 16
        %v1518 = vrot.slane %v1516, 2
        %v1519 = vor.u32 %v1515, %v1518
        %v1523 = vunpack.c.l.b16 %v1502
        %v1524 = vunpack.c.l.b16 %v1503
        %v1525 = vpack.c.b16 %v1524, %v1523
        %1527 = vmatprep.subr.bf16.mxu0 0
        %1528 = vmatpush1.bf16.xpose.msra.mxu0 0
        %1529 = vmatprep.subr.bf16.mxu0 0
        %1530 = vmatpush1.bf16.xpose.msra.mxu0 0
        %1531 = vmatprep.subr.bf16.mxu0 0
        %1532 = vmatpush1.bf16.xpose.msra.mxu0 0
        %1533 = vmatprep.subr.bf16.mxu0 0
        %1534 = vmatpush1.bf16.xpose.msra.mxu0 0
        %1535 = vmatprep.subr.bf16.mxu0 0
        %1536 = vmatpush1.bf16.xpose.msra.mxu0 0
        %1537 = vmatprep.subr.bf16.mxu0 0
        %1538 = vmatpush1.bf16.xpose.msra.mxu0 0
        %1539 = vmatprep.subr.bf16.mxu0 0
        %1540 = vmatpush1.bf16.xpose.msra.mxu0 0
        %1541 = vmatprep.subr.bf16.mxu0 0
        %1542 = vmatpush1.bf16.xpose.msra.mxu0 %v1525
        %1543 = vmatprep.subr.bf16.mxu0 0
        %1544 = vmatpush2.bf16.xpose.msra.mxu0 0
        %1545 = vmatprep.subr.bf16.mxu0 0
        %1546 = vmatpush2.bf16.xpose.msra.mxu0 0
        %1547 = vmatprep.subr.bf16.mxu0 0
        %1548 = vmatpush2.bf16.xpose.msra.mxu0 0
        %1549 = vmatprep.subr.bf16.mxu0 0
        %1550 = vmatpush2.bf16.xpose.msra.mxu0 0
        %1551 = vmatprep.subr.bf16.mxu0 0
        %1552 = vmatpush2.bf16.xpose.msra.mxu0 0
        %1553 = vmatprep.subr.bf16.mxu0 0
        %1554 = vmatpush2.bf16.xpose.msra.mxu0 0
        %1555 = vmatprep.subr.bf16.mxu0 0
        %1556 = vmatpush2.bf16.xpose.msra.mxu0 0
        %1557 = vmatprep.subr.bf16.mxu0 0
        %1558 = vmatpush2.bf16.xpose.msra.mxu0 0
        %1559 = vmatprep.mubr.bf16.mxu0 0
        %1560 = vmatmul.mubr.bf16.gmra.mxu0 %v1519
        %v1561 = vpop.f32.mrf.mxu0
        %v1562 = vadd.f32 %v1510, %v1561
        %v1563 = vpop.f32.mrf.mxu0
        %v1564 = vpop.f32.mrf.mxu0
        %v1565 = vpop.f32.mrf.mxu0
        %1566 = vdwg.mxu0
        %v1567 = vsel %vm1381, %v1562, -inf
        %1568 = vmax.xlane.f32.xlu0 %v1567
        %v1569 = vpop.xlane.xlu0 %1568
        %v1570 = vsub.f32 %v1562, %v1569
        %v1571 = vmul.f32 %v1570, 1.442695
        %v1572 = vpow.pop %v1571
        %v1573 = vsel %vm1381, %v1572, 0.0
        %1574 = vadd.xlane.f32.xlu0 %v1573
        %v1575 = vpop.xlane.xlu0 %1574
        %v1576 = vrcp.pop %v1575
        %v1577 = vmul.f32 %v1572, %v1576
        %v1578 = vpack.c.bf16 %v1577, %v1577
        %v1580 = vsel %vm1394, %v1578, 0
        %1582 = vmatprep.subr.bf16.mxu0 0
        %1583 = vmatpush1.bf16.msra.mxu0 0
        %1584 = vmatprep.subr.bf16.mxu0 0
        %1585 = vmatpush1.bf16.msra.mxu0 0
        %1586 = vmatprep.subr.bf16.mxu0 0
        %1587 = vmatpush1.bf16.msra.mxu0 0
        %1588 = vmatprep.subr.bf16.mxu0 0
        %1589 = vmatpush1.bf16.msra.mxu0 0
        %1590 = vmatprep.subr.bf16.mxu0 0
        %1591 = vmatpush1.bf16.msra.mxu0 0
        %1592 = vmatprep.subr.bf16.mxu0 0
        %1593 = vmatpush1.bf16.msra.mxu0 0
        %1594 = vmatprep.subr.bf16.mxu0 0
        %1595 = vmatpush1.bf16.msra.mxu0 0
        %1596 = vmatprep.subr.bf16.mxu0 0
        %1597 = vmatpush1.bf16.msra.mxu0 %v1525
        %1598 = vmatprep.subr.bf16.mxu0 0
        %1599 = vmatpush2.bf16.msra.mxu0 0
        %1600 = vmatprep.subr.bf16.mxu0 0
        %1601 = vmatpush2.bf16.msra.mxu0 0
        %1602 = vmatprep.subr.bf16.mxu0 0
        %1603 = vmatpush2.bf16.msra.mxu0 0
        %1604 = vmatprep.subr.bf16.mxu0 0
        %1605 = vmatpush2.bf16.msra.mxu0 0
        %1606 = vmatprep.subr.bf16.mxu0 0
        %1607 = vmatpush2.bf16.msra.mxu0 0
        %1608 = vmatprep.subr.bf16.mxu0 0
        %1609 = vmatpush2.bf16.msra.mxu0 0
        %1610 = vmatprep.subr.bf16.mxu0 0
        %1611 = vmatpush2.bf16.msra.mxu0 0
        %1612 = vmatprep.subr.bf16.mxu0 0
        %1613 = vmatpush2.bf16.msra.mxu0 0
        %1614 = vmatprep.mubr.bf16.mxu0 0
        %1615 = vmatmul.mubr.bf16.gmra.mxu0 %v1580
        %v1616 = vpop.f32.mrf.mxu0
        %v1617 = vadd.f32 0.0, %v1616
        %v1618 = vpop.f32.mrf.mxu0
        %v1619 = vpop.f32.mrf.mxu0
        %v1620 = vpop.f32.mrf.mxu0
        %1621 = vdwg.mxu0
        %s1622 = scalar_lea.vmem %s741, 16
        %v1623 = vld [vmem:[%s1622] sm:$0xff]
        %v1624 = vld [vmem:[%s1622 + $0x8] sm:$0xff]
        %1625 = vset.pattern.permute.xlu0 0
        %1626 = vperm.xlu0 %1625, %v1623
        %v1627 = vpop.permute.xlu0 %1626
        %1628 = vset.pattern.permute.xlu0 0
        %1629 = vperm.xlu0 %1628, %v1624
        %v1630 = vpop.permute.xlu0 %1629
        %vm1631 = vcmp.eq.s32.totalorder %v1627, %v1324
        %vm1632 = vcmp.eq.s32.totalorder %v1627, %v1325
        %vm1633 = vcmp.eq.s32.totalorder %v1630, %v1324
        %vm1634 = vcmp.eq.s32.totalorder %v1630, %v1325
        %v1635 = vsel %vm1631, 1, 0
        %v1636 = vsel %vm1632, 1, 0
        %v1637 = vsel %vm1633, 1, 0
        %v1638 = vsel %vm1634, 1, 0
        %v1639 = vcvt.s32.f32 %v1635
        %v1640 = vcvt.s32.f32 %v1636
        %v1641 = vcvt.s32.f32 %v1637
        %v1642 = vcvt.s32.f32 %v1638
        %v1643 = vpack.c.bf16 %v1641, %v1639
        %v1644 = vpack.c.bf16 %v1642, %v1640
        %1645 = vmatprep.subr.bf16.mxu0 0
        %1646 = vmatpush1.bf16.msra.mxu0 0
        %1647 = vmatprep.subr.bf16.mxu0 0
        %1648 = vmatpush1.bf16.msra.mxu0 0
        %1649 = vmatprep.subr.bf16.mxu0 0
        %1650 = vmatpush1.bf16.msra.mxu0 0
        %1651 = vmatprep.subr.bf16.mxu0 0
        %1652 = vmatpush1.bf16.msra.mxu0 0
        %1653 = vmatprep.subr.bf16.mxu0 0
        %1654 = vmatpush1.bf16.msra.mxu0 0
        %1655 = vmatprep.subr.bf16.mxu0 0
        %1656 = vmatpush1.bf16.msra.mxu0 0
        %1657 = vmatprep.subr.bf16.mxu0 0
        %1658 = vmatpush1.bf16.msra.mxu0 0
        %1659 = vmatprep.subr.bf16.mxu0 %v1644
        %1660 = vmatpush1.bf16.msra.mxu0 %v1643
        %1661 = vmatprep.subr.bf16.mxu0 0
        %1662 = vmatpush2.bf16.msra.mxu0 0
        %1663 = vmatprep.subr.bf16.mxu0 0
        %1664 = vmatpush2.bf16.msra.mxu0 0
        %1665 = vmatprep.subr.bf16.mxu0 0
        %1666 = vmatpush2.bf16.msra.mxu0 0
        %1667 = vmatprep.subr.bf16.mxu0 0
        %1668 = vmatpush2.bf16.msra.mxu0 0
        %1669 = vmatprep.subr.bf16.mxu0 0
        %1670 = vmatpush2.bf16.msra.mxu0 0
        %1671 = vmatprep.subr.bf16.mxu0 0
        %1672 = vmatpush2.bf16.msra.mxu0 0
        %1673 = vmatprep.subr.bf16.mxu0 0
        %1674 = vmatpush2.bf16.msra.mxu0 0
        %1675 = vmatprep.subr.bf16.mxu0 0
        %1676 = vmatpush2.bf16.msra.mxu0 0
        %1677 = vmatprep.mubr.bf16.mxu0 0
        %1678 = vmatmul.mubr.bf16.gmra.mxu0 %v1580
        %v1679 = vpop.f32.mrf.mxu0
        %v1680 = vadd.f32 0.0, %v1679
        %v1681 = vpop.f32.mrf.mxu0
        %v1682 = vadd.f32 0.0, %v1681
        %v1683 = vpop.f32.mrf.mxu0
        %v1684 = vpop.f32.mrf.mxu0
        %1685 = vdwg.mxu0
        %v1687 = vrot.slane %v1617, 5
        %vm1689 = vcmask 1042432
        %v1690 = vsel %vm1689, %v1433, %v1687
        %v1693 = vrot.slane %v1680, 5
        %v1694 = vrot.slane %v1682, 5
        %v1697 = vsel %vm1689, %v1495, %v1693
        %v1698 = vsel %vm1689, %v1497, %v1694
        // Predicated region
        $region150: #{tpu_custom_call.1} parent=116 // pred_check
          %p1699 = pneg %p752
        $region151: #{tpu_custom_call.1} parent=116 // pred_check_branch
          %1701 = sbr.rel (%p1699) target = $region153
        $region152: #{tpu_custom_call.1} parent=116 // pred_region
          %v1702 = vld [vmem:[%s13] sm:$0xff]
          %v1703 = vld [vmem:[%s13 + $0x8] sm:$0xff]
          %v1704 = vld [vmem:[%s13 + $0x10] sm:$0xff]
          %v1705 = vld [vmem:[%s13 + $0x18] sm:$0xff]
          %v1706 = vld [vmem:[%s13 + $0x20] sm:$0xff]
          %v1707 = vld [vmem:[%s13 + $0x28] sm:$0xff]
          %v1708 = vld [vmem:[%s13 + $0x30] sm:$0xff]
          %v1709 = vld [vmem:[%s13 + $0x38] sm:$0xff]
          %v1710 = vld [vmem:[%s13 + $0x40] sm:$0xff]
          %v1711 = vld [vmem:[%s13 + $0x48] sm:$0xff]
          %v1712 = vld [vmem:[%s13 + $0x50] sm:$0xff]
          %v1713 = vld [vmem:[%s13 + $0x58] sm:$0xff]
          %v1714 = vld [vmem:[%s13 + $0x60] sm:$0xff]
          %v1715 = vld [vmem:[%s13 + $0x68] sm:$0xff]
          %v1716 = vld [vmem:[%s13 + $0x70] sm:$0xff]
          %v1717 = vld [vmem:[%s13 + $0x78] sm:$0xff]
          %v1718 = vld [vmem:[%s14] sm:$0x1]
          %v1720 = vlaneseq
          %v1721 = vshrl.u32 %v1720, 7
          %v1722 = vsub.s32 0, %v1721
          %v1723 = vrot.slane %v1718, %v1722
          %1725 = vmatprep.subr.mxu0 0.0
          %1726 = vmatpush1.msra.mxu0 %v1717
          %1727 = vmatprep.subr.mxu0 0.0
          %1728 = vmatpush1.msra.mxu0 %v1716
          %1729 = vmatprep.subr.mxu0 0.0
          %1730 = vmatpush1.msra.mxu0 %v1715
          %1731 = vmatprep.subr.mxu0 0.0
          %1732 = vmatpush1.msra.mxu0 %v1714
          %1733 = vmatprep.subr.mxu0 0.0
          %1734 = vmatpush1.msra.mxu0 %v1713
          %1735 = vmatprep.subr.mxu0 0.0
          %1736 = vmatpush1.msra.mxu0 %v1712
          %1737 = vmatprep.subr.mxu0 0.0
          %1738 = vmatpush1.msra.mxu0 %v1711
          %1739 = vmatprep.subr.mxu0 0.0
          %1740 = vmatpush1.msra.mxu0 %v1710
          %1741 = vmatprep.subr.mxu0 0.0
          %1742 = vmatpush1.msra.mxu0 %v1709
          %1743 = vmatprep.subr.mxu0 0.0
          %1744 = vmatpush1.msra.mxu0 %v1708
          %1745 = vmatprep.subr.mxu0 0.0
          %1746 = vmatpush1.msra.mxu0 %v1707
          %1747 = vmatprep.subr.mxu0 0.0
          %1748 = vmatpush1.msra.mxu0 %v1706
          %1749 = vmatprep.subr.mxu0 0.0
          %1750 = vmatpush1.msra.mxu0 %v1705
          %1751 = vmatprep.subr.mxu0 0.0
          %1752 = vmatpush1.msra.mxu0 %v1704
          %1753 = vmatprep.subr.mxu0 0.0
          %1754 = vmatpush1.msra.mxu0 %v1703
          %1755 = vmatprep.subr.mxu0 0.0
          %1756 = vmatpush1.msra.mxu0 %v1702
          %1757 = vmatprep.subr.mxu0 0.0
          %1758 = vmatpush2.msra.mxu0 0.0
          %1759 = vmatprep.subr.mxu0 0.0
          %1760 = vmatpush2.msra.mxu0 0.0
          %1761 = vmatprep.subr.mxu0 0.0
          %1762 = vmatpush2.msra.mxu0 0.0
          %1763 = vmatprep.subr.mxu0 0.0
          %1764 = vmatpush2.msra.mxu0 0.0
          %1765 = vmatprep.subr.mxu0 0.0
          %1766 = vmatpush2.msra.mxu0 0.0
          %1767 = vmatprep.subr.mxu0 0.0
          %1768 = vmatpush2.msra.mxu0 0.0
          %1769 = vmatprep.subr.mxu0 0.0
          %1770 = vmatpush2.msra.mxu0 0.0
          %1771 = vmatprep.subr.mxu0 0.0
          %1772 = vmatpush2.msra.mxu0 0.0
          %1773 = vmatprep.subr.mxu0 0.0
          %1774 = vmatpush2.msra.mxu0 0.0
          %1775 = vmatprep.subr.mxu0 0.0
          %1776 = vmatpush2.msra.mxu0 0.0
          %1777 = vmatprep.subr.mxu0 0.0
          %1778 = vmatpush2.msra.mxu0 0.0
          %1779 = vmatprep.subr.mxu0 0.0
          %1780 = vmatpush2.msra.mxu0 0.0
          %1781 = vmatprep.subr.mxu0 0.0
          %1782 = vmatpush2.msra.mxu0 0.0
          %1783 = vmatprep.subr.mxu0 0.0
          %1784 = vmatpush2.msra.mxu0 0.0
          %1785 = vmatprep.subr.mxu0 0.0
          %1786 = vmatpush2.msra.mxu0 0.0
          %1787 = vmatprep.subr.mxu0 0.0
          %1788 = vmatpush2.msra.mxu0 0.0
          %1789 = vmatprep.mubr.f32.mxu0 0.0
          %1790 = vmatmul.mubr.f32.gmra.mxu0 %v1690
          %v1791 = vpop.f32.mrf.mxu0
          %v1792 = vadd.f32 %v1723, %v1791
          %v1793 = vpop.f32.mrf.mxu0
          %1794 = vdwg.mxu0
          %vm1795 = vcmask 18432
          %1796 = vst.msk [vmem:[%s749] sm:$0x7] %vm1795, %v1792
          %s1797 = scalar_lea.vmem %s749, 4
          %vm1798 = vcmask 21507
          %1799 = vst.msk [vmem:[%s1797 - $0x3] sm:$0x38] %vm1798, %v1792
        $region153: #{tpu_custom_call.1} parent=116 // pred_fallthru
          _
        %v1800 = vld [vmem:[#allocation14] sm:$0xff]
        %v1801 = vld [vmem:[#allocation14 + $0x8] sm:$0xff]
        %v1802 = vld [vmem:[#allocation14 + $0x10] sm:$0xff]
        %v1803 = vld [vmem:[#allocation14 + $0x18] sm:$0xff]
        %v1804 = vld [vmem:[#allocation14 + $0x20] sm:$0xff]
        %v1805 = vld [vmem:[#allocation14 + $0x28] sm:$0xff]
        %v1806 = vld [vmem:[#allocation14 + $0x30] sm:$0xff]
        %v1807 = vld [vmem:[#allocation14 + $0x38] sm:$0xff]
        %v1808 = vld [vmem:[#allocation14 + $0x40] sm:$0xff]
        %v1809 = vld [vmem:[#allocation14 + $0x48] sm:$0xff]
        %v1810 = vld [vmem:[#allocation14 + $0x50] sm:$0xff]
        %v1811 = vld [vmem:[#allocation14 + $0x58] sm:$0xff]
        %v1812 = vld [vmem:[#allocation14 + $0x60] sm:$0xff]
        %v1813 = vld [vmem:[#allocation14 + $0x68] sm:$0xff]
        %v1814 = vld [vmem:[#allocation14 + $0x70] sm:$0xff]
        %v1815 = vld [vmem:[#allocation14 + $0x78] sm:$0xff]
        %v1832 = vunpack.c.l.b16 %v1800
        %v1833 = vunpack.c.h.b16 %v1800
        %v1834 = vunpack.c.l.b16 %v1801
        %v1835 = vunpack.c.h.b16 %v1801
        %v1836 = vunpack.c.l.b16 %v1802
        %v1837 = vunpack.c.h.b16 %v1802
        %v1838 = vunpack.c.l.b16 %v1803
        %v1839 = vunpack.c.h.b16 %v1803
        %v1840 = vunpack.c.l.b16 %v1804
        %v1841 = vunpack.c.h.b16 %v1804
        %v1842 = vunpack.c.l.b16 %v1805
        %v1843 = vunpack.c.h.b16 %v1805
        %v1844 = vunpack.c.l.b16 %v1806
        %v1845 = vunpack.c.h.b16 %v1806
        %v1846 = vunpack.c.l.b16 %v1807
        %v1847 = vunpack.c.h.b16 %v1807
        %v1848 = vunpack.c.l.b16 %v1808
        %v1849 = vunpack.c.h.b16 %v1808
        %v1850 = vunpack.c.l.b16 %v1809
        %v1851 = vunpack.c.h.b16 %v1809
        %v1852 = vunpack.c.l.b16 %v1810
        %v1853 = vunpack.c.h.b16 %v1810
        %v1854 = vunpack.c.l.b16 %v1811
        %v1855 = vunpack.c.h.b16 %v1811
        %v1856 = vunpack.c.l.b16 %v1812
        %v1857 = vunpack.c.h.b16 %v1812
        %v1858 = vunpack.c.l.b16 %v1813
        %v1859 = vunpack.c.h.b16 %v1813
        %v1860 = vunpack.c.l.b16 %v1814
        %v1861 = vunpack.c.h.b16 %v1814
        %v1862 = vunpack.c.l.b16 %v1815
        %v1863 = vunpack.c.h.b16 %v1815
        %v1864 = vpack.c.b16 %v1834, %v1832
        %v1865 = vpack.c.b16 %v1835, %v1833
        %v1866 = vpack.c.b16 %v1838, %v1836
        %v1867 = vpack.c.b16 %v1839, %v1837
        %v1868 = vpack.c.b16 %v1842, %v1840
        %v1869 = vpack.c.b16 %v1843, %v1841
        %v1870 = vpack.c.b16 %v1846, %v1844
        %v1871 = vpack.c.b16 %v1847, %v1845
        %v1872 = vpack.c.b16 %v1850, %v1848
        %v1873 = vpack.c.b16 %v1851, %v1849
        %v1874 = vpack.c.b16 %v1854, %v1852
        %v1875 = vpack.c.b16 %v1855, %v1853
        %v1876 = vpack.c.b16 %v1858, %v1856
        %v1877 = vpack.c.b16 %v1859, %v1857
        %v1878 = vpack.c.b16 %v1862, %v1860
        %v1879 = vpack.c.b16 %v1863, %v1861
        %1896 = vmatprep.subr.bf16.mxu0 %v1879
        %1897 = vmatpush1.bf16.msra.mxu0 %v1878
        %1898 = vmatprep.subr.bf16.mxu0 %v1877
        %1899 = vmatpush1.bf16.msra.mxu0 %v1876
        %1900 = vmatprep.subr.bf16.mxu0 %v1875
        %1901 = vmatpush1.bf16.msra.mxu0 %v1874
        %1902 = vmatprep.subr.bf16.mxu0 %v1873
        %1903 = vmatpush1.bf16.msra.mxu0 %v1872
        %1904 = vmatprep.subr.bf16.mxu0 %v1871
        %1905 = vmatpush1.bf16.msra.mxu0 %v1870
        %1906 = vmatprep.subr.bf16.mxu0 %v1869
        %1907 = vmatpush1.bf16.msra.mxu0 %v1868
        %1908 = vmatprep.subr.bf16.mxu0 %v1867
        %1909 = vmatpush1.bf16.msra.mxu0 %v1866
        %1910 = vmatprep.subr.bf16.mxu0 %v1865
        %1911 = vmatpush1.bf16.msra.mxu0 %v1864
        %1912 = vmatprep.subr.bf16.mxu0 0
        %1913 = vmatpush2.bf16.msra.mxu0 0
        %1914 = vmatprep.subr.bf16.mxu0 0
        %1915 = vmatpush2.bf16.msra.mxu0 0
        %1916 = vmatprep.subr.bf16.mxu0 0
        %1917 = vmatpush2.bf16.msra.mxu0 0
        %1918 = vmatprep.subr.bf16.mxu0 0
        %1919 = vmatpush2.bf16.msra.mxu0 0
        %1920 = vmatprep.subr.bf16.mxu0 0
        %1921 = vmatpush2.bf16.msra.mxu0 0
        %1922 = vmatprep.subr.bf16.mxu0 0
        %1923 = vmatpush2.bf16.msra.mxu0 0
        %1924 = vmatprep.subr.bf16.mxu0 0
        %1925 = vmatpush2.bf16.msra.mxu0 0
        %1926 = vmatprep.subr.bf16.mxu0 0
        %1927 = vmatpush2.bf16.msra.mxu0 0
        %1928 = vmatprep.mubr.bf16.mxu0 0
        %1929 = vmatmul.mubr.bf16.gmra.mxu0 %v1322
        %v1930 = vpop.f32.mrf.mxu0
        %v1931 = vadd.f32 0.0, %v1930
        %v1932 = vpop.f32.mrf.mxu0
        %v1933 = vadd.f32 0.0, %v1932
        %v1934 = vpop.f32.mrf.mxu0
        %v1935 = vpop.f32.mrf.mxu0
        %1936 = vdwg.mxu0
        %vm1937 = vcmask 1045504
        %v1938 = vsel %vm1937, %v1931, -inf
        %v1939 = vsel %vm1937, %v1933, -inf
        %v1940 = vmax.f32 %v1938, %v1939
        %1941 = vmax.xlane.f32.xlu0 %v1940
        %v1942 = vpop.xlane.xlu0 %1941
        %v1943 = vsub.f32 %v1931, %v1942
        %v1944 = vsub.f32 %v1933, %v1942
        %v1945 = vmul.f32 %v1943, 1.442695
        %v1946 = vpow.pop %v1945
        %v1947 = vmul.f32 %v1944, 1.442695
        %v1948 = vpow.pop %v1947
        %v1949 = vsel %vm1937, %v1946, 0.0
        %v1950 = vsel %vm1937, %v1948, 0.0
        %v1951 = vadd.f32 %v1949, %v1950
        %1952 = vadd.xlane.f32.xlu0 %v1951
        %v1953 = vpop.xlane.xlu0 %1952
        %v1954 = vrcp.pop %v1953
        %v1955 = vmul.f32 %v1946, %v1954
        %v1956 = vmul.f32 %v1948, %v1954
        %v1957 = vld [vmem:[%s11] sm:$0x7]
        %v1958 = vlaneseq
        %v1959 = vshrl.u32 %v1958, 7
        %v1960 = vsub.s32 0, %v1959
        %v1961 = vrot.slane %v1957, %v1960
        %v1962 = vmul.f32 %v1320, %v1961
        %v1963 = vsel %vm1937, %v1962, 0.0
        %1964 = vadd.xlane.f32.xlu0 %v1963
        %v1965 = vpop.xlane.xlu0 %1964
        %v1966 = vlaneseq
        %v1967 = vshrl.u32 %v1966, 7
        %v1968 = vsub.s32 1, %v1967
        %v1969 = vrot.slane %v1957, %v1968
        %v1970 = vmul.f32 %v1690, %v1969
        %v1971 = vsel %vm1937, %v1970, 0.0
        %1972 = vadd.xlane.f32.xlu0 %v1971
        %v1973 = vpop.xlane.xlu0 %1972
        %v1974 = vadd.f32 %v1965, %v1973
        %v1975 = vlaneseq
        %v1976 = vshrl.u32 %v1975, 7
        %v1977 = vsub.s32 2, %v1976
        %v1978 = vrot.slane %v1957, %v1977
        %v1979 = vmul.f32 %v780, %v1978
        %v1980 = vsel %vm1937, %v1979, 0.0
        %1981 = vadd.xlane.f32.xlu0 %v1980
        %v1982 = vpop.xlane.xlu0 %1981
        %v1983 = vadd.f32 %v1974, %v1982
        %s1984 = sld [smem:[#allocation4]]
        %v1985 = vstv %s1984
        %v1986 = vadd.f32 %v1983, %v1985
        %v1987 = vxor.u32 %v1986, 2147483648
        %v1988 = vmul.f32 %v1987, 1.442695
        %v1989 = vpow.pop %v1988
        %v1990 = vadd.f32 %v1989, 1.0
        %v1991 = vrcp.pop %v1990
        %v1992 = vmul.f32 1.0, %v1991
        %v1993 = vsub.f32 1.0, %v1992
        %v1994 = vmul.f32 %v1993, %v1697
        %v1995 = vmul.f32 %v1993, %v1698
        %v1996 = vmul.f32 %v1992, %v1955
        %v1997 = vmul.f32 %v1992, %v1956
        %v1998 = vadd.f32 %v1994, %v1996
        %v1999 = vadd.f32 %v1995, %v1997
        %v2002 = vcombine.low %v1998, %v1999
        %2004 = vst [vmem:[%s719] sm:$0x77] %v2002
        %v2005 = vcombine.high %v1998, %v1999
        %vm2006 = vcmask 1040384
        %vm2007 = vcmask 1044484
        %vm2008 = vmor %vm2006, %vm2007
        %v2009 = vrot.slane %v2002, 7
        %v2010 = vrot.slane %v2009, 4
        %v2011 = vrot.slane %v2005, 7
        %v2012 = vsel %vm2008, %v2010, %v2011
        %s2014 = scalar_lea.vmem %s719, 8 [#allocation16]
        %2015 = vst [vmem:[%s2014] sm:$0x77] %v2012
        %s2016 = sadd.s32 %s38, 1
        %p2017 = scmp.lt.s32.totalorder %s2016, 4
        // Predicated region
        $region154: #{tpu_custom_call.1} parent=116 // pred_check
          %p2018 = pneg %p2017
        $region155: #{tpu_custom_call.1} parent=116 // pred_check_branch
          %2020 = sbr.rel (%p2018) target = $region157
        $region156: #{tpu_custom_call.1} parent=116 // pred_region
          %v2021 = vsel %vm1937, %v1998, -inf
          %v2022 = vsel %vm1937, %v1999, -inf
          %v2023 = vmax.f32 %v2021, %v2022
          %2024 = vmax.xlane.f32.xlu0 %v2023
          %v2025 = vpop.xlane.xlu0 %2024
          %vm2026 = vcmp.eq.f32.partialorder %v1998, %v2025
          %vm2027 = vcmp.eq.f32.partialorder %v1999, %v2025
          %v2028 = vsel %vm2026, %v1324, 256
          %v2029 = vsel %vm2027, %v1325, 256
          %v2030 = vsel %vm1937, %v2028, 2147483647
          %v2031 = vsel %vm1937, %v2029, 2147483647
          %vm2032 = vcmp.lt.s32.totalorder %v2030, %v2031
          %v2033 = vsel %vm2032, %v2030, %v2031
          %v2034 = vand.u32 %v2033, 65535
          %v2035 = vshra.s32 %v2033, 16
          %v2036 = vcvt.s32.f32 %v2034
          %v2037 = vcvt.s32.f32 %v2035
          %2038 = vmin.xlane.f32.xlu0 %v2037
          %v2039 = vpop.xlane.xlu0 %2038
          %vm2040 = vcmp.eq.f32.partialorder %v2037, %v2039
          %v2041 = vsel %vm2040, %v2036, inf
          %2042 = vmin.xlane.f32.xlu0 %v2041
          %v2043 = vpop.xlane.xlu0 %2042
          %v2044 = vcvt.f32.s32 %v2043
          %v2045 = vcvt.f32.s32 %v2039
          %v2046 = vshll.u32 %v2045, 16
          %v2047 = vadd.s32 %v2046, %v2044
          %vm2048 = vcmp.eq.s32.totalorder %v2047, %v1324
          %vm2049 = vcmp.eq.s32.totalorder %v2047, %v1325
          %v2050 = vsel %vm2048, 1, 0
          %v2051 = vsel %vm2049, 1, 0
          %v2052 = vcvt.s32.f32 %v2050
          %v2053 = vcvt.s32.f32 %v2051
          %v2054 = vpack.c.bf16 %v2052, %v2052
          %v2055 = vpack.c.bf16 %v2053, %v2053
          %v2056 = vld [vmem:[#allocation14] sm:$0xff]
          %v2057 = vld [vmem:[#allocation14 + $0x8] sm:$0xff]
          %v2058 = vld [vmem:[#allocation14 + $0x10] sm:$0xff]
          %v2059 = vld [vmem:[#allocation14 + $0x18] sm:$0xff]
          %v2060 = vld [vmem:[#allocation14 + $0x20] sm:$0xff]
          %v2061 = vld [vmem:[#allocation14 + $0x28] sm:$0xff]
          %v2062 = vld [vmem:[#allocation14 + $0x30] sm:$0xff]
          %v2063 = vld [vmem:[#allocation14 + $0x38] sm:$0xff]
          %v2064 = vld [vmem:[#allocation14 + $0x40] sm:$0xff]
          %v2065 = vld [vmem:[#allocation14 + $0x48] sm:$0xff]
          %v2066 = vld [vmem:[#allocation14 + $0x50] sm:$0xff]
          %v2067 = vld [vmem:[#allocation14 + $0x58] sm:$0xff]
          %v2068 = vld [vmem:[#allocation14 + $0x60] sm:$0xff]
          %v2069 = vld [vmem:[#allocation14 + $0x68] sm:$0xff]
          %v2070 = vld [vmem:[#allocation14 + $0x70] sm:$0xff]
          %v2071 = vld [vmem:[#allocation14 + $0x78] sm:$0xff]
          %v2088 = vunpack.c.l.b16 %v2056
          %v2089 = vunpack.c.h.b16 %v2056
          %v2090 = vunpack.c.l.b16 %v2057
          %v2091 = vunpack.c.h.b16 %v2057
          %v2092 = vunpack.c.l.b16 %v2058
          %v2093 = vunpack.c.h.b16 %v2058
          %v2094 = vunpack.c.l.b16 %v2059
          %v2095 = vunpack.c.h.b16 %v2059
          %v2096 = vunpack.c.l.b16 %v2060
          %v2097 = vunpack.c.h.b16 %v2060
          %v2098 = vunpack.c.l.b16 %v2061
          %v2099 = vunpack.c.h.b16 %v2061
          %v2100 = vunpack.c.l.b16 %v2062
          %v2101 = vunpack.c.h.b16 %v2062
          %v2102 = vunpack.c.l.b16 %v2063
          %v2103 = vunpack.c.h.b16 %v2063
          %v2104 = vunpack.c.l.b16 %v2064
          %v2105 = vunpack.c.h.b16 %v2064
          %v2106 = vunpack.c.l.b16 %v2065
          %v2107 = vunpack.c.h.b16 %v2065
          %v2108 = vunpack.c.l.b16 %v2066
          %v2109 = vunpack.c.h.b16 %v2066
          %v2110 = vunpack.c.l.b16 %v2067
          %v2111 = vunpack.c.h.b16 %v2067
          %v2112 = vunpack.c.l.b16 %v2068
          %v2113 = vunpack.c.h.b16 %v2068
          %v2114 = vunpack.c.l.b16 %v2069
          %v2115 = vunpack.c.h.b16 %v2069
          %v2116 = vunpack.c.l.b16 %v2070
          %v2117 = vunpack.c.h.b16 %v2070
          %v2118 = vunpack.c.l.b16 %v2071
          %v2119 = vunpack.c.h.b16 %v2071
          %v2120 = vpack.c.b16 %v2090, %v2088
          %v2121 = vpack.c.b16 %v2091, %v2089
          %v2122 = vpack.c.b16 %v2094, %v2092
          %v2123 = vpack.c.b16 %v2095, %v2093
          %v2124 = vpack.c.b16 %v2098, %v2096
          %v2125 = vpack.c.b16 %v2099, %v2097
          %v2126 = vpack.c.b16 %v2102, %v2100
          %v2127 = vpack.c.b16 %v2103, %v2101
          %v2128 = vpack.c.b16 %v2106, %v2104
          %v2129 = vpack.c.b16 %v2107, %v2105
          %v2130 = vpack.c.b16 %v2110, %v2108
          %v2131 = vpack.c.b16 %v2111, %v2109
          %v2132 = vpack.c.b16 %v2114, %v2112
          %v2133 = vpack.c.b16 %v2115, %v2113
          %v2134 = vpack.c.b16 %v2118, %v2116
          %v2135 = vpack.c.b16 %v2119, %v2117
          %2152 = vmatprep.subr.bf16.mxu0 %v2135
          %2153 = vmatpush1.bf16.xpose.msra.mxu0 %v2134
          %2154 = vmatprep.subr.bf16.mxu0 %v2133
          %2155 = vmatpush1.bf16.xpose.msra.mxu0 %v2132
          %2156 = vmatprep.subr.bf16.mxu0 %v2131
          %2157 = vmatpush1.bf16.xpose.msra.mxu0 %v2130
          %2158 = vmatprep.subr.bf16.mxu0 %v2129
          %2159 = vmatpush1.bf16.xpose.msra.mxu0 %v2128
          %2160 = vmatprep.subr.bf16.mxu0 %v2127
          %2161 = vmatpush1.bf16.xpose.msra.mxu0 %v2126
          %2162 = vmatprep.subr.bf16.mxu0 %v2125
          %2163 = vmatpush1.bf16.xpose.msra.mxu0 %v2124
          %2164 = vmatprep.subr.bf16.mxu0 %v2123
          %2165 = vmatpush1.bf16.xpose.msra.mxu0 %v2122
          %2166 = vmatprep.subr.bf16.mxu0 %v2121
          %2167 = vmatpush1.bf16.xpose.msra.mxu0 %v2120
          %2168 = vmatprep.subr.bf16.mxu0 0
          %2169 = vmatpush2.bf16.xpose.msra.mxu0 0
          %2170 = vmatprep.subr.bf16.mxu0 0
          %2171 = vmatpush2.bf16.xpose.msra.mxu0 0
          %2172 = vmatprep.subr.bf16.mxu0 0
          %2173 = vmatpush2.bf16.xpose.msra.mxu0 0
          %2174 = vmatprep.subr.bf16.mxu0 0
          %2175 = vmatpush2.bf16.xpose.msra.mxu0 0
          %2176 = vmatprep.subr.bf16.mxu0 0
          %2177 = vmatpush2.bf16.xpose.msra.mxu0 0
          %2178 = vmatprep.subr.bf16.mxu0 0
          %2179 = vmatpush2.bf16.xpose.msra.mxu0 0
          %2180 = vmatprep.subr.bf16.mxu0 0
          %2181 = vmatpush2.bf16.xpose.msra.mxu0 0
          %2182 = vmatprep.subr.bf16.mxu0 0
          %2183 = vmatpush2.bf16.xpose.msra.mxu0 0
          %2184 = vmatprep.mubr.bf16.mxu0 %v2055
          %2185 = vmatmul.mubr.bf16.gmra.mxu0 %v2054
          %v2186 = vpop.f32.mrf.mxu0
          %v2187 = vadd.f32 0.0, %v2186
          %v2188 = vpop.f32.mrf.mxu0
          %v2189 = vpop.f32.mrf.mxu0
          %v2190 = vpop.f32.mrf.mxu0
          %2191 = vdwg.mxu0
          %2192 = vst [vmem:[#allocation3] sm:$0x3f] %v2187
        $region157: #{tpu_custom_call.1} parent=116 // pred_fallthru
          _
        %s2193 = sand.u32 %s397, 1
        %s2194 = sand.u32 %s397, 1
        %s2195 = smul.addr %s2194, 16
        %s2196 = scalar_lea.vmem [#allocation16], %s2195
        %s2197 = smul.u32 2, %s37
        %p2198 = scmp.lt.s32.totalorder %s2197, 1
        %s2199 = scalar_select %p2198, %s2197, 1
        %s2200 = smul.addr %s2199, 4
        %s2201 = scalar_lea.vmem %s16, %s2200
        // Predicated region
        $region158: #{tpu_custom_call.1} parent=116 // pred_check
          %p2202 = pneg %p407
        $region159: #{tpu_custom_call.1} parent=116 // pred_check_branch
          %2204 = sbr.rel (%p2202) target = $region161
        $region160: #{tpu_custom_call.1} parent=116 // pred_region
          %s2205 = smul.u32 2, %s37
          %s2206 = smul.addr %s38, 2
          %s2207 = smul.addr %s2205, 8
          %s2208 = sadd.s32 %s2206, %s2207
          %s2209 = smul.addr %s2208, 4
          %s2210 = scalar_lea.vmem %s15, %s2209
          // Predicated region
          $region162: #{tpu_custom_call.1} parent=160 // pred_check
            _
          $region163: #{tpu_custom_call.1} parent=160 // pred_check_branch
            %2212 = sbr.rel (0) target = $region165
          $region164: #{tpu_custom_call.1} parent=160 // pred_region
            // Predicated region
            $region166: #{tpu_custom_call.1} parent=164 // pred_check
              _
            $region167: #{tpu_custom_call.1} parent=164 // pred_check_branch
              %2214 = sbr.rel (0) target = $region169
            $region168: #{tpu_custom_call.1} parent=164 // pred_region
              // Predicated region
              $region181: #{tpu_custom_call.1} parent=168 // pred_check
                _
              $region182: #{tpu_custom_call.1} parent=168 // pred_check_branch
                %2232 = sbr.rel (0) target = $region184
              $region183: #{tpu_custom_call.1} parent=168 // pred_region
                loop: start=0, step=1, limit=1
                $region185: #{tpu_custom_call.1} parent=183 // loop_pre_header
                  _
                $region186: #{tpu_custom_call.1} parent=183 // loop_header
                  %s2234 = sphi 0, %s2238
                  %p2235 = scmp.ge.s32.totalorder %s2234, 1
                  %s2239 = sphi %s2196, %s2196
                  %s2240 = sphi %s2210, %s2210
                $region187: #{tpu_custom_call.1} parent=183 // loop_header_branch
                  %2237 = sbr.rel (%p2235) target = $region191
                $region188: #{tpu_custom_call.1} parent=183 // loop_body
                  %v2241 = vld [vmem:[%s2239] sm:$0xff]
                  %2242 = vst [vmem:[%s2240] sm:$0xff] %v2241
                  %v2243 = vld [vmem:[%s2239 + $0x8] sm:$0xff]
                  %2244 = vst [vmem:[%s2240 + $0x20] sm:$0xff] %v2243
                $region189: #{tpu_custom_call.1} parent=183 // loop_footer
                  %s2238 = sadd.s32 1, %s2234
                $region190: #{tpu_custom_call.1} parent=183 // loop_footer_branch
                  %2233 = sbr.rel target = $region186
                $region191: #{tpu_custom_call.1} parent=183 // loop_exit
                  _
              $region184: #{tpu_custom_call.1} parent=168 // pred_fallthru
                _
              // Predicated region
              $region192: #{tpu_custom_call.1} parent=168 // pred_check
                _
              $region193: #{tpu_custom_call.1} parent=168 // pred_check_branch
                %2246 = sbr.rel target = $region195
              $region194: #{tpu_custom_call.1} parent=168 // pred_region
                _
              $region195: #{tpu_custom_call.1} parent=168 // pred_fallthru
                _
            $region169: #{tpu_custom_call.1} parent=164 // pred_fallthru
              _
            // Predicated region
            $region170: #{tpu_custom_call.1} parent=164 // pred_check
              _
            $region171: #{tpu_custom_call.1} parent=164 // pred_check_branch
              %2216 = sbr.rel target = $region173
            $region172: #{tpu_custom_call.1} parent=164 // pred_region
              %s2218 = ssub.s32 256, 1
              loop: start=0, step=1, limit=1
              $region174: #{tpu_custom_call.1} parent=172 // loop_pre_header
                _
              $region175: #{tpu_custom_call.1} parent=172 // loop_header
                %s2220 = sphi 0, %s2224
                %p2221 = scmp.ge.s32.totalorder %s2220, 1
                %s2225 = sphi %s2196, %s2196
                %s2226 = sphi %s2210, %s2210
              $region176: #{tpu_custom_call.1} parent=172 // loop_header_branch
                %2223 = sbr.rel (%p2221) target = $region180
              $region177: #{tpu_custom_call.1} parent=172 // loop_body
                %v2227 = vld [vmem:[%s2225] sm:%s2218]
                %2228 = vst [vmem:[%s2226] sm:%s2218] %v2227
                %v2229 = vld [vmem:[%s2225 + $0x8] sm:%s2218]
                %2230 = vst [vmem:[%s2226 + $0x20] sm:%s2218] %v2229
              $region178: #{tpu_custom_call.1} parent=172 // loop_footer
                %s2224 = sadd.s32 1, %s2220
              $region179: #{tpu_custom_call.1} parent=172 // loop_footer_branch
                %2219 = sbr.rel target = $region175
              $region180: #{tpu_custom_call.1} parent=172 // loop_exit
                _
            $region173: #{tpu_custom_call.1} parent=164 // pred_fallthru
              _
          $region165: #{tpu_custom_call.1} parent=160 // pred_fallthru
            _
          %2247 = vnop
        $region161: #{tpu_custom_call.1} parent=116 // pred_fallthru
          _
        // Predicated region
        $region196: #{tpu_custom_call.1} parent=116 // pred_check
          %p2248 = pneg %p433
        $region197: #{tpu_custom_call.1} parent=116 // pred_check_branch
          %2250 = sbr.rel (%p2248) target = $region199
        $region198: #{tpu_custom_call.1} parent=116 // pred_region
          %s2251 = smul.u32 2, %s37
        $region199: #{tpu_custom_call.1} parent=116 // pred_fallthru
          _
        // Predicated region
        $region200: #{tpu_custom_call.1} parent=116 // pred_check
          %p2252 = pneg %p433
        $region201: #{tpu_custom_call.1} parent=116 // pred_check_branch
          %2254 = sbr.rel (%p2252) target = $region203
        $region202: #{tpu_custom_call.1} parent=116 // pred_region
          %s2255 = smul.u32 2, %s37
          %p2256 = scmp.lt.s32.totalorder %s2255, 1
          %s2257 = scalar_select %p2256, %s2255, 1
          %s2258 = smul.addr %s2257, 4
          %s2259 = scalar_lea.vmem %s16, %s2258
        $region203: #{tpu_custom_call.1} parent=116 // pred_fallthru
          _
      $region117: #{tpu_custom_call.1} parent=5 // pred_fallthru
        _
      %p2260 = scmp.le.s32.totalorder 2, %s28
      // Predicated region
      $region204: #{tpu_custom_call.1} parent=5 // pred_check
        %p2261 = pneg %p2260
      $region205: #{tpu_custom_call.1} parent=5 // pred_check_branch
        %2263 = sbr.rel (%p2261) target = $region207
      $region206: #{tpu_custom_call.1} parent=5 // pred_region
        %s2264 = ssub.s32 %s28, 2
        // Predicated region
        $region208: #{tpu_custom_call.1} parent=206 // pred_check
          %p2265 = pneg %p413
        $region209: #{tpu_custom_call.1} parent=206 // pred_check_branch
          %2267 = sbr.rel (%p2265) target = $region211
        $region210: #{tpu_custom_call.1} parent=206 // pred_region
          %s2268 = sand.u32 %s398, 1
          %s2269 = sand.u32 %s398, 1
          %s2270 = smul.addr %s2269, 16
          %s2271 = scalar_lea.vmem [#allocation16], %s2270
        $region211: #{tpu_custom_call.1} parent=206 // pred_fallthru
          _
      $region207: #{tpu_custom_call.1} parent=5 // pred_fallthru
        _
    $region6: #{tpu_custom_call.1} parent=1 // loop_footer
      %s32 = sadd.s32 1, %s28
    $region7: #{tpu_custom_call.1} parent=1 // loop_footer_branch
      %27 = sbr.rel target = $region3
    $region8: #{tpu_custom_call.1} parent=1 // loop_exit
      _
    %2272 = vsyncpa [#allocation6], 1
    %s2273 = scalar_lea.sflag [#allocation6], 1
    %2274 = vsyncpa %s2273, 1
    %2275 = vsyncpa [#allocation8], 1
    %2276 = vsyncpa [#allocation12], 1
    %2277 = vsyncpa [#allocation15], 1

</llo_original>
